<compile_context>
chip_gen: v5e
topology: v5e:2x2
jax: 0.10.0
libtpu: 0.0.40
codegen_flags: <defaults>
</compile_context>

<pallas_src>
import functools

import jax
import jax.numpy as jnp
from jax import lax
from jax.experimental import pallas as pl
from jax.experimental.pallas import tpu as pltpu

LANE = 128                       # output-feature / contraction padding unit
_MAX_TM = 1024                   # max rows per grid step
_VMEM_LIMIT = 32 * 1024 * 1024   # safe scoped-VMEM limit on v5e/v6e/v7x


def _round_up(x, m):
    return (x + m - 1) // m * m


def _tile_rows(m, max_tm=_MAX_TM):
    """Row tiling: 8-aligned tiles, >=2 grid steps when possible (v7x)."""
    m8 = _round_up(max(m, 1), 8)
    if m8 <= 8:
        return m8, m8
    tm = min(max_tm, _round_up(pl.cdiv(m8, 2), 8))
    m_pad = _round_up(m8, tm)
    return m_pad, tm


# ------------------------------ XLA-side glue -------------------------------

def _pool_patch_slabs(x, kh, kw):
    """Fused im2col + 2x2/stride-2 pool-offset slabs, strided slices only.

    x: (N, H, W, C) NHWC.  Returns (slabs, Po, Qo) with
    slabs: (4, N, Po, Qo, kh*kw*C); slabs[dy*2+dx][n, po, qo, (ki,kj,c)] is the
    input value used by the conv output at (2*po+dy+ki, 2*qo+dx+kj).
    Feature order is (ki, kj, c), matching the prepped conv weights.
    """
    N, H, W, C = x.shape
    Ho, Wo = H - kh + 1, W - kw + 1
    Po, Qo = Ho // 2, Wo // 2
    slabs = []
    for dy in range(2):
        for dx in range(2):
            taps = []
            for ki in range(kh):
                for kj in range(kw):
                    taps.append(x[:, dy + ki: dy + ki + 2 * Po: 2,
                                  dx + kj: dx + kj + 2 * Qo: 2, :])
            slab = jnp.stack(taps, axis=3)               # (N,Po,Qo,kh*kw,C)
            slabs.append(slab.reshape(N, Po, Qo, kh * kw * C))
    return jnp.stack(slabs, axis=0), Po, Qo


# ----------------------------- Pallas kernels ------------------------------

def _conv_relu_pool_kernel(p_ref, w_ref, b_ref, o_ref):
    # p_ref: (4, tm, Kp) bf16 -- im2col patches for the 4 positions of every
    #                            2x2 pooling window (same output-row order).
    # w_ref: (Kp, Cp) bf16, b_ref: (1, Cp) f32, o_ref: (tm, Cp) bf16.
    four, tm, kp = p_ref.shape
    cp = w_ref.shape[-1]
    # one long MXU matmul instead of 4 short ones (leading-dim fold is
    # layout-free because tm % 8 == 0), then VPU max over the 4 offsets.
    p = p_ref[...].reshape(four * tm, kp)
    r = jnp.dot(p, w_ref[...], preferred_element_type=jnp.float32)
    r = jnp.max(r.reshape(four, tm, cp), axis=0)
    o_ref[...] = jnp.maximum(r + b_ref[...], 0.0).astype(o_ref.dtype)


def _conv2_classifier_kernel(p_ref, wc_ref, bc_ref, w1_ref, b1_ref,
                             w2_ref, b2_ref, w3_ref, b3_ref, o_ref, *,
                             out_features):
    # p_ref : (4, S, tb, Kp) bf16 -- conv2 patches; S = 25 pooled positions,
    #                                rows ordered (spatial s, batch n).
    # wc_ref: (Kp, Cp) bf16 conv2 weight;           bc_ref: (1, Cp)  f32
    # w1_ref: (S, Cp, Np) bf16 fc1 (flatten folded); b1_ref: (1, Np) f32
    # w2_ref/w3_ref: (Np, Np) bf16;  b2_ref/b3_ref: (1, Np) f32
    # o_ref : (tb, Np) f32 log-probs (padded lanes garbage, sliced outside).
    four, S, tb, kp = p_ref.shape
    cp = wc_ref.shape[-1]
    np_ = w1_ref.shape[-1]

    # ---- conv2 + bias + ReLU + 2x2 MaxPool (pool = max over the 4 offsets)
    p = p_ref[...].reshape(four * S * tb, kp)
    r = jnp.dot(p, wc_ref[...], preferred_element_type=jnp.float32)
    r = jnp.max(r.reshape(four, S * tb, cp), axis=0)        # (S*tb, Cp)
    act = jnp.maximum(r + bc_ref[...], 0.0).astype(jnp.bfloat16)

    # ---- fc1: contract the 25 spatial rows x 128 channel lanes against the
    #            prepped (S, Cp, Np) weight -> no in-kernel relayout needed.
    h = jnp.zeros((tb, np_), jnp.float32)
    for s in range(S):
        h = h + jnp.dot(act[s * tb:(s + 1) * tb, :], w1_ref[s],
                        preferred_element_type=jnp.float32)
    h = jnp.maximum(h + b1_ref[...], 0.0)

    # ---- fc2 + ReLU
    h = jnp.dot(h.astype(jnp.bfloat16), w2_ref[...],
                preferred_element_type=jnp.float32)
    h = jnp.maximum(h + b2_ref[...], 0.0)

    # ---- fc3 + ReLU (the torch spec applies ReLU before LogSoftmax)
    z = jnp.dot(h.astype(jnp.bfloat16), w3_ref[...],
                preferred_element_type=jnp.float32)
    z = jnp.maximum(z + b3_ref[...], 0.0)

    # ---- LogSoftmax; mask padded logit lanes so they don't leak into the sum
    col = lax.broadcasted_iota(jnp.int32, z.shape, 1)
    z = jnp.where(col < out_features, z, -1e30)
    m = jnp.max(z, axis=-1, keepdims=True)
    sh = z - m
    lse = jnp.log(jnp.sum(jnp.exp(sh), axis=-1, keepdims=True))
    o_ref[...] = sh - lse


# ----------------------------- kernel wrappers ------------------------------

def conv1_relu_pool(x, w_kc, b, cout):
    """Conv2d(5x5, valid) + ReLU + MaxPool2d(2,2) on NHWC input; bf16 out."""
    N, H, W, C = x.shape
    kh = kw = 5
    Kp, Cp = w_kc.shape
    slabs, Po, Qo = _pool_patch_slabs(x, kh, kw)        # (4, N, Po, Qo, K)
    K = kh * kw * C
    Mq = N * Po * Qo
    Mq_pad, tm = _tile_rows(Mq)

    p = slabs.reshape(4, Mq, K).astype(jnp.bfloat16)
    p = jnp.pad(p, ((0, 0), (0, Mq_pad - Mq), (0, Kp - K)))

    flops = 2 * 4 * Mq_pad * Kp * Cp
    bytes_accessed = (4 * Mq_pad * Kp * 2 + Kp * Cp * 2 + Cp * 4
                      + Mq_pad * Cp * 2)
    out = pl.pallas_call(
        _conv_relu_pool_kernel,
        out_shape=jax.ShapeDtypeStruct((Mq_pad, Cp), jnp.bfloat16),
        grid=(Mq_pad // tm,),
        in_specs=[pl.BlockSpec((4, tm, Kp), lambda i: (0, i, 0)),
                  pl.BlockSpec((Kp, Cp), lambda i: (0, 0)),
                  pl.BlockSpec((1, Cp), lambda i: (0, 0))],
        out_specs=pl.BlockSpec((tm, Cp), lambda i: (i, 0)),
        compiler_params=pltpu.CompilerParams(
            dimension_semantics=("parallel",),
            vmem_limit_bytes=_VMEM_LIMIT),
        cost_estimate=pl.CostEstimate(flops=flops, transcendentals=0,
                                      bytes_accessed=bytes_accessed),
    )(p, w_kc, b)
    return out[:Mq, :cout].reshape(N, Po, Qo, cout)     # (N,14,14,6) bf16


def conv2_classifier(y, params, out_ch):
    """Fused conv2+ReLU+pool -> fc1 -> fc2 -> fc3 -> ReLU -> LogSoftmax."""
    N = y.shape[0]
    kh = kw = 5
    Kp, Cp = params['conv2_w'].shape
    slabs, Po, Qo = _pool_patch_slabs(y, kh, kw)        # (4, N, 5, 5, K2)
    S = Po * Qo                                         # 25
    K2 = slabs.shape[-1]                                # 150

    N_pad = _round_up(N, 8)
    tb = min(N_pad, 256)
    N_pad = _round_up(N_pad, tb)

    # rows ordered (spatial s, batch n) so the in-kernel fc1 loop slices
    # contiguous, 8-aligned row blocks per spatial position.
    p = jnp.transpose(slabs, (0, 2, 3, 1, 4)).reshape(4, S, N, K2)
    p = jnp.pad(p.astype(jnp.bfloat16),
                ((0, 0), (0, 0), (0, N_pad - N), (0, Kp - K2)))

    Np = params['fc1_w'].shape[-1]
    flops = (2 * 4 * S * N_pad * Kp * Cp          # conv2
             + 2 * S * N_pad * Cp * Np            # fc1
             + 2 * 2 * N_pad * Np * Np)           # fc2, fc3
    bytes_accessed = (4 * S * N_pad * Kp * 2 + Kp * Cp * 2 + Cp * 4
                      + S * Cp * Np * 2 + 2 * Np * Np * 2 + 3 * Np * 4
                      + N_pad * Np * 4)
    out = pl.pallas_call(
        functools.partial(_conv2_classifier_kernel, out_features=out_ch),
        out_shape=jax.ShapeDtypeStruct((N_pad, Np), jnp.float32),
        grid=(N_pad // tb,),
        in_specs=[pl.BlockSpec((4, S, tb, Kp), lambda i: (0, 0, i, 0)),
                  pl.BlockSpec((Kp, Cp), lambda i: (0, 0)),
                  pl.BlockSpec((1, Cp), lambda i: (0, 0)),
                  pl.BlockSpec((S, Cp, Np), lambda i: (0, 0, 0)),
                  pl.BlockSpec((1, Np), lambda i: (0, 0)),
                  pl.BlockSpec((Np, Np), lambda i: (0, 0)),
                  pl.BlockSpec((1, Np), lambda i: (0, 0)),
                  pl.BlockSpec((Np, Np), lambda i: (0, 0)),
                  pl.BlockSpec((1, Np), lambda i: (0, 0))],
        out_specs=pl.BlockSpec((tb, Np), lambda i: (i, 0)),
        compiler_params=pltpu.CompilerParams(
            dimension_semantics=("parallel",),
            vmem_limit_bytes=_VMEM_LIMIT),
        cost_estimate=pl.CostEstimate(flops=flops,
                                      transcendentals=N_pad * Np,
                                      bytes_accessed=bytes_accessed),
    )(p, params['conv2_w'], params['conv2_b'],
      params['fc1_w'], params['fc1_b'],
      params['fc2_w'], params['fc2_b'],
      params['fc3_w'], params['fc3_b'])
    return out[:N, :out_ch]


# ------------------------------- LeNet model --------------------------------

def lenet_forward(x_nchw, params, *, out_ch):
    x = jnp.transpose(x_nchw, (0, 2, 3, 1))                       # NCHW -> NHWC once
    y = conv1_relu_pool(x, params['conv1_w'], params['conv1_b'], 6)   # (N,14,14,6) bf16
    return conv2_classifier(y, params, out_ch)                    # (N,out_ch) f32


def prepare_params(raw, out_ch):
    """Torch-layout params -> padded/transposed/bf16 kernel weights.
    Runs once, outside jit."""
    assert out_ch <= LANE

    def prep_conv(w, b):
        cout, cin, kh, kw = w.shape
        K = kh * kw * cin
        Kp = _round_up(K, LANE)
        # feature order (ki, kj, c) to match the im2col glue
        wm = jnp.transpose(w, (2, 3, 1, 0)).reshape(K, cout)
        wm = jnp.pad(wm, ((0, Kp - K), (0, LANE - cout))).astype(jnp.bfloat16)
        bp = jnp.pad(b, (0, LANE - cout)).reshape(1, LANE).astype(jnp.float32)
        return wm, bp

    def prep_fc(w, b, k_pad):
        fout, fin = w.shape
        wm = jnp.pad(w.T, ((0, k_pad - fin), (0, LANE - fout))).astype(jnp.bfloat16)
        bp = jnp.pad(b, (0, LANE - fout)).reshape(1, LANE).astype(jnp.float32)
        return wm, bp

    p = {}
    p['conv1_w'], p['conv1_b'] = prep_conv(raw['w_conv1'], raw['b_conv1'])
    p['conv2_w'], p['conv2_b'] = prep_conv(raw['w_conv2'], raw['b_conv2'])

    # Fold torch's NCHW flatten (feature index = c*25 + po*5 + qo) into a
    # (25, 128, 128) weight indexed [s=(po,qo), c, j]: no in-kernel relayout.
    w1 = raw['w_fc1'].reshape(120, 16, 25)                 # [j, c, s]
    w1 = jnp.transpose(w1, (2, 1, 0))                      # [s, c, j]
    w1 = jnp.pad(w1, ((0, 0), (0, LANE - 16), (0, LANE - 120)))
    p['fc1_w'] = w1.astype(jnp.bfloat16)
    p['fc1_b'] = jnp.pad(raw['b_fc1'], (0, LANE - 120)).reshape(1, LANE).astype(jnp.float32)

    p['fc2_w'], p['fc2_b'] = prep_fc(raw['w_fc2'], raw['b_fc2'], LANE)
    p['fc3_w'], p['fc3_b'] = prep_fc(raw['w_fc3'], raw['b_fc3'], LANE)
    return p


def init_params(key, in_ch, out_ch):
    ks = jax.random.split(key, 5)

    def conv_init(k, cout, cin, kh, kw):
        # deterministic stand-in for torch's default Conv2d init
        fan_in = cin * kh * kw
        bound = 1.0 / (fan_in ** 0.5)
        kw_, kb = jax.random.split(k)
        w = jax.random.uniform(kw_, (cout, cin, kh, kw), jnp.float32, -bound, bound)
        b = jax.random.uniform(kb, (cout,), jnp.float32, -bound, bound)
        return w, b

    def xavier_linear(k, fout, fin):
        bound = (6.0 / (fin + fout)) ** 0.5
        w = jax.random.uniform(k, (fout, fin), jnp.float32, -bound, bound)
        b = jnp.full((fout,), 0.01, jnp.float32)
        return w, b

    p = {}
    p['w_conv1'], p['b_conv1'] = conv_init(ks[0], 6, in_ch, 5, 5)
    p['w_conv2'], p['b_conv2'] = conv_init(ks[1], 16, 6, 5, 5)
    p['w_fc1'], p['b_fc1'] = xavier_linear(ks[2], 120, 5 * 5 * 16)
    p['w_fc2'], p['b_fc2'] = xavier_linear(ks[3], 84, 120)
    p['w_fc3'], p['b_fc3'] = xavier_linear(ks[4], out_ch, 84)
    return p


if __name__ == "__main__":
    in_ch, out_ch = 3, 10
    batch = 2
    key = jax.random.PRNGKey(0)
    kx, kp = jax.random.split(key)
    # 32x32 spatial is required by the architecture (5*5*16 = 400 fc1 features)
    x = jax.random.normal(kx, (batch, in_ch, 32, 32), jnp.float32)
    raw = init_params(kp, in_ch, out_ch)
    params = prepare_params(raw, out_ch)        # weight prep hoisted out of jit

    fwd = jax.jit(functools.partial(lenet_forward, out_ch=out_ch))
    out = jax.block_until_ready(fwd(x, params))

    assert out.shape == (batch, out_ch)
    assert out.dtype == jnp.float32
    assert bool(jnp.all(jnp.isfinite(out)))
    # log-softmax rows must exp-sum to ~1
    assert bool(jnp.all(jnp.abs(jnp.sum(jnp.exp(out), axis=-1) - 1.0) < 1e-4))
    print("KERNEL_OK")
</pallas_src>

<mosaic_0001>
module attributes {stable_mosaic.version = 11 : i64} {
  func.func @_conv_relu_pool_kernel(%arg0: i32, %arg1: memref<4x200x128xbf16, #tpu.memory_space<vmem>>, %arg2: memref<128x128xbf16, #tpu.memory_space<vmem>>, %arg3: memref<1x128xf32, #tpu.memory_space<vmem>>, %arg4: memref<200x128xbf16, #tpu.memory_space<vmem>>) attributes {dimension_semantics = [#tpu.dimension_semantics<parallel>], iteration_bounds = array<i64: 2>, scalar_prefetch = 0 : i64, scratch_operands = 0 : i64, tpu.core_type = #tpu.core_type<tc>, window_params = [{transform_indices = @transform_0, window_bounds = array<i64: 4, 200, 128>}, {pipeline_mode = #tpu.pipeline_mode<synchronous>, transform_indices = @transform_1, window_bounds = array<i64: 128, 128>}, {pipeline_mode = #tpu.pipeline_mode<synchronous>, transform_indices = @transform_2, window_bounds = array<i64: 1, 128>}, {transform_indices = @transform_3, window_bounds = array<i64: 200, 128>}]} {
    %c0 = arith.constant 0 : index
    %c0_0 = arith.constant 0 : index
    %c0_1 = arith.constant 0 : index
    %0 = vector.load %arg1[%c0, %c0_0, %c0_1] : memref<4x200x128xbf16, #tpu.memory_space<vmem>>, vector<4x200x128xbf16>
    %1 = vector.shape_cast %0 : vector<4x200x128xbf16> to vector<800x128xbf16>
    %c0_2 = arith.constant 0 : index
    %c0_3 = arith.constant 0 : index
    %2 = vector.load %arg2[%c0_2, %c0_3] : memref<128x128xbf16, #tpu.memory_space<vmem>>, vector<128x128xbf16>
    %cst = arith.constant dense<0.000000e+00> : vector<800x128xf32>
    %3 = tpu.matmul %1, %2, %cst {dimension_numbers = #tpu.dot_dimension_numbers<[1], [0], [0], [1], [0, 0, 1, 1], [], []>} : vector<800x128xbf16>, vector<128x128xbf16>, vector<800x128xf32> -> vector<800x128xf32>
    %4 = vector.shape_cast %3 : vector<800x128xf32> to vector<4x200x128xf32>
    %cst_4 = arith.constant dense<0xFF800000> : vector<200x128xf32>
    %5 = vector.multi_reduction <maximumf>, %4, %cst_4 [0] : vector<4x200x128xf32> to vector<200x128xf32>
    %c0_5 = arith.constant 0 : index
    %c0_6 = arith.constant 0 : index
    %6 = vector.load %arg3[%c0_5, %c0_6] : memref<1x128xf32, #tpu.memory_space<vmem>>, vector<1x128xf32>
    %7 = vector.broadcast %6 : vector<1x128xf32> to vector<200x128xf32>
    %8 = arith.addf %5, %7 : vector<200x128xf32>
    %cst_7 = arith.constant 0.000000e+00 : f32
    %9 = vector.broadcast %cst_7 : f32 to vector<200x128xf32>
    %10 = arith.maximumf %8, %9 : vector<200x128xf32>
    %11 = arith.truncf %10 : vector<200x128xf32> to vector<200x128xbf16>
    %c0_8 = arith.constant 0 : index
    %c0_9 = arith.constant 0 : index
    %12 = vector.load %arg4[%c0_8, %c0_9] : memref<200x128xbf16, #tpu.memory_space<vmem>>, vector<200x128xbf16>
    tpu.vector_store %arg4[%c0_8, %c0_9], %11 {strides = array<i32>} : memref<200x128xbf16, #tpu.memory_space<vmem>>, vector<200x128xbf16>,
    return
  }
  func.func @transform_0(%arg0: i32) -> (i32, i32, i32) {
    %c0_i32 = arith.constant 0 : i32
    %c0_i32_0 = arith.constant 0 : i32
    %c0_i32_1 = arith.constant 0 : i32
    return %c0_i32, %arg0, %c0_i32_0 : i32, i32, i32
  }
  func.func @transform_1(%arg0: i32) -> (i32, i32) {
    %c0_i32 = arith.constant 0 : i32
    %c0_i32_0 = arith.constant 0 : i32
    %c0_i32_1 = arith.constant 0 : i32
    return %c0_i32, %c0_i32_0 : i32, i32
  }
  func.func @transform_2(%arg0: i32) -> (i32, i32) {
    %c0_i32 = arith.constant 0 : i32
    %c0_i32_0 = arith.constant 0 : i32
    %c0_i32_1 = arith.constant 0 : i32
    return %c0_i32, %c0_i32_0 : i32, i32
  }
  func.func @transform_3(%arg0: i32) -> (i32, i32) {
    %c0_i32 = arith.constant 0 : i32
    %c0_i32_0 = arith.constant 0 : i32
    return %arg0, %c0_i32 : i32, i32
  }
}

module attributes {stable_mosaic.version = 11 : i64} {
  func.func @_conv2_classifier_kernel(%arg0: i32, %arg1: memref<4x25x8x256xbf16, #tpu.memory_space<vmem>>, %arg2: memref<256x128xbf16, #tpu.memory_space<vmem>>, %arg3: memref<1x128xf32, #tpu.memory_space<vmem>>, %arg4: memref<25x128x128xbf16, #tpu.memory_space<vmem>>, %arg5: memref<1x128xf32, #tpu.memory_space<vmem>>, %arg6: memref<128x128xbf16, #tpu.memory_space<vmem>>, %arg7: memref<1x128xf32, #tpu.memory_space<vmem>>, %arg8: memref<128x128xbf16, #tpu.memory_space<vmem>>, %arg9: memref<1x128xf32, #tpu.memory_space<vmem>>, %arg10: memref<8x128xf32, #tpu.memory_space<vmem>>) attributes {dimension_semantics = [#tpu.dimension_semantics<parallel>], iteration_bounds = array<i64: 1>, scalar_prefetch = 0 : i64, scratch_operands = 0 : i64, tpu.core_type = #tpu.core_type<tc>, window_params = [{transform_indices = @transform_0, window_bounds = array<i64: 4, 25, 8, 256>}, {pipeline_mode = #tpu.pipeline_mode<synchronous>, transform_indices = @transform_1, window_bounds = array<i64: 256, 128>}, {pipeline_mode = #tpu.pipeline_mode<synchronous>, transform_indices = @transform_2, window_bounds = array<i64: 1, 128>}, {pipeline_mode = #tpu.pipeline_mode<synchronous>, transform_indices = @transform_3, window_bounds = array<i64: 25, 128, 128>}, {pipeline_mode = #tpu.pipeline_mode<synchronous>, transform_indices = @transform_4, window_bounds = array<i64: 1, 128>}, {pipeline_mode = #tpu.pipeline_mode<synchronous>, transform_indices = @transform_5, window_bounds = array<i64: 128, 128>}, {pipeline_mode = #tpu.pipeline_mode<synchronous>, transform_indices = @transform_6, window_bounds = array<i64: 1, 128>}, {pipeline_mode = #tpu.pipeline_mode<synchronous>, transform_indices = @transform_7, window_bounds = array<i64: 128, 128>}, {pipeline_mode = #tpu.pipeline_mode<synchronous>, transform_indices = @transform_8, window_bounds = array<i64: 1, 128>}, {transform_indices = @transform_9, window_bounds = array<i64: 8, 128>}]} {
    %c0 = arith.constant 0 : index
    %c0_0 = arith.constant 0 : index
    %c0_1 = arith.constant 0 : index
    %c0_2 = arith.constant 0 : index
    %0 = vector.load %arg1[%c0, %c0_0, %c0_1, %c0_2] : memref<4x25x8x256xbf16, #tpu.memory_space<vmem>>, vector<4x25x8x256xbf16>
    %1 = vector.shape_cast %0 : vector<4x25x8x256xbf16> to vector<800x256xbf16>
    %c0_3 = arith.constant 0 : index
    %c0_4 = arith.constant 0 : index
    %2 = vector.load %arg2[%c0_3, %c0_4] : memref<256x128xbf16, #tpu.memory_space<vmem>>, vector<256x128xbf16>
    %cst = arith.constant dense<0.000000e+00> : vector<800x128xf32>
    %3 = tpu.matmul %1, %2, %cst {dimension_numbers = #tpu.dot_dimension_numbers<[1], [0], [0], [1], [0, 0, 1, 1], [], []>} : vector<800x256xbf16>, vector<256x128xbf16>, vector<800x128xf32> -> vector<800x128xf32>
    %4 = vector.shape_cast %3 : vector<800x128xf32> to vector<4x200x128xf32>
    %cst_5 = arith.constant dense<0xFF800000> : vector<200x128xf32>
    %5 = vector.multi_reduction <maximumf>, %4, %cst_5 [0] : vector<4x200x128xf32> to vector<200x128xf32>
    %c0_6 = arith.constant 0 : index
    %c0_7 = arith.constant 0 : index
    %6 = vector.load %arg3[%c0_6, %c0_7] : memref<1x128xf32, #tpu.memory_space<vmem>>, vector<1x128xf32>
    %7 = vector.broadcast %6 : vector<1x128xf32> to vector<200x128xf32>
    %8 = arith.addf %5, %7 : vector<200x128xf32>
    %cst_8 = arith.constant 0.000000e+00 : f32
    %9 = vector.broadcast %cst_8 : f32 to vector<200x128xf32>
    %10 = arith.maximumf %8, %9 : vector<200x128xf32>
    %11 = arith.truncf %10 : vector<200x128xf32> to vector<200x128xbf16>
    %cst_9 = arith.constant 0.000000e+00 : f32
    %12 = vector.broadcast %cst_9 : f32 to vector<8x128xf32>
    %13 = vector.extract_strided_slice %11 {offsets = [0, 0], sizes = [8, 128], strides = [1, 1]} : vector<200x128xbf16> to vector<8x128xbf16>
    %c0_10 = arith.constant 0 : index
    %c0_11 = arith.constant 0 : index
    %c0_12 = arith.constant 0 : index
    %14 = vector.load %arg4[%c0_10, %c0_11, %c0_12] : memref<25x128x128xbf16, #tpu.memory_space<vmem>>, vector<1x128x128xbf16>
    %15 = vector.shape_cast %14 : vector<1x128x128xbf16> to vector<128x128xbf16>
    %cst_13 = arith.constant dense<0.000000e+00> : vector<8x128xf32>
    %16 = tpu.matmul %13, %15, %cst_13 {dimension_numbers = #tpu.dot_dimension_numbers<[1], [0], [0], [1], [0, 0, 1, 1], [], []>} : vector<8x128xbf16>, vector<128x128xbf16>, vector<8x128xf32> -> vector<8x128xf32>
    %17 = arith.addf %12, %16 : vector<8x128xf32>
    %18 = vector.extract_strided_slice %11 {offsets = [8, 0], sizes = [8, 128], strides = [1, 1]} : vector<200x128xbf16> to vector<8x128xbf16>
    %c1 = arith.constant 1 : index
    %c0_14 = arith.constant 0 : index
    %c0_15 = arith.constant 0 : index
    %19 = vector.load %arg4[%c1, %c0_14, %c0_15] : memref<25x128x128xbf16, #tpu.memory_space<vmem>>, vector<1x128x128xbf16>
    %20 = vector.shape_cast %19 : vector<1x128x128xbf16> to vector<128x128xbf16>
    %cst_16 = arith.constant dense<0.000000e+00> : vector<8x128xf32>
    %21 = tpu.matmul %18, %20, %cst_16 {dimension_numbers = #tpu.dot_dimension_numbers<[1], [0], [0], [1], [0, 0, 1, 1], [], []>} : vector<8x128xbf16>, vector<128x128xbf16>, vector<8x128xf32> -> vector<8x128xf32>
    %22 = arith.addf %17, %21 : vector<8x128xf32>
    %23 = vector.extract_strided_slice %11 {offsets = [16, 0], sizes = [8, 128], strides = [1, 1]} : vector<200x128xbf16> to vector<8x128xbf16>
    %c2 = arith.constant 2 : index
    %c0_17 = arith.constant 0 : index
    %c0_18 = arith.constant 0 : index
    %24 = vector.load %arg4[%c2, %c0_17, %c0_18] : memref<25x128x128xbf16, #tpu.memory_space<vmem>>, vector<1x128x128xbf16>
    %25 = vector.shape_cast %24 : vector<1x128x128xbf16> to vector<128x128xbf16>
    %cst_19 = arith.constant dense<0.000000e+00> : vector<8x128xf32>
    %26 = tpu.matmul %23, %25, %cst_19 {dimension_numbers = #tpu.dot_dimension_numbers<[1], [0], [0], [1], [0, 0, 1, 1], [], []>} : vector<8x128xbf16>, vector<128x128xbf16>, vector<8x128xf32> -> vector<8x128xf32>
    %27 = arith.addf %22, %26 : vector<8x128xf32>
    %28 = vector.extract_strided_slice %11 {offsets = [24, 0], sizes = [8, 128], strides = [1, 1]} : vector<200x128xbf16> to vector<8x128xbf16>
    %c3 = arith.constant 3 : index
    %c0_20 = arith.constant 0 : index
    %c0_21 = arith.constant 0 : index
    %29 = vector.load %arg4[%c3, %c0_20, %c0_21] : memref<25x128x128xbf16, #tpu.memory_space<vmem>>, vector<1x128x128xbf16>
    %30 = vector.shape_cast %29 : vector<1x128x128xbf16> to vector<128x128xbf16>
    %cst_22 = arith.constant dense<0.000000e+00> : vector<8x128xf32>
    %31 = tpu.matmul %28, %30, %cst_22 {dimension_numbers = #tpu.dot_dimension_numbers<[1], [0], [0], [1], [0, 0, 1, 1], [], []>} : vector<8x128xbf16>, vector<128x128xbf16>, vector<8x128xf32> -> vector<8x128xf32>
    %32 = arith.addf %27, %31 : vector<8x128xf32>
    %33 = vector.extract_strided_slice %11 {offsets = [32, 0], sizes = [8, 128], strides = [1, 1]} : vector<200x128xbf16> to vector<8x128xbf16>
    %c4 = arith.constant 4 : index
    %c0_23 = arith.constant 0 : index
    %c0_24 = arith.constant 0 : index
    %34 = vector.load %arg4[%c4, %c0_23, %c0_24] : memref<25x128x128xbf16, #tpu.memory_space<vmem>>, vector<1x128x128xbf16>
    %35 = vector.shape_cast %34 : vector<1x128x128xbf16> to vector<128x128xbf16>
    %cst_25 = arith.constant dense<0.000000e+00> : vector<8x128xf32>
    %36 = tpu.matmul %33, %35, %cst_25 {dimension_numbers = #tpu.dot_dimension_numbers<[1], [0], [0], [1], [0, 0, 1, 1], [], []>} : vector<8x128xbf16>, vector<128x128xbf16>, vector<8x128xf32> -> vector<8x128xf32>
    %37 = arith.addf %32, %36 : vector<8x128xf32>
    %38 = vector.extract_strided_slice %11 {offsets = [40, 0], sizes = [8, 128], strides = [1, 1]} : vector<200x128xbf16> to vector<8x128xbf16>
    %c5 = arith.constant 5 : index
    %c0_26 = arith.constant 0 : index
    %c0_27 = arith.constant 0 : index
    %39 = vector.load %arg4[%c5, %c0_26, %c0_27] : memref<25x128x128xbf16, #tpu.memory_space<vmem>>, vector<1x128x128xbf16>
    %40 = vector.shape_cast %39 : vector<1x128x128xbf16> to vector<128x128xbf16>
    %cst_28 = arith.constant dense<0.000000e+00> : vector<8x128xf32>
    %41 = tpu.matmul %38, %40, %cst_28 {dimension_numbers = #tpu.dot_dimension_numbers<[1], [0], [0], [1], [0, 0, 1, 1], [], []>} : vector<8x128xbf16>, vector<128x128xbf16>, vector<8x128xf32> -> vector<8x128xf32>
    %42 = arith.addf %37, %41 : vector<8x128xf32>
    %43 = vector.extract_strided_slice %11 {offsets = [48, 0], sizes = [8, 128], strides = [1, 1]} : vector<200x128xbf16> to vector<8x128xbf16>
    %c6 = arith.constant 6 : index
    %c0_29 = arith.constant 0 : index
    %c0_30 = arith.constant 0 : index
    %44 = vector.load %arg4[%c6, %c0_29, %c0_30] : memref<25x128x128xbf16, #tpu.memory_space<vmem>>, vector<1x128x128xbf16>
    %45 = vector.shape_cast %44 : vector<1x128x128xbf16> to vector<128x128xbf16>
    %cst_31 = arith.constant dense<0.000000e+00> : vector<8x128xf32>
    %46 = tpu.matmul %43, %45, %cst_31 {dimension_numbers = #tpu.dot_dimension_numbers<[1], [0], [0], [1], [0, 0, 1, 1], [], []>} : vector<8x128xbf16>, vector<128x128xbf16>, vector<8x128xf32> -> vector<8x128xf32>
    %47 = arith.addf %42, %46 : vector<8x128xf32>
    %48 = vector.extract_strided_slice %11 {offsets = [56, 0], sizes = [8, 128], strides = [1, 1]} : vector<200x128xbf16> to vector<8x128xbf16>
    %c7 = arith.constant 7 : index
    %c0_32 = arith.constant 0 : index
    %c0_33 = arith.constant 0 : index
    %49 = vector.load %arg4[%c7, %c0_32, %c0_33] : memref<25x128x128xbf16, #tpu.memory_space<vmem>>, vector<1x128x128xbf16>
    %50 = vector.shape_cast %49 : vector<1x128x128xbf16> to vector<128x128xbf16>
    %cst_34 = arith.constant dense<0.000000e+00> : vector<8x128xf32>
    %51 = tpu.matmul %48, %50, %cst_34 {dimension_numbers = #tpu.dot_dimension_numbers<[1], [0], [0], [1], [0, 0, 1, 1], [], []>} : vector<8x128xbf16>, vector<128x128xbf16>, vector<8x128xf32> -> vector<8x128xf32>
    %52 = arith.addf %47, %51 : vector<8x128xf32>
    %53 = vector.extract_strided_slice %11 {offsets = [64, 0], sizes = [8, 128], strides = [1, 1]} : vector<200x128xbf16> to vector<8x128xbf16>
    %c8 = arith.constant 8 : index
    %c0_35 = arith.constant 0 : index
    %c0_36 = arith.constant 0 : index
    %54 = vector.load %arg4[%c8, %c0_35, %c0_36] : memref<25x128x128xbf16, #tpu.memory_space<vmem>>, vector<1x128x128xbf16>
    %55 = vector.shape_cast %54 : vector<1x128x128xbf16> to vector<128x128xbf16>
    %cst_37 = arith.constant dense<0.000000e+00> : vector<8x128xf32>
    %56 = tpu.matmul %53, %55, %cst_37 {dimension_numbers = #tpu.dot_dimension_numbers<[1], [0], [0], [1], [0, 0, 1, 1], [], []>} : vector<8x128xbf16>, vector<128x128xbf16>, vector<8x128xf32> -> vector<8x128xf32>
    %57 = arith.addf %52, %56 : vector<8x128xf32>
    %58 = vector.extract_strided_slice %11 {offsets = [72, 0], sizes = [8, 128], strides = [1, 1]} : vector<200x128xbf16> to vector<8x128xbf16>
    %c9 = arith.constant 9 : index
    %c0_38 = arith.constant 0 : index
    %c0_39 = arith.constant 0 : index
    %59 = vector.load %arg4[%c9, %c0_38, %c0_39] : memref<25x128x128xbf16, #tpu.memory_space<vmem>>, vector<1x128x128xbf16>
    %60 = vector.shape_cast %59 : vector<1x128x128xbf16> to vector<128x128xbf16>
    %cst_40 = arith.constant dense<0.000000e+00> : vector<8x128xf32>
    %61 = tpu.matmul %58, %60, %cst_40 {dimension_numbers = #tpu.dot_dimension_numbers<[1], [0], [0], [1], [0, 0, 1, 1], [], []>} : vector<8x128xbf16>, vector<128x128xbf16>, vector<8x128xf32> -> vector<8x128xf32>
    %62 = arith.addf %57, %61 : vector<8x128xf32>
    %63 = vector.extract_strided_slice %11 {offsets = [80, 0], sizes = [8, 128], strides = [1, 1]} : vector<200x128xbf16> to vector<8x128xbf16>
    %c10 = arith.constant 10 : index
    %c0_41 = arith.constant 0 : index
    %c0_42 = arith.constant 0 : index
    %64 = vector.load %arg4[%c10, %c0_41, %c0_42] : memref<25x128x128xbf16, #tpu.memory_space<vmem>>, vector<1x128x128xbf16>
    %65 = vector.shape_cast %64 : vector<1x128x128xbf16> to vector<128x128xbf16>
    %cst_43 = arith.constant dense<0.000000e+00> : vector<8x128xf32>
    %66 = tpu.matmul %63, %65, %cst_43 {dimension_numbers = #tpu.dot_dimension_numbers<[1], [0], [0], [1], [0, 0, 1, 1], [], []>} : vector<8x128xbf16>, vector<128x128xbf16>, vector<8x128xf32> -> vector<8x128xf32>
    %67 = arith.addf %62, %66 : vector<8x128xf32>
    %68 = vector.extract_strided_slice %11 {offsets = [88, 0], sizes = [8, 128], strides = [1, 1]} : vector<200x128xbf16> to vector<8x128xbf16>
    %c11 = arith.constant 11 : index
    %c0_44 = arith.constant 0 : index
    %c0_45 = arith.constant 0 : index
    %69 = vector.load %arg4[%c11, %c0_44, %c0_45] : memref<25x128x128xbf16, #tpu.memory_space<vmem>>, vector<1x128x128xbf16>
    %70 = vector.shape_cast %69 : vector<1x128x128xbf16> to vector<128x128xbf16>
    %cst_46 = arith.constant dense<0.000000e+00> : vector<8x128xf32>
    %71 = tpu.matmul %68, %70, %cst_46 {dimension_numbers = #tpu.dot_dimension_numbers<[1], [0], [0], [1], [0, 0, 1, 1], [], []>} : vector<8x128xbf16>, vector<128x128xbf16>, vector<8x128xf32> -> vector<8x128xf32>
    %72 = arith.addf %67, %71 : vector<8x128xf32>
    %73 = vector.extract_strided_slice %11 {offsets = [96, 0], sizes = [8, 128], strides = [1, 1]} : vector<200x128xbf16> to vector<8x128xbf16>
    %c12 = arith.constant 12 : index
    %c0_47 = arith.constant 0 : index
    %c0_48 = arith.constant 0 : index
    %74 = vector.load %arg4[%c12, %c0_47, %c0_48] : memref<25x128x128xbf16, #tpu.memory_space<vmem>>, vector<1x128x128xbf16>
    %75 = vector.shape_cast %74 : vector<1x128x128xbf16> to vector<128x128xbf16>
    %cst_49 = arith.constant dense<0.000000e+00> : vector<8x128xf32>
    %76 = tpu.matmul %73, %75, %cst_49 {dimension_numbers = #tpu.dot_dimension_numbers<[1], [0], [0], [1], [0, 0, 1, 1], [], []>} : vector<8x128xbf16>, vector<128x128xbf16>, vector<8x128xf32> -> vector<8x128xf32>
    %77 = arith.addf %72, %76 : vector<8x128xf32>
    %78 = vector.extract_strided_slice %11 {offsets = [104, 0], sizes = [8, 128], strides = [1, 1]} : vector<200x128xbf16> to vector<8x128xbf16>
    %c13 = arith.constant 13 : index
    %c0_50 = arith.constant 0 : index
    %c0_51 = arith.constant 0 : index
    %79 = vector.load %arg4[%c13, %c0_50, %c0_51] : memref<25x128x128xbf16, #tpu.memory_space<vmem>>, vector<1x128x128xbf16>
    %80 = vector.shape_cast %79 : vector<1x128x128xbf16> to vector<128x128xbf16>
    %cst_52 = arith.constant dense<0.000000e+00> : vector<8x128xf32>
    %81 = tpu.matmul %78, %80, %cst_52 {dimension_numbers = #tpu.dot_dimension_numbers<[1], [0], [0], [1], [0, 0, 1, 1], [], []>} : vector<8x128xbf16>, vector<128x128xbf16>, vector<8x128xf32> -> vector<8x128xf32>
    %82 = arith.addf %77, %81 : vector<8x128xf32>
    %83 = vector.extract_strided_slice %11 {offsets = [112, 0], sizes = [8, 128], strides = [1, 1]} : vector<200x128xbf16> to vector<8x128xbf16>
    %c14 = arith.constant 14 : index
    %c0_53 = arith.constant 0 : index
    %c0_54 = arith.constant 0 : index
    %84 = vector.load %arg4[%c14, %c0_53, %c0_54] : memref<25x128x128xbf16, #tpu.memory_space<vmem>>, vector<1x128x128xbf16>
    %85 = vector.shape_cast %84 : vector<1x128x128xbf16> to vector<128x128xbf16>
    %cst_55 = arith.constant dense<0.000000e+00> : vector<8x128xf32>
    %86 = tpu.matmul %83, %85, %cst_55 {dimension_numbers = #tpu.dot_dimension_numbers<[1], [0], [0], [1], [0, 0, 1, 1], [], []>} : vector<8x128xbf16>, vector<128x128xbf16>, vector<8x128xf32> -> vector<8x128xf32>
    %87 = arith.addf %82, %86 : vector<8x128xf32>
    %88 = vector.extract_strided_slice %11 {offsets = [120, 0], sizes = [8, 128], strides = [1, 1]} : vector<200x128xbf16> to vector<8x128xbf16>
    %c15 = arith.constant 15 : index
    %c0_56 = arith.constant 0 : index
    %c0_57 = arith.constant 0 : index
    %89 = vector.load %arg4[%c15, %c0_56, %c0_57] : memref<25x128x128xbf16, #tpu.memory_space<vmem>>, vector<1x128x128xbf16>
    %90 = vector.shape_cast %89 : vector<1x128x128xbf16> to vector<128x128xbf16>
    %cst_58 = arith.constant dense<0.000000e+00> : vector<8x128xf32>
    %91 = tpu.matmul %88, %90, %cst_58 {dimension_numbers = #tpu.dot_dimension_numbers<[1], [0], [0], [1], [0, 0, 1, 1], [], []>} : vector<8x128xbf16>, vector<128x128xbf16>, vector<8x128xf32> -> vector<8x128xf32>
    %92 = arith.addf %87, %91 : vector<8x128xf32>
    %93 = vector.extract_strided_slice %11 {offsets = [128, 0], sizes = [8, 128], strides = [1, 1]} : vector<200x128xbf16> to vector<8x128xbf16>
    %c16 = arith.constant 16 : index
    %c0_59 = arith.constant 0 : index
    %c0_60 = arith.constant 0 : index
    %94 = vector.load %arg4[%c16, %c0_59, %c0_60] : memref<25x128x128xbf16, #tpu.memory_space<vmem>>, vector<1x128x128xbf16>
    %95 = vector.shape_cast %94 : vector<1x128x128xbf16> to vector<128x128xbf16>
    %cst_61 = arith.constant dense<0.000000e+00> : vector<8x128xf32>
    %96 = tpu.matmul %93, %95, %cst_61 {dimension_numbers = #tpu.dot_dimension_numbers<[1], [0], [0], [1], [0, 0, 1, 1], [], []>} : vector<8x128xbf16>, vector<128x128xbf16>, vector<8x128xf32> -> vector<8x128xf32>
    %97 = arith.addf %92, %96 : vector<8x128xf32>
    %98 = vector.extract_strided_slice %11 {offsets = [136, 0], sizes = [8, 128], strides = [1, 1]} : vector<200x128xbf16> to vector<8x128xbf16>
    %c17 = arith.constant 17 : index
    %c0_62 = arith.constant 0 : index
    %c0_63 = arith.constant 0 : index
    %99 = vector.load %arg4[%c17, %c0_62, %c0_63] : memref<25x128x128xbf16, #tpu.memory_space<vmem>>, vector<1x128x128xbf16>
    %100 = vector.shape_cast %99 : vector<1x128x128xbf16> to vector<128x128xbf16>
    %cst_64 = arith.constant dense<0.000000e+00> : vector<8x128xf32>
    %101 = tpu.matmul %98, %100, %cst_64 {dimension_numbers = #tpu.dot_dimension_numbers<[1], [0], [0], [1], [0, 0, 1, 1], [], []>} : vector<8x128xbf16>, vector<128x128xbf16>, vector<8x128xf32> -> vector<8x128xf32>
    %102 = arith.addf %97, %101 : vector<8x128xf32>
    %103 = vector.extract_strided_slice %11 {offsets = [144, 0], sizes = [8, 128], strides = [1, 1]} : vector<200x128xbf16> to vector<8x128xbf16>
    %c18 = arith.constant 18 : index
    %c0_65 = arith.constant 0 : index
    %c0_66 = arith.constant 0 : index
    %104 = vector.load %arg4[%c18, %c0_65, %c0_66] : memref<25x128x128xbf16, #tpu.memory_space<vmem>>, vector<1x128x128xbf16>
    %105 = vector.shape_cast %104 : vector<1x128x128xbf16> to vector<128x128xbf16>
    %cst_67 = arith.constant dense<0.000000e+00> : vector<8x128xf32>
    %106 = tpu.matmul %103, %105, %cst_67 {dimension_numbers = #tpu.dot_dimension_numbers<[1], [0], [0], [1], [0, 0, 1, 1], [], []>} : vector<8x128xbf16>, vector<128x128xbf16>, vector<8x128xf32> -> vector<8x128xf32>
    %107 = arith.addf %102, %106 : vector<8x128xf32>
    %108 = vector.extract_strided_slice %11 {offsets = [152, 0], sizes = [8, 128], strides = [1, 1]} : vector<200x128xbf16> to vector<8x128xbf16>
    %c19 = arith.constant 19 : index
    %c0_68 = arith.constant 0 : index
    %c0_69 = arith.constant 0 : index
    %109 = vector.load %arg4[%c19, %c0_68, %c0_69] : memref<25x128x128xbf16, #tpu.memory_space<vmem>>, vector<1x128x128xbf16>
    %110 = vector.shape_cast %109 : vector<1x128x128xbf16> to vector<128x128xbf16>
    %cst_70 = arith.constant dense<0.000000e+00> : vector<8x128xf32>
    %111 = tpu.matmul %108, %110, %cst_70 {dimension_numbers = #tpu.dot_dimension_numbers<[1], [0], [0], [1], [0, 0, 1, 1], [], []>} : vector<8x128xbf16>, vector<128x128xbf16>, vector<8x128xf32> -> vector<8x128xf32>
    %112 = arith.addf %107, %111 : vector<8x128xf32>
    %113 = vector.extract_strided_slice %11 {offsets = [160, 0], sizes = [8, 128], strides = [1, 1]} : vector<200x128xbf16> to vector<8x128xbf16>
    %c20 = arith.constant 20 : index
    %c0_71 = arith.constant 0 : index
    %c0_72 = arith.constant 0 : index
    %114 = vector.load %arg4[%c20, %c0_71, %c0_72] : memref<25x128x128xbf16, #tpu.memory_space<vmem>>, vector<1x128x128xbf16>
    %115 = vector.shape_cast %114 : vector<1x128x128xbf16> to vector<128x128xbf16>
    %cst_73 = arith.constant dense<0.000000e+00> : vector<8x128xf32>
    %116 = tpu.matmul %113, %115, %cst_73 {dimension_numbers = #tpu.dot_dimension_numbers<[1], [0], [0], [1], [0, 0, 1, 1], [], []>} : vector<8x128xbf16>, vector<128x128xbf16>, vector<8x128xf32> -> vector<8x128xf32>
    %117 = arith.addf %112, %116 : vector<8x128xf32>
    %118 = vector.extract_strided_slice %11 {offsets = [168, 0], sizes = [8, 128], strides = [1, 1]} : vector<200x128xbf16> to vector<8x128xbf16>
    %c21 = arith.constant 21 : index
    %c0_74 = arith.constant 0 : index
    %c0_75 = arith.constant 0 : index
    %119 = vector.load %arg4[%c21, %c0_74, %c0_75] : memref<25x128x128xbf16, #tpu.memory_space<vmem>>, vector<1x128x128xbf16>
    %120 = vector.shape_cast %119 : vector<1x128x128xbf16> to vector<128x128xbf16>
    %cst_76 = arith.constant dense<0.000000e+00> : vector<8x128xf32>
    %121 = tpu.matmul %118, %120, %cst_76 {dimension_numbers = #tpu.dot_dimension_numbers<[1], [0], [0], [1], [0, 0, 1, 1], [], []>} : vector<8x128xbf16>, vector<128x128xbf16>, vector<8x128xf32> -> vector<8x128xf32>
    %122 = arith.addf %117, %121 : vector<8x128xf32>
    %123 = vector.extract_strided_slice %11 {offsets = [176, 0], sizes = [8, 128], strides = [1, 1]} : vector<200x128xbf16> to vector<8x128xbf16>
    %c22 = arith.constant 22 : index
    %c0_77 = arith.constant 0 : index
    %c0_78 = arith.constant 0 : index
    %124 = vector.load %arg4[%c22, %c0_77, %c0_78] : memref<25x128x128xbf16, #tpu.memory_space<vmem>>, vector<1x128x128xbf16>
    %125 = vector.shape_cast %124 : vector<1x128x128xbf16> to vector<128x128xbf16>
    %cst_79 = arith.constant dense<0.000000e+00> : vector<8x128xf32>
    %126 = tpu.matmul %123, %125, %cst_79 {dimension_numbers = #tpu.dot_dimension_numbers<[1], [0], [0], [1], [0, 0, 1, 1], [], []>} : vector<8x128xbf16>, vector<128x128xbf16>, vector<8x128xf32> -> vector<8x128xf32>
    %127 = arith.addf %122, %126 : vector<8x128xf32>
    %128 = vector.extract_strided_slice %11 {offsets = [184, 0], sizes = [8, 128], strides = [1, 1]} : vector<200x128xbf16> to vector<8x128xbf16>
    %c23 = arith.constant 23 : index
    %c0_80 = arith.constant 0 : index
    %c0_81 = arith.constant 0 : index
    %129 = vector.load %arg4[%c23, %c0_80, %c0_81] : memref<25x128x128xbf16, #tpu.memory_space<vmem>>, vector<1x128x128xbf16>
    %130 = vector.shape_cast %129 : vector<1x128x128xbf16> to vector<128x128xbf16>
    %cst_82 = arith.constant dense<0.000000e+00> : vector<8x128xf32>
    %131 = tpu.matmul %128, %130, %cst_82 {dimension_numbers = #tpu.dot_dimension_numbers<[1], [0], [0], [1], [0, 0, 1, 1], [], []>} : vector<8x128xbf16>, vector<128x128xbf16>, vector<8x128xf32> -> vector<8x128xf32>
    %132 = arith.addf %127, %131 : vector<8x128xf32>
    %133 = vector.extract_strided_slice %11 {offsets = [192, 0], sizes = [8, 128], strides = [1, 1]} : vector<200x128xbf16> to vector<8x128xbf16>
    %c24 = arith.constant 24 : index
    %c0_83 = arith.constant 0 : index
    %c0_84 = arith.constant 0 : index
    %134 = vector.load %arg4[%c24, %c0_83, %c0_84] : memref<25x128x128xbf16, #tpu.memory_space<vmem>>, vector<1x128x128xbf16>
    %135 = vector.shape_cast %134 : vector<1x128x128xbf16> to vector<128x128xbf16>
    %cst_85 = arith.constant dense<0.000000e+00> : vector<8x128xf32>
    %136 = tpu.matmul %133, %135, %cst_85 {dimension_numbers = #tpu.dot_dimension_numbers<[1], [0], [0], [1], [0, 0, 1, 1], [], []>} : vector<8x128xbf16>, vector<128x128xbf16>, vector<8x128xf32> -> vector<8x128xf32>
    %137 = arith.addf %132, %136 : vector<8x128xf32>
    %c0_86 = arith.constant 0 : index
    %c0_87 = arith.constant 0 : index
    %138 = vector.load %arg5[%c0_86, %c0_87] : memref<1x128xf32, #tpu.memory_space<vmem>>, vector<1x128xf32>
    %139 = vector.broadcast %138 : vector<1x128xf32> to vector<8x128xf32>
    %140 = arith.addf %137, %139 : vector<8x128xf32>
    %cst_88 = arith.constant 0.000000e+00 : f32
    %141 = vector.broadcast %cst_88 : f32 to vector<8x128xf32>
    %142 = arith.maximumf %140, %141 : vector<8x128xf32>
    %143 = arith.truncf %142 : vector<8x128xf32> to vector<8x128xbf16>
    %c0_89 = arith.constant 0 : index
    %c0_90 = arith.constant 0 : index
    %144 = vector.load %arg6[%c0_89, %c0_90] : memref<128x128xbf16, #tpu.memory_space<vmem>>, vector<128x128xbf16>
    %cst_91 = arith.constant dense<0.000000e+00> : vector<8x128xf32>
    %145 = tpu.matmul %143, %144, %cst_91 {dimension_numbers = #tpu.dot_dimension_numbers<[1], [0], [0], [1], [0, 0, 1, 1], [], []>} : vector<8x128xbf16>, vector<128x128xbf16>, vector<8x128xf32> -> vector<8x128xf32>
    %c0_92 = arith.constant 0 : index
    %c0_93 = arith.constant 0 : index
    %146 = vector.load %arg7[%c0_92, %c0_93] : memref<1x128xf32, #tpu.memory_space<vmem>>, vector<1x128xf32>
    %147 = vector.broadcast %146 : vector<1x128xf32> to vector<8x128xf32>
    %148 = arith.addf %145, %147 : vector<8x128xf32>
    %cst_94 = arith.constant 0.000000e+00 : f32
    %149 = vector.broadcast %cst_94 : f32 to vector<8x128xf32>
    %150 = arith.maximumf %148, %149 : vector<8x128xf32>
    %151 = arith.truncf %150 : vector<8x128xf32> to vector<8x128xbf16>
    %c0_95 = arith.constant 0 : index
    %c0_96 = arith.constant 0 : index
    %152 = vector.load %arg8[%c0_95, %c0_96] : memref<128x128xbf16, #tpu.memory_space<vmem>>, vector<128x128xbf16>
    %cst_97 = arith.constant dense<0.000000e+00> : vector<8x128xf32>
    %153 = tpu.matmul %151, %152, %cst_97 {dimension_numbers = #tpu.dot_dimension_numbers<[1], [0], [0], [1], [0, 0, 1, 1], [], []>} : vector<8x128xbf16>, vector<128x128xbf16>, vector<8x128xf32> -> vector<8x128xf32>
    %c0_98 = arith.constant 0 : index
    %c0_99 = arith.constant 0 : index
    %154 = vector.load %arg9[%c0_98, %c0_99] : memref<1x128xf32, #tpu.memory_space<vmem>>, vector<1x128xf32>
    %155 = vector.broadcast %154 : vector<1x128xf32> to vector<8x128xf32>
    %156 = arith.addf %153, %155 : vector<8x128xf32>
    %cst_100 = arith.constant 0.000000e+00 : f32
    %157 = vector.broadcast %cst_100 : f32 to vector<8x128xf32>
    %158 = arith.maximumf %156, %157 : vector<8x128xf32>
    %159 = tpu.iota {dimensions = array<i32: 1>} : vector<8x128xi32>
    %c10_i32 = arith.constant 10 : i32
    %160 = vector.broadcast %c10_i32 : i32 to vector<8x128xi32>
    %161 = arith.cmpi slt, %159, %160 : vector<8x128xi32>
    %cst_101 = arith.constant -1.000000e+30 : f32
    %162 = vector.broadcast %cst_101 : f32 to vector<8x128xf32>
    %163 = arith.select %161, %158, %162 : vector<8x128xi1>, vector<8x128xf32>
    %cst_102 = arith.constant dense<0xFF800000> : vector<8xf32>
    %164 = vector.multi_reduction <maximumf>, %163, %cst_102 [1] : vector<8x128xf32> to vector<8xf32>
    %165 = vector.shape_cast %164 : vector<8xf32> to vector<8x1xf32>
    %166 = vector.broadcast %165 : vector<8x1xf32> to vector<8x128xf32>
    %167 = arith.subf %163, %166 : vector<8x128xf32>
    %168 = math.exp %167 : vector<8x128xf32>
    %cst_103 = arith.constant dense<0.000000e+00> : vector<8xf32>
    %169 = vector.multi_reduction <add>, %168, %cst_103 [1] : vector<8x128xf32> to vector<8xf32>
    %170 = vector.shape_cast %169 : vector<8xf32> to vector<8x1xf32>
    %171 = math.log %170 : vector<8x1xf32>
    %172 = vector.broadcast %171 : vector<8x1xf32> to vector<8x128xf32>
    %173 = arith.subf %167, %172 : vector<8x128xf32>
    %c0_104 = arith.constant 0 : index
    %c0_105 = arith.constant 0 : index
    %174 = vector.load %arg10[%c0_104, %c0_105] : memref<8x128xf32, #tpu.memory_space<vmem>>, vector<8x128xf32>
    tpu.vector_store %arg10[%c0_104, %c0_105], %173 {strides = array<i32>} : memref<8x128xf32, #tpu.memory_space<vmem>>, vector<8x128xf32>,
    return
  }
  func.func @transform_0(%arg0: i32) -> (i32, i32, i32, i32) {
    %c0_i32 = arith.constant 0 : i32
    %c0_i32_0 = arith.constant 0 : i32
    %c0_i32_1 = arith.constant 0 : i32
    %c0_i32_2 = arith.constant 0 : i32
    return %c0_i32, %c0_i32_0, %arg0, %c0_i32_1 : i32, i32, i32, i32
  }
  func.func @transform_1(%arg0: i32) -> (i32, i32) {
    %c0_i32 = arith.constant 0 : i32
    %c0_i32_0 = arith.constant 0 : i32
    %c0_i32_1 = arith.constant 0 : i32
    return %c0_i32, %c0_i32_0 : i32, i32
  }
  func.func @transform_2(%arg0: i32) -> (i32, i32) {
    %c0_i32 = arith.constant 0 : i32
    %c0_i32_0 = arith.constant 0 : i32
    %c0_i32_1 = arith.constant 0 : i32
    return %c0_i32, %c0_i32_0 : i32, i32
  }
  func.func @transform_3(%arg0: i32) -> (i32, i32, i32) {
    %c0_i32 = arith.constant 0 : i32
    %c0_i32_0 = arith.constant 0 : i32
    %c0_i32_1 = arith.constant 0 : i32
    %c0_i32_2 = arith.constant 0 : i32
    return %c0_i32, %c0_i32_0, %c0_i32_1 : i32, i32, i32
  }
  func.func @transform_4(%arg0: i32) -> (i32, i32) {
    %c0_i32 = arith.constant 0 : i32
    %c0_i32_0 = arith.constant 0 : i32
    %c0_i32_1 = arith.constant 0 : i32
    return %c0_i32, %c0_i32_0 : i32, i32
  }
  func.func @transform_5(%arg0: i32) -> (i32, i32) {
    %c0_i32 = arith.constant 0 : i32
    %c0_i32_0 = arith.constant 0 : i32
    %c0_i32_1 = arith.constant 0 : i32
    return %c0_i32, %c0_i32_0 : i32, i32
  }
  func.func @transform_6(%arg0: i32) -> (i32, i32) {
    %c0_i32 = arith.constant 0 : i32
    %c0_i32_0 = arith.constant 0 : i32
    %c0_i32_1 = arith.constant 0 : i32
    return %c0_i32, %c0_i32_0 : i32, i32
  }
  func.func @transform_7(%arg0: i32) -> (i32, i32) {
    %c0_i32 = arith.constant 0 : i32
    %c0_i32_0 = arith.constant 0 : i32
    %c0_i32_1 = arith.constant 0 : i32
    return %c0_i32, %c0_i32_0 : i32, i32
  }
  func.func @transform_8(%arg0: i32) -> (i32, i32) {
    %c0_i32 = arith.constant 0 : i32
    %c0_i32_0 = arith.constant 0 : i32
    %c0_i32_1 = arith.constant 0 : i32
    return %c0_i32, %c0_i32_0 : i32, i32
  }
  func.func @transform_9(%arg0: i32) -> (i32, i32) {
    %c0_i32 = arith.constant 0 : i32
    %c0_i32_0 = arith.constant 0 : i32
    return %arg0, %c0_i32 : i32, i32
  }
}

</mosaic_0001>

<llo_original>
// kernel: lenet_forward.2
$region0: #{lenet_forward.2}
  #allocation0 [shape = 'u32[]', space=smem, size = 0x4, offset = 0x4, fixed_abs, tag = 'smem constant byte address 0x4 - core index']
  #allocation1 [shape = 'u32[72,128]{1,0:T(1,128)}', space=vmem, size = 0x9000, scoped, tag = 'internal scratch']
  %s0 = inlined_call_operand.vmem [shape: bf16[4,400,128], index: 0, kind: input, shape index: {}]
  %s1 = inlined_call_operand.vmem [shape: bf16[128,128], index: 1, kind: input, shape index: {}]
  %s2 = inlined_call_operand.vmem [shape: f32[1,128], index: 2, kind: input, shape index: {}]
  %s3 = inlined_call_operand.vmem [shape: bf16[400,128], index: 3, kind: output, shape index: {}]
  %s4 = sld [smem:[#allocation0]]
  $region86: #{lenet_forward.2} parent=0
    _
  %s6 = ssub.s32 1, %s4
  %s7 = scalar_select 0, %s6, %s4
  $region1: #{lenet_forward.2} parent=0
    #allocation2 [shape = 'u8[409600]{0}', space=vmem, size = 0x64000, scoped, tag = 'input window, operand 0']
    loop: start=0, step=1, limit=4
    $region2: #{lenet_forward.2} parent=1 // loop_pre_header
      _
    $region3: #{lenet_forward.2} parent=1 // loop_header
      %s9 = sphi 0, %s13
      %p10 = scmp.ge.s32.totalorder %s9, 4
      %s19 = sphi 0, %s21
      %s22 = sphi 0, %s19
      %s23 = sphi 0, %s22
      %s39 = sphi 0, %s23
      %s43 = sphi 0, %s43
      %s45 = sphi 0, %s43
      %s46 = sphi 0, %s45
      %s60 = sphi 0, %s46
      %s64 = sphi 0, %s64
      %s66 = sphi 0, %s64
      %s67 = sphi 0, %s66
      %s81 = sphi 0, %s67
      %s87 = sphi 0, %s89
      %s90 = sphi 0, %s87
      %s91 = sphi 0, %s90
      %s107 = sphi 0, %s91
    $region4: #{lenet_forward.2} parent=1 // loop_header_branch
      %12 = sbr.rel (%p10) target = $region8
    $region5: #{lenet_forward.2} parent=1 // loop_body
      %s14 = ssub.s32 %s9, 1
      %s15 = ssub.s32 %s9, 2
      %s16 = sadd.s32 %s9, 1
      %s17 = ssub.s32 %s9, %s16
      %p18 = scmp.eq.s32.totalorder %s17, 0
      %s20 = sadd.s32 %s19, 1
      %s21 = scalar_select %p18, %s19, %s20
      %p24 = pneg %p18
      %p25 = scmp.eq.s32.totalorder %s9, 1
      %p26 = por %p24, %p25
      %p27 = scmp.ne.s32.totalorder %s19, %s22
      %p28 = scmp.eq.s32.totalorder %s9, 0
      %p29 = por %p27, %p28
      %p30 = scmp.ne.s32.totalorder %s19, %s22
      %p31 = scmp.eq.s32.totalorder %s14, 1
      %p32 = por %p30, %p31
      %p33 = scmp.ne.s32.totalorder %s22, %s23
      %p34 = scmp.eq.s32.totalorder %s14, 0
      %p35 = por %p33, %p34
      %p36 = scmp.ne.s32.totalorder %s22, %s23
      %p37 = scmp.eq.s32.totalorder %s15, 1
      %p38 = por %p36, %p37
      %p40 = scmp.ne.s32.totalorder %s23, %s39
      %p41 = scmp.eq.s32.totalorder %s15, 0
      %p42 = por %p40, %p41
      %s44 = sadd.s32 %s43, 1
      %p47 = scmp.eq.s32.totalorder %s9, 1
      %p48 = scmp.ne.s32.totalorder %s43, %s45
      %p49 = scmp.eq.s32.totalorder %s9, 0
      %p50 = por %p48, %p49
      %p51 = scmp.ne.s32.totalorder %s43, %s45
      %p52 = scmp.eq.s32.totalorder %s14, 1
      %p53 = por %p51, %p52
      %p54 = scmp.ne.s32.totalorder %s45, %s46
      %p55 = scmp.eq.s32.totalorder %s14, 0
      %p56 = por %p54, %p55
      %p57 = scmp.ne.s32.totalorder %s45, %s46
      %p58 = scmp.eq.s32.totalorder %s15, 1
      %p59 = por %p57, %p58
      %p61 = scmp.ne.s32.totalorder %s46, %s60
      %p62 = scmp.eq.s32.totalorder %s15, 0
      %p63 = por %p61, %p62
      %s65 = sadd.s32 %s64, 1
      %p68 = scmp.eq.s32.totalorder %s9, 1
      %p69 = scmp.ne.s32.totalorder %s64, %s66
      %p70 = scmp.eq.s32.totalorder %s9, 0
      %p71 = por %p69, %p70
      %p72 = scmp.ne.s32.totalorder %s64, %s66
      %p73 = scmp.eq.s32.totalorder %s14, 1
      %p74 = por %p72, %p73
      %p75 = scmp.ne.s32.totalorder %s66, %s67
      %p76 = scmp.eq.s32.totalorder %s14, 0
      %p77 = por %p75, %p76
      %p78 = scmp.ne.s32.totalorder %s66, %s67
      %p79 = scmp.eq.s32.totalorder %s15, 1
      %p80 = por %p78, %p79
      %p82 = scmp.ne.s32.totalorder %s67, %s81
      %p83 = scmp.eq.s32.totalorder %s15, 0
      %p84 = por %p82, %p83
      %s85 = ssub.s32 %s9, %s16
      %p86 = scmp.eq.s32.totalorder %s85, 0
      %s88 = sadd.s32 %s87, 1
      %s89 = scalar_select %p86, %s87, %s88
      %p92 = pneg %p86
      %p93 = scmp.eq.s32.totalorder %s9, 1
      %p94 = por %p92, %p93
      %p95 = scmp.ne.s32.totalorder %s87, %s90
      %p96 = scmp.eq.s32.totalorder %s9, 0
      %p97 = por %p95, %p96
      %p98 = scmp.ne.s32.totalorder %s87, %s90
      %p99 = scmp.eq.s32.totalorder %s14, 1
      %p100 = por %p98, %p99
      %p101 = scmp.ne.s32.totalorder %s90, %s91
      %p102 = scmp.eq.s32.totalorder %s14, 0
      %p103 = por %p101, %p102
      %p104 = scmp.ne.s32.totalorder %s90, %s91
      %p105 = scmp.eq.s32.totalorder %s15, 1
      %p106 = por %p104, %p105
      %p108 = scmp.ne.s32.totalorder %s91, %s107
      %p109 = scmp.eq.s32.totalorder %s15, 0
      %p110 = por %p108, %p109
      %p111 = scmp.le.s32.totalorder 1, %s9
      %p112 = scmp.lt.s32.totalorder %s9, 3
      %p113 = pnand %p111, %p112
      %p114 = pneg %p113
      // Predicated region
      $region9: #{lenet_forward.2} parent=5 // pred_check
        _
      $region10: #{lenet_forward.2} parent=5 // pred_check_branch
        %116 = sbr.rel (%p113) target = $region12
      $region11: #{lenet_forward.2} parent=5 // pred_region
        %s117 = ssub.s32 %s9, 1
        // Predicated region
        $region13: #{lenet_forward.2} parent=11 // pred_check
          %p118 = pneg %p56
        $region14: #{lenet_forward.2} parent=11 // pred_check_branch
          %120 = sbr.rel (%p118) target = $region16
        $region15: #{lenet_forward.2} parent=11 // pred_region
          _
        $region16: #{lenet_forward.2} parent=11 // pred_fallthru
          _
        // Predicated region
        $region17: #{lenet_forward.2} parent=11 // pred_check
          %p121 = pneg %p77
        $region18: #{lenet_forward.2} parent=11 // pred_check_branch
          %123 = sbr.rel (%p121) target = $region20
        $region19: #{lenet_forward.2} parent=11 // pred_region
          _
        $region20: #{lenet_forward.2} parent=11 // pred_fallthru
          _
      $region12: #{lenet_forward.2} parent=5 // pred_fallthru
        _
      %p124 = scmp.lt.s32.totalorder %s9, 2
      // Predicated region
      $region21: #{lenet_forward.2} parent=5 // pred_check
        %p125 = pneg %p124
      $region22: #{lenet_forward.2} parent=5 // pred_check_branch
        %127 = sbr.rel (%p125) target = $region24
      $region23: #{lenet_forward.2} parent=5 // pred_region
        // Predicated region
        $region25: #{lenet_forward.2} parent=23 // pred_check
          %p128 = pneg %p29
        $region26: #{lenet_forward.2} parent=23 // pred_check_branch
          %130 = sbr.rel (%p128) target = $region28
        $region27: #{lenet_forward.2} parent=23 // pred_region
          %s131 = sand.u32 %s19, 1
          %s132 = sand.u32 %s19, 1
          %s133 = smul.addr %s132, 400
          %s134 = scalar_lea.vmem [#allocation2], %s133
          %s135 = smul.u32 25, %s9
          %s136 = smul.addr %s135, 4
          %s137 = scalar_lea.vmem %s0, %s136
          // Predicated region
          $region29: #{lenet_forward.2} parent=27 // pred_check
            _
          $region30: #{lenet_forward.2} parent=27 // pred_check_branch
            %139 = sbr.rel (0) target = $region32
          $region31: #{lenet_forward.2} parent=27 // pred_region
            // Predicated region
            $region33: #{lenet_forward.2} parent=31 // pred_check
              _
            $region34: #{lenet_forward.2} parent=31 // pred_check_branch
              %141 = sbr.rel target = $region36
            $region35: #{lenet_forward.2} parent=31 // pred_region
              // Predicated region
              $region48: #{lenet_forward.2} parent=35 // pred_check
                _
              $region49: #{lenet_forward.2} parent=35 // pred_check_branch
                %355 = sbr.rel (0) target = $region51
              $region50: #{lenet_forward.2} parent=35 // pred_region
                loop: start=0, step=1, limit=1
                $region52: #{lenet_forward.2} parent=50 // loop_pre_header
                  _
                $region53: #{lenet_forward.2} parent=50 // loop_header
                  %s357 = sphi 0, %s361
                  %p358 = scmp.ge.s32.totalorder %s357, 1
                  %s362 = sphi %s137, %s137
                  %s363 = sphi %s134, %s134
                $region54: #{lenet_forward.2} parent=50 // loop_header_branch
                  %360 = sbr.rel (%p358) target = $region58
                $region55: #{lenet_forward.2} parent=50 // loop_body
                  _
                $region56: #{lenet_forward.2} parent=50 // loop_footer
                  %s361 = sadd.s32 1, %s357
                $region57: #{lenet_forward.2} parent=50 // loop_footer_branch
                  %356 = sbr.rel target = $region53
                $region58: #{lenet_forward.2} parent=50 // loop_exit
                  _
                %s365 = ssub.s32 16, 1
                loop: start=0, step=1, limit=1
                $region59: #{lenet_forward.2} parent=50 // loop_pre_header
                  _
                $region60: #{lenet_forward.2} parent=50 // loop_header
                  %s367 = sphi 0, %s371
                  %p368 = scmp.ge.s32.totalorder %s367, 1
                  %s372 = sphi %s137, %s137
                  %s373 = sphi %s134, %s134
                $region61: #{lenet_forward.2} parent=50 // loop_header_branch
                  %370 = sbr.rel (%p368) target = $region65
                $region62: #{lenet_forward.2} parent=50 // loop_body
                  %v374 = vld [vmem:[%s372] sm:%s365]
                  %375 = vst [vmem:[%s373] sm:%s365] %v374
                  %v376 = vld [vmem:[%s372 + $0x4] sm:%s365]
                  %377 = vst [vmem:[%s373 + $0x4] sm:%s365] %v376
                  %v378 = vld [vmem:[%s372 + $0x8] sm:%s365]
                  %379 = vst [vmem:[%s373 + $0x8] sm:%s365] %v378
                  %v380 = vld [vmem:[%s372 + $0xc] sm:%s365]
                  %381 = vst [vmem:[%s373 + $0xc] sm:%s365] %v380
                  %v382 = vld [vmem:[%s372 + $0x10] sm:%s365]
                  %383 = vst [vmem:[%s373 + $0x10] sm:%s365] %v382
                  %v384 = vld [vmem:[%s372 + $0x14] sm:%s365]
                  %385 = vst [vmem:[%s373 + $0x14] sm:%s365] %v384
                  %v386 = vld [vmem:[%s372 + $0x18] sm:%s365]
                  %387 = vst [vmem:[%s373 + $0x18] sm:%s365] %v386
                  %v388 = vld [vmem:[%s372 + $0x1c] sm:%s365]
                  %389 = vst [vmem:[%s373 + $0x1c] sm:%s365] %v388
                  %v390 = vld [vmem:[%s372 + $0x20] sm:%s365]
                  %391 = vst [vmem:[%s373 + $0x20] sm:%s365] %v390
                  %v392 = vld [vmem:[%s372 + $0x24] sm:%s365]
                  %393 = vst [vmem:[%s373 + $0x24] sm:%s365] %v392
                  %v394 = vld [vmem:[%s372 + $0x28] sm:%s365]
                  %395 = vst [vmem:[%s373 + $0x28] sm:%s365] %v394
                  %v396 = vld [vmem:[%s372 + $0x2c] sm:%s365]
                  %397 = vst [vmem:[%s373 + $0x2c] sm:%s365] %v396
                  %v398 = vld [vmem:[%s372 + $0x30] sm:%s365]
                  %399 = vst [vmem:[%s373 + $0x30] sm:%s365] %v398
                  %v400 = vld [vmem:[%s372 + $0x34] sm:%s365]
                  %401 = vst [vmem:[%s373 + $0x34] sm:%s365] %v400
                  %v402 = vld [vmem:[%s372 + $0x38] sm:%s365]
                  %403 = vst [vmem:[%s373 + $0x38] sm:%s365] %v402
                  %v404 = vld [vmem:[%s372 + $0x3c] sm:%s365]
                  %405 = vst [vmem:[%s373 + $0x3c] sm:%s365] %v404
                  %v406 = vld [vmem:[%s372 + $0x40] sm:%s365]
                  %407 = vst [vmem:[%s373 + $0x40] sm:%s365] %v406
                  %v408 = vld [vmem:[%s372 + $0x44] sm:%s365]
                  %409 = vst [vmem:[%s373 + $0x44] sm:%s365] %v408
                  %v410 = vld [vmem:[%s372 + $0x48] sm:%s365]
                  %411 = vst [vmem:[%s373 + $0x48] sm:%s365] %v410
                  %v412 = vld [vmem:[%s372 + $0x4c] sm:%s365]
                  %413 = vst [vmem:[%s373 + $0x4c] sm:%s365] %v412
                  %v414 = vld [vmem:[%s372 + $0x50] sm:%s365]
                  %415 = vst [vmem:[%s373 + $0x50] sm:%s365] %v414
                  %v416 = vld [vmem:[%s372 + $0x54] sm:%s365]
                  %417 = vst [vmem:[%s373 + $0x54] sm:%s365] %v416
                  %v418 = vld [vmem:[%s372 + $0x58] sm:%s365]
                  %419 = vst [vmem:[%s373 + $0x58] sm:%s365] %v418
                  %v420 = vld [vmem:[%s372 + $0x5c] sm:%s365]
                  %421 = vst [vmem:[%s373 + $0x5c] sm:%s365] %v420
                  %v422 = vld [vmem:[%s372 + $0x60] sm:%s365]
                  %423 = vst [vmem:[%s373 + $0x60] sm:%s365] %v422
                  %v424 = vld [vmem:[%s372 + $0xc8] sm:%s365]
                  %425 = vst [vmem:[%s373 + $0x64] sm:%s365] %v424
                  %v426 = vld [vmem:[%s372 + $0xcc] sm:%s365]
                  %427 = vst [vmem:[%s373 + $0x68] sm:%s365] %v426
                  %v428 = vld [vmem:[%s372 + $0xd0] sm:%s365]
                  %429 = vst [vmem:[%s373 + $0x6c] sm:%s365] %v428
                  %v430 = vld [vmem:[%s372 + $0xd4] sm:%s365]
                  %431 = vst [vmem:[%s373 + $0x70] sm:%s365] %v430
                  %v432 = vld [vmem:[%s372 + $0xd8] sm:%s365]
                  %433 = vst [vmem:[%s373 + $0x74] sm:%s365] %v432
                  %v434 = vld [vmem:[%s372 + $0xdc] sm:%s365]
                  %435 = vst [vmem:[%s373 + $0x78] sm:%s365] %v434
                  %v436 = vld [vmem:[%s372 + $0xe0] sm:%s365]
                  %437 = vst [vmem:[%s373 + $0x7c] sm:%s365] %v436
                  %v438 = vld [vmem:[%s372 + $0xe4] sm:%s365]
                  %439 = vst [vmem:[%s373 + $0x80] sm:%s365] %v438
                  %v440 = vld [vmem:[%s372 + $0xe8] sm:%s365]
                  %441 = vst [vmem:[%s373 + $0x84] sm:%s365] %v440
                  %v442 = vld [vmem:[%s372 + $0xec] sm:%s365]
                  %443 = vst [vmem:[%s373 + $0x88] sm:%s365] %v442
                  %v444 = vld [vmem:[%s372 + $0xf0] sm:%s365]
                  %445 = vst [vmem:[%s373 + $0x8c] sm:%s365] %v444
                  %v446 = vld [vmem:[%s372 + $0xf4] sm:%s365]
                  %447 = vst [vmem:[%s373 + $0x90] sm:%s365] %v446
                  %v448 = vld [vmem:[%s372 + $0xf8] sm:%s365]
                  %449 = vst [vmem:[%s373 + $0x94] sm:%s365] %v448
                  %v450 = vld [vmem:[%s372 + $0xfc] sm:%s365]
                  %451 = vst [vmem:[%s373 + $0x98] sm:%s365] %v450
                  %v452 = vld [vmem:[%s372 + $0x100] sm:%s365]
                  %453 = vst [vmem:[%s373 + $0x9c] sm:%s365] %v452
                  %v454 = vld [vmem:[%s372 + $0x104] sm:%s365]
                  %455 = vst [vmem:[%s373 + $0xa0] sm:%s365] %v454
                  %v456 = vld [vmem:[%s372 + $0x108] sm:%s365]
                  %457 = vst [vmem:[%s373 + $0xa4] sm:%s365] %v456
                  %v458 = vld [vmem:[%s372 + $0x10c] sm:%s365]
                  %459 = vst [vmem:[%s373 + $0xa8] sm:%s365] %v458
                  %v460 = vld [vmem:[%s372 + $0x110] sm:%s365]
                  %461 = vst [vmem:[%s373 + $0xac] sm:%s365] %v460
                  %v462 = vld [vmem:[%s372 + $0x114] sm:%s365]
                  %463 = vst [vmem:[%s373 + $0xb0] sm:%s365] %v462
                  %v464 = vld [vmem:[%s372 + $0x118] sm:%s365]
                  %465 = vst [vmem:[%s373 + $0xb4] sm:%s365] %v464
                  %v466 = vld [vmem:[%s372 + $0x11c] sm:%s365]
                  %467 = vst [vmem:[%s373 + $0xb8] sm:%s365] %v466
                  %v468 = vld [vmem:[%s372 + $0x120] sm:%s365]
                  %469 = vst [vmem:[%s373 + $0xbc] sm:%s365] %v468
                  %v470 = vld [vmem:[%s372 + $0x124] sm:%s365]
                  %471 = vst [vmem:[%s373 + $0xc0] sm:%s365] %v470
                  %v472 = vld [vmem:[%s372 + $0x128] sm:%s365]
                  %473 = vst [vmem:[%s373 + $0xc4] sm:%s365] %v472
                  %v474 = vld [vmem:[%s372 + $0x190] sm:%s365]
                  %475 = vst [vmem:[%s373 + $0xc8] sm:%s365] %v474
                  %v476 = vld [vmem:[%s372 + $0x194] sm:%s365]
                  %477 = vst [vmem:[%s373 + $0xcc] sm:%s365] %v476
                  %v478 = vld [vmem:[%s372 + $0x198] sm:%s365]
                  %479 = vst [vmem:[%s373 + $0xd0] sm:%s365] %v478
                  %v480 = vld [vmem:[%s372 + $0x19c] sm:%s365]
                  %481 = vst [vmem:[%s373 + $0xd4] sm:%s365] %v480
                  %v482 = vld [vmem:[%s372 + $0x1a0] sm:%s365]
                  %483 = vst [vmem:[%s373 + $0xd8] sm:%s365] %v482
                  %v484 = vld [vmem:[%s372 + $0x1a4] sm:%s365]
                  %485 = vst [vmem:[%s373 + $0xdc] sm:%s365] %v484
                  %v486 = vld [vmem:[%s372 + $0x1a8] sm:%s365]
                  %487 = vst [vmem:[%s373 + $0xe0] sm:%s365] %v486
                  %v488 = vld [vmem:[%s372 + $0x1ac] sm:%s365]
                  %489 = vst [vmem:[%s373 + $0xe4] sm:%s365] %v488
                  %v490 = vld [vmem:[%s372 + $0x1b0] sm:%s365]
                  %491 = vst [vmem:[%s373 + $0xe8] sm:%s365] %v490
                  %v492 = vld [vmem:[%s372 + $0x1b4] sm:%s365]
                  %493 = vst [vmem:[%s373 + $0xec] sm:%s365] %v492
                  %v494 = vld [vmem:[%s372 + $0x1b8] sm:%s365]
                  %495 = vst [vmem:[%s373 + $0xf0] sm:%s365] %v494
                  %v496 = vld [vmem:[%s372 + $0x1bc] sm:%s365]
                  %497 = vst [vmem:[%s373 + $0xf4] sm:%s365] %v496
                  %v498 = vld [vmem:[%s372 + $0x1c0] sm:%s365]
                  %499 = vst [vmem:[%s373 + $0xf8] sm:%s365] %v498
                  %v500 = vld [vmem:[%s372 + $0x1c4] sm:%s365]
                  %501 = vst [vmem:[%s373 + $0xfc] sm:%s365] %v500
                  %v502 = vld [vmem:[%s372 + $0x1c8] sm:%s365]
                  %503 = vst [vmem:[%s373 + $0x100] sm:%s365] %v502
                  %v504 = vld [vmem:[%s372 + $0x1cc] sm:%s365]
                  %505 = vst [vmem:[%s373 + $0x104] sm:%s365] %v504
                  %v506 = vld [vmem:[%s372 + $0x1d0] sm:%s365]
                  %507 = vst [vmem:[%s373 + $0x108] sm:%s365] %v506
                  %v508 = vld [vmem:[%s372 + $0x1d4] sm:%s365]
                  %509 = vst [vmem:[%s373 + $0x10c] sm:%s365] %v508
                  %v510 = vld [vmem:[%s372 + $0x1d8] sm:%s365]
                  %511 = vst [vmem:[%s373 + $0x110] sm:%s365] %v510
                  %v512 = vld [vmem:[%s372 + $0x1dc] sm:%s365]
                  %513 = vst [vmem:[%s373 + $0x114] sm:%s365] %v512
                  %v514 = vld [vmem:[%s372 + $0x1e0] sm:%s365]
                  %515 = vst [vmem:[%s373 + $0x118] sm:%s365] %v514
                  %v516 = vld [vmem:[%s372 + $0x1e4] sm:%s365]
                  %517 = vst [vmem:[%s373 + $0x11c] sm:%s365] %v516
                  %v518 = vld [vmem:[%s372 + $0x1e8] sm:%s365]
                  %519 = vst [vmem:[%s373 + $0x120] sm:%s365] %v518
                  %v520 = vld [vmem:[%s372 + $0x1ec] sm:%s365]
                  %521 = vst [vmem:[%s373 + $0x124] sm:%s365] %v520
                  %v522 = vld [vmem:[%s372 + $0x1f0] sm:%s365]
                  %523 = vst [vmem:[%s373 + $0x128] sm:%s365] %v522
                  %v524 = vld [vmem:[%s372 + $0x258] sm:%s365]
                  %525 = vst [vmem:[%s373 + $0x12c] sm:%s365] %v524
                  %v526 = vld [vmem:[%s372 + $0x25c] sm:%s365]
                  %527 = vst [vmem:[%s373 + $0x130] sm:%s365] %v526
                  %v528 = vld [vmem:[%s372 + $0x260] sm:%s365]
                  %529 = vst [vmem:[%s373 + $0x134] sm:%s365] %v528
                  %v530 = vld [vmem:[%s372 + $0x264] sm:%s365]
                  %531 = vst [vmem:[%s373 + $0x138] sm:%s365] %v530
                  %v532 = vld [vmem:[%s372 + $0x268] sm:%s365]
                  %533 = vst [vmem:[%s373 + $0x13c] sm:%s365] %v532
                  %v534 = vld [vmem:[%s372 + $0x26c] sm:%s365]
                  %535 = vst [vmem:[%s373 + $0x140] sm:%s365] %v534
                  %v536 = vld [vmem:[%s372 + $0x270] sm:%s365]
                  %537 = vst [vmem:[%s373 + $0x144] sm:%s365] %v536
                  %v538 = vld [vmem:[%s372 + $0x274] sm:%s365]
                  %539 = vst [vmem:[%s373 + $0x148] sm:%s365] %v538
                  %v540 = vld [vmem:[%s372 + $0x278] sm:%s365]
                  %541 = vst [vmem:[%s373 + $0x14c] sm:%s365] %v540
                  %v542 = vld [vmem:[%s372 + $0x27c] sm:%s365]
                  %543 = vst [vmem:[%s373 + $0x150] sm:%s365] %v542
                  %v544 = vld [vmem:[%s372 + $0x280] sm:%s365]
                  %545 = vst [vmem:[%s373 + $0x154] sm:%s365] %v544
                  %v546 = vld [vmem:[%s372 + $0x284] sm:%s365]
                  %547 = vst [vmem:[%s373 + $0x158] sm:%s365] %v546
                  %v548 = vld [vmem:[%s372 + $0x288] sm:%s365]
                  %549 = vst [vmem:[%s373 + $0x15c] sm:%s365] %v548
                  %v550 = vld [vmem:[%s372 + $0x28c] sm:%s365]
                  %551 = vst [vmem:[%s373 + $0x160] sm:%s365] %v550
                  %v552 = vld [vmem:[%s372 + $0x290] sm:%s365]
                  %553 = vst [vmem:[%s373 + $0x164] sm:%s365] %v552
                  %v554 = vld [vmem:[%s372 + $0x294] sm:%s365]
                  %555 = vst [vmem:[%s373 + $0x168] sm:%s365] %v554
                  %v556 = vld [vmem:[%s372 + $0x298] sm:%s365]
                  %557 = vst [vmem:[%s373 + $0x16c] sm:%s365] %v556
                  %v558 = vld [vmem:[%s372 + $0x29c] sm:%s365]
                  %559 = vst [vmem:[%s373 + $0x170] sm:%s365] %v558
                  %v560 = vld [vmem:[%s372 + $0x2a0] sm:%s365]
                  %561 = vst [vmem:[%s373 + $0x174] sm:%s365] %v560
                  %v562 = vld [vmem:[%s372 + $0x2a4] sm:%s365]
                  %563 = vst [vmem:[%s373 + $0x178] sm:%s365] %v562
                  %v564 = vld [vmem:[%s372 + $0x2a8] sm:%s365]
                  %565 = vst [vmem:[%s373 + $0x17c] sm:%s365] %v564
                  %v566 = vld [vmem:[%s372 + $0x2ac] sm:%s365]
                  %567 = vst [vmem:[%s373 + $0x180] sm:%s365] %v566
                  %v568 = vld [vmem:[%s372 + $0x2b0] sm:%s365]
                  %569 = vst [vmem:[%s373 + $0x184] sm:%s365] %v568
                  %v570 = vld [vmem:[%s372 + $0x2b4] sm:%s365]
                  %571 = vst [vmem:[%s373 + $0x188] sm:%s365] %v570
                  %v572 = vld [vmem:[%s372 + $0x2b8] sm:%s365]
                  %573 = vst [vmem:[%s373 + $0x18c] sm:%s365] %v572
                $region63: #{lenet_forward.2} parent=50 // loop_footer
                  %s371 = sadd.s32 1, %s367
                $region64: #{lenet_forward.2} parent=50 // loop_footer_branch
                  %366 = sbr.rel target = $region60
                $region65: #{lenet_forward.2} parent=50 // loop_exit
                  _
              $region51: #{lenet_forward.2} parent=35 // pred_fallthru
                _
            $region36: #{lenet_forward.2} parent=31 // pred_fallthru
              _
            // Predicated region
            $region37: #{lenet_forward.2} parent=31 // pred_check
              _
            $region38: #{lenet_forward.2} parent=31 // pred_check_branch
              %143 = sbr.rel (0) target = $region40
            $region39: #{lenet_forward.2} parent=31 // pred_region
              %s145 = ssub.s32 16, 1
              loop: start=0, step=1, limit=1
              $region41: #{lenet_forward.2} parent=39 // loop_pre_header
                _
              $region42: #{lenet_forward.2} parent=39 // loop_header
                %s147 = sphi 0, %s151
                %p148 = scmp.ge.s32.totalorder %s147, 1
                %s152 = sphi %s137, %s137
                %s153 = sphi %s134, %s134
              $region43: #{lenet_forward.2} parent=39 // loop_header_branch
                %150 = sbr.rel (%p148) target = $region47
              $region44: #{lenet_forward.2} parent=39 // loop_body
                %v154 = vld [vmem:[%s152] sm:%s145]
                %155 = vst [vmem:[%s153] sm:%s145] %v154
                %v156 = vld [vmem:[%s152 + $0x4] sm:%s145]
                %157 = vst [vmem:[%s153 + $0x4] sm:%s145] %v156
                %v158 = vld [vmem:[%s152 + $0x8] sm:%s145]
                %159 = vst [vmem:[%s153 + $0x8] sm:%s145] %v158
                %v160 = vld [vmem:[%s152 + $0xc] sm:%s145]
                %161 = vst [vmem:[%s153 + $0xc] sm:%s145] %v160
                %v162 = vld [vmem:[%s152 + $0x10] sm:%s145]
                %163 = vst [vmem:[%s153 + $0x10] sm:%s145] %v162
                %v164 = vld [vmem:[%s152 + $0x14] sm:%s145]
                %165 = vst [vmem:[%s153 + $0x14] sm:%s145] %v164
                %v166 = vld [vmem:[%s152 + $0x18] sm:%s145]
                %167 = vst [vmem:[%s153 + $0x18] sm:%s145] %v166
                %v168 = vld [vmem:[%s152 + $0x1c] sm:%s145]
                %169 = vst [vmem:[%s153 + $0x1c] sm:%s145] %v168
                %v170 = vld [vmem:[%s152 + $0x20] sm:%s145]
                %171 = vst [vmem:[%s153 + $0x20] sm:%s145] %v170
                %v172 = vld [vmem:[%s152 + $0x24] sm:%s145]
                %173 = vst [vmem:[%s153 + $0x24] sm:%s145] %v172
                %v174 = vld [vmem:[%s152 + $0x28] sm:%s145]
                %175 = vst [vmem:[%s153 + $0x28] sm:%s145] %v174
                %v176 = vld [vmem:[%s152 + $0x2c] sm:%s145]
                %177 = vst [vmem:[%s153 + $0x2c] sm:%s145] %v176
                %v178 = vld [vmem:[%s152 + $0x30] sm:%s145]
                %179 = vst [vmem:[%s153 + $0x30] sm:%s145] %v178
                %v180 = vld [vmem:[%s152 + $0x34] sm:%s145]
                %181 = vst [vmem:[%s153 + $0x34] sm:%s145] %v180
                %v182 = vld [vmem:[%s152 + $0x38] sm:%s145]
                %183 = vst [vmem:[%s153 + $0x38] sm:%s145] %v182
                %v184 = vld [vmem:[%s152 + $0x3c] sm:%s145]
                %185 = vst [vmem:[%s153 + $0x3c] sm:%s145] %v184
                %v186 = vld [vmem:[%s152 + $0x40] sm:%s145]
                %187 = vst [vmem:[%s153 + $0x40] sm:%s145] %v186
                %v188 = vld [vmem:[%s152 + $0x44] sm:%s145]
                %189 = vst [vmem:[%s153 + $0x44] sm:%s145] %v188
                %v190 = vld [vmem:[%s152 + $0x48] sm:%s145]
                %191 = vst [vmem:[%s153 + $0x48] sm:%s145] %v190
                %v192 = vld [vmem:[%s152 + $0x4c] sm:%s145]
                %193 = vst [vmem:[%s153 + $0x4c] sm:%s145] %v192
                %v194 = vld [vmem:[%s152 + $0x50] sm:%s145]
                %195 = vst [vmem:[%s153 + $0x50] sm:%s145] %v194
                %v196 = vld [vmem:[%s152 + $0x54] sm:%s145]
                %197 = vst [vmem:[%s153 + $0x54] sm:%s145] %v196
                %v198 = vld [vmem:[%s152 + $0x58] sm:%s145]
                %199 = vst [vmem:[%s153 + $0x58] sm:%s145] %v198
                %v200 = vld [vmem:[%s152 + $0x5c] sm:%s145]
                %201 = vst [vmem:[%s153 + $0x5c] sm:%s145] %v200
                %v202 = vld [vmem:[%s152 + $0x60] sm:%s145]
                %203 = vst [vmem:[%s153 + $0x60] sm:%s145] %v202
                %v204 = vld [vmem:[%s152 + $0xc8] sm:%s145]
                %205 = vst [vmem:[%s153 + $0x64] sm:%s145] %v204
                %v206 = vld [vmem:[%s152 + $0xcc] sm:%s145]
                %207 = vst [vmem:[%s153 + $0x68] sm:%s145] %v206
                %v208 = vld [vmem:[%s152 + $0xd0] sm:%s145]
                %209 = vst [vmem:[%s153 + $0x6c] sm:%s145] %v208
                %v210 = vld [vmem:[%s152 + $0xd4] sm:%s145]
                %211 = vst [vmem:[%s153 + $0x70] sm:%s145] %v210
                %v212 = vld [vmem:[%s152 + $0xd8] sm:%s145]
                %213 = vst [vmem:[%s153 + $0x74] sm:%s145] %v212
                %v214 = vld [vmem:[%s152 + $0xdc] sm:%s145]
                %215 = vst [vmem:[%s153 + $0x78] sm:%s145] %v214
                %v216 = vld [vmem:[%s152 + $0xe0] sm:%s145]
                %217 = vst [vmem:[%s153 + $0x7c] sm:%s145] %v216
                %v218 = vld [vmem:[%s152 + $0xe4] sm:%s145]
                %219 = vst [vmem:[%s153 + $0x80] sm:%s145] %v218
                %v220 = vld [vmem:[%s152 + $0xe8] sm:%s145]
                %221 = vst [vmem:[%s153 + $0x84] sm:%s145] %v220
                %v222 = vld [vmem:[%s152 + $0xec] sm:%s145]
                %223 = vst [vmem:[%s153 + $0x88] sm:%s145] %v222
                %v224 = vld [vmem:[%s152 + $0xf0] sm:%s145]
                %225 = vst [vmem:[%s153 + $0x8c] sm:%s145] %v224
                %v226 = vld [vmem:[%s152 + $0xf4] sm:%s145]
                %227 = vst [vmem:[%s153 + $0x90] sm:%s145] %v226
                %v228 = vld [vmem:[%s152 + $0xf8] sm:%s145]
                %229 = vst [vmem:[%s153 + $0x94] sm:%s145] %v228
                %v230 = vld [vmem:[%s152 + $0xfc] sm:%s145]
                %231 = vst [vmem:[%s153 + $0x98] sm:%s145] %v230
                %v232 = vld [vmem:[%s152 + $0x100] sm:%s145]
                %233 = vst [vmem:[%s153 + $0x9c] sm:%s145] %v232
                %v234 = vld [vmem:[%s152 + $0x104] sm:%s145]
                %235 = vst [vmem:[%s153 + $0xa0] sm:%s145] %v234
                %v236 = vld [vmem:[%s152 + $0x108] sm:%s145]
                %237 = vst [vmem:[%s153 + $0xa4] sm:%s145] %v236
                %v238 = vld [vmem:[%s152 + $0x10c] sm:%s145]
                %239 = vst [vmem:[%s153 + $0xa8] sm:%s145] %v238
                %v240 = vld [vmem:[%s152 + $0x110] sm:%s145]
                %241 = vst [vmem:[%s153 + $0xac] sm:%s145] %v240
                %v242 = vld [vmem:[%s152 + $0x114] sm:%s145]
                %243 = vst [vmem:[%s153 + $0xb0] sm:%s145] %v242
                %v244 = vld [vmem:[%s152 + $0x118] sm:%s145]
                %245 = vst [vmem:[%s153 + $0xb4] sm:%s145] %v244
                %v246 = vld [vmem:[%s152 + $0x11c] sm:%s145]
                %247 = vst [vmem:[%s153 + $0xb8] sm:%s145] %v246
                %v248 = vld [vmem:[%s152 + $0x120] sm:%s145]
                %249 = vst [vmem:[%s153 + $0xbc] sm:%s145] %v248
                %v250 = vld [vmem:[%s152 + $0x124] sm:%s145]
                %251 = vst [vmem:[%s153 + $0xc0] sm:%s145] %v250
                %v252 = vld [vmem:[%s152 + $0x128] sm:%s145]
                %253 = vst [vmem:[%s153 + $0xc4] sm:%s145] %v252
                %v254 = vld [vmem:[%s152 + $0x190] sm:%s145]
                %255 = vst [vmem:[%s153 + $0xc8] sm:%s145] %v254
                %v256 = vld [vmem:[%s152 + $0x194] sm:%s145]
                %257 = vst [vmem:[%s153 + $0xcc] sm:%s145] %v256
                %v258 = vld [vmem:[%s152 + $0x198] sm:%s145]
                %259 = vst [vmem:[%s153 + $0xd0] sm:%s145] %v258
                %v260 = vld [vmem:[%s152 + $0x19c] sm:%s145]
                %261 = vst [vmem:[%s153 + $0xd4] sm:%s145] %v260
                %v262 = vld [vmem:[%s152 + $0x1a0] sm:%s145]
                %263 = vst [vmem:[%s153 + $0xd8] sm:%s145] %v262
                %v264 = vld [vmem:[%s152 + $0x1a4] sm:%s145]
                %265 = vst [vmem:[%s153 + $0xdc] sm:%s145] %v264
                %v266 = vld [vmem:[%s152 + $0x1a8] sm:%s145]
                %267 = vst [vmem:[%s153 + $0xe0] sm:%s145] %v266
                %v268 = vld [vmem:[%s152 + $0x1ac] sm:%s145]
                %269 = vst [vmem:[%s153 + $0xe4] sm:%s145] %v268
                %v270 = vld [vmem:[%s152 + $0x1b0] sm:%s145]
                %271 = vst [vmem:[%s153 + $0xe8] sm:%s145] %v270
                %v272 = vld [vmem:[%s152 + $0x1b4] sm:%s145]
                %273 = vst [vmem:[%s153 + $0xec] sm:%s145] %v272
                %v274 = vld [vmem:[%s152 + $0x1b8] sm:%s145]
                %275 = vst [vmem:[%s153 + $0xf0] sm:%s145] %v274
                %v276 = vld [vmem:[%s152 + $0x1bc] sm:%s145]
                %277 = vst [vmem:[%s153 + $0xf4] sm:%s145] %v276
                %v278 = vld [vmem:[%s152 + $0x1c0] sm:%s145]
                %279 = vst [vmem:[%s153 + $0xf8] sm:%s145] %v278
                %v280 = vld [vmem:[%s152 + $0x1c4] sm:%s145]
                %281 = vst [vmem:[%s153 + $0xfc] sm:%s145] %v280
                %v282 = vld [vmem:[%s152 + $0x1c8] sm:%s145]
                %283 = vst [vmem:[%s153 + $0x100] sm:%s145] %v282
                %v284 = vld [vmem:[%s152 + $0x1cc] sm:%s145]
                %285 = vst [vmem:[%s153 + $0x104] sm:%s145] %v284
                %v286 = vld [vmem:[%s152 + $0x1d0] sm:%s145]
                %287 = vst [vmem:[%s153 + $0x108] sm:%s145] %v286
                %v288 = vld [vmem:[%s152 + $0x1d4] sm:%s145]
                %289 = vst [vmem:[%s153 + $0x10c] sm:%s145] %v288
                %v290 = vld [vmem:[%s152 + $0x1d8] sm:%s145]
                %291 = vst [vmem:[%s153 + $0x110] sm:%s145] %v290
                %v292 = vld [vmem:[%s152 + $0x1dc] sm:%s145]
                %293 = vst [vmem:[%s153 + $0x114] sm:%s145] %v292
                %v294 = vld [vmem:[%s152 + $0x1e0] sm:%s145]
                %295 = vst [vmem:[%s153 + $0x118] sm:%s145] %v294
                %v296 = vld [vmem:[%s152 + $0x1e4] sm:%s145]
                %297 = vst [vmem:[%s153 + $0x11c] sm:%s145] %v296
                %v298 = vld [vmem:[%s152 + $0x1e8] sm:%s145]
                %299 = vst [vmem:[%s153 + $0x120] sm:%s145] %v298
                %v300 = vld [vmem:[%s152 + $0x1ec] sm:%s145]
                %301 = vst [vmem:[%s153 + $0x124] sm:%s145] %v300
                %v302 = vld [vmem:[%s152 + $0x1f0] sm:%s145]
                %303 = vst [vmem:[%s153 + $0x128] sm:%s145] %v302
                %v304 = vld [vmem:[%s152 + $0x258] sm:%s145]
                %305 = vst [vmem:[%s153 + $0x12c] sm:%s145] %v304
                %v306 = vld [vmem:[%s152 + $0x25c] sm:%s145]
                %307 = vst [vmem:[%s153 + $0x130] sm:%s145] %v306
                %v308 = vld [vmem:[%s152 + $0x260] sm:%s145]
                %309 = vst [vmem:[%s153 + $0x134] sm:%s145] %v308
                %v310 = vld [vmem:[%s152 + $0x264] sm:%s145]
                %311 = vst [vmem:[%s153 + $0x138] sm:%s145] %v310
                %v312 = vld [vmem:[%s152 + $0x268] sm:%s145]
                %313 = vst [vmem:[%s153 + $0x13c] sm:%s145] %v312
                %v314 = vld [vmem:[%s152 + $0x26c] sm:%s145]
                %315 = vst [vmem:[%s153 + $0x140] sm:%s145] %v314
                %v316 = vld [vmem:[%s152 + $0x270] sm:%s145]
                %317 = vst [vmem:[%s153 + $0x144] sm:%s145] %v316
                %v318 = vld [vmem:[%s152 + $0x274] sm:%s145]
                %319 = vst [vmem:[%s153 + $0x148] sm:%s145] %v318
                %v320 = vld [vmem:[%s152 + $0x278] sm:%s145]
                %321 = vst [vmem:[%s153 + $0x14c] sm:%s145] %v320
                %v322 = vld [vmem:[%s152 + $0x27c] sm:%s145]
                %323 = vst [vmem:[%s153 + $0x150] sm:%s145] %v322
                %v324 = vld [vmem:[%s152 + $0x280] sm:%s145]
                %325 = vst [vmem:[%s153 + $0x154] sm:%s145] %v324
                %v326 = vld [vmem:[%s152 + $0x284] sm:%s145]
                %327 = vst [vmem:[%s153 + $0x158] sm:%s145] %v326
                %v328 = vld [vmem:[%s152 + $0x288] sm:%s145]
                %329 = vst [vmem:[%s153 + $0x15c] sm:%s145] %v328
                %v330 = vld [vmem:[%s152 + $0x28c] sm:%s145]
                %331 = vst [vmem:[%s153 + $0x160] sm:%s145] %v330
                %v332 = vld [vmem:[%s152 + $0x290] sm:%s145]
                %333 = vst [vmem:[%s153 + $0x164] sm:%s145] %v332
                %v334 = vld [vmem:[%s152 + $0x294] sm:%s145]
                %335 = vst [vmem:[%s153 + $0x168] sm:%s145] %v334
                %v336 = vld [vmem:[%s152 + $0x298] sm:%s145]
                %337 = vst [vmem:[%s153 + $0x16c] sm:%s145] %v336
                %v338 = vld [vmem:[%s152 + $0x29c] sm:%s145]
                %339 = vst [vmem:[%s153 + $0x170] sm:%s145] %v338
                %v340 = vld [vmem:[%s152 + $0x2a0] sm:%s145]
                %341 = vst [vmem:[%s153 + $0x174] sm:%s145] %v340
                %v342 = vld [vmem:[%s152 + $0x2a4] sm:%s145]
                %343 = vst [vmem:[%s153 + $0x178] sm:%s145] %v342
                %v344 = vld [vmem:[%s152 + $0x2a8] sm:%s145]
                %345 = vst [vmem:[%s153 + $0x17c] sm:%s145] %v344
                %v346 = vld [vmem:[%s152 + $0x2ac] sm:%s145]
                %347 = vst [vmem:[%s153 + $0x180] sm:%s145] %v346
                %v348 = vld [vmem:[%s152 + $0x2b0] sm:%s145]
                %349 = vst [vmem:[%s153 + $0x184] sm:%s145] %v348
                %v350 = vld [vmem:[%s152 + $0x2b4] sm:%s145]
                %351 = vst [vmem:[%s153 + $0x188] sm:%s145] %v350
                %v352 = vld [vmem:[%s152 + $0x2b8] sm:%s145]
                %353 = vst [vmem:[%s153 + $0x18c] sm:%s145] %v352
              $region45: #{lenet_forward.2} parent=39 // loop_footer
                %s151 = sadd.s32 1, %s147
              $region46: #{lenet_forward.2} parent=39 // loop_footer_branch
                %146 = sbr.rel target = $region42
              $region47: #{lenet_forward.2} parent=39 // loop_exit
                _
            $region40: #{lenet_forward.2} parent=31 // pred_fallthru
              _
          $region32: #{lenet_forward.2} parent=27 // pred_fallthru
            _
          %574 = vnop
        $region28: #{lenet_forward.2} parent=23 // pred_fallthru
          _
      $region24: #{lenet_forward.2} parent=5 // pred_fallthru
        _
      %p575 = scmp.le.s32.totalorder 1, %s9
      %p576 = scmp.lt.s32.totalorder %s9, 3
      %p577 = pnand %p575, %p576
      %p578 = pneg %p577
      // Predicated region
      $region66: #{lenet_forward.2} parent=5 // pred_check
        _
      $region67: #{lenet_forward.2} parent=5 // pred_check_branch
        %580 = sbr.rel (%p577) target = $region69
      $region68: #{lenet_forward.2} parent=5 // pred_region
        %s581 = ssub.s32 %s9, 1
        %s582 = sand.u32 %s22, 1
        %s583 = sand.u32 %s22, 1
        %s584 = smul.addr %s583, 400
        %s585 = scalar_lea.vmem [#allocation2], %s584
        // Predicated region
        $region70: #{lenet_forward.2} parent=68 // pred_check
          %p586 = pneg %p35
        $region71: #{lenet_forward.2} parent=68 // pred_check_branch
          %588 = sbr.rel (%p586) target = $region73
        $region72: #{lenet_forward.2} parent=68 // pred_region
          _
        $region73: #{lenet_forward.2} parent=68 // pred_fallthru
          _
        %s589 = sand.u32 %s22, 1
        %s590 = sand.u32 %s22, 1
        %s591 = smul.addr %s590, 400
        %s592 = scalar_lea.vmem [#allocation2], %s591
        %p593 = pneg %p35
        %p594 = pneg %p32
        %p595 = pneg %p56
        %p596 = pneg %p53
        %p597 = pneg %p77
        %p598 = pneg %p74
        %p599 = pneg %p103
        %p600 = pneg %p100
        %s601 = smul.u32 25, %s14
        %p602 = scmp.lt.s32.totalorder %s601, 49
        %s603 = scalar_select %p602, %s601, 49
        %s604 = smul.addr %s603, 4
        %s605 = scalar_lea.vmem %s3, %s604
        %s606 = smul.u32 25, %s14
        %s607 = smul.u32 25, %s14
        %p608 = scmp.lt.s32.totalorder %s607, 49
        %s609 = scalar_select %p608, %s607, 49
        %s610 = smul.addr %s609, 4
        %s611 = scalar_lea.vmem %s3, %s610
        %s612 = smul.u32 25, %s14
        %v613 = vld [vmem:[%s585] sm:$0xf]
        %v614 = vld [vmem:[%s585 + $0x4] sm:$0xf]
        %v615 = vld [vmem:[%s585 + $0x8] sm:$0xf]
        %v616 = vld [vmem:[%s585 + $0xc] sm:$0xf]
        %v617 = vld [vmem:[%s585 + $0x10] sm:$0xf]
        %v618 = vld [vmem:[%s585 + $0x14] sm:$0xf]
        %v619 = vld [vmem:[%s585 + $0x18] sm:$0xf]
        %v620 = vld [vmem:[%s585 + $0x1c] sm:$0xf]
        %v621 = vld [vmem:[%s585 + $0x20] sm:$0xf]
        %v622 = vld [vmem:[%s585 + $0x24] sm:$0xf]
        %v623 = vld [vmem:[%s585 + $0x28] sm:$0xf]
        %v624 = vld [vmem:[%s585 + $0x2c] sm:$0xf]
        %v625 = vld [vmem:[%s585 + $0x30] sm:$0xf]
        %v626 = vld [vmem:[%s585 + $0x34] sm:$0xf]
        %v627 = vld [vmem:[%s585 + $0x38] sm:$0xf]
        %v628 = vld [vmem:[%s585 + $0x3c] sm:$0xf]
        %v629 = vld [vmem:[%s585 + $0x40] sm:$0xf]
        %v630 = vld [vmem:[%s585 + $0x44] sm:$0xf]
        %v631 = vld [vmem:[%s585 + $0x48] sm:$0xf]
        %v632 = vld [vmem:[%s585 + $0x4c] sm:$0xf]
        %v633 = vld [vmem:[%s585 + $0x50] sm:$0xf]
        %v634 = vld [vmem:[%s585 + $0x54] sm:$0xf]
        %v635 = vld [vmem:[%s585 + $0x58] sm:$0xf]
        %v636 = vld [vmem:[%s585 + $0x5c] sm:$0xf]
        %v637 = vld [vmem:[%s585 + $0x60] sm:$0xf]
        %v638 = vld [vmem:[%s585 + $0x64] sm:$0xf]
        %v639 = vld [vmem:[%s585 + $0x68] sm:$0xf]
        %v640 = vld [vmem:[%s585 + $0x6c] sm:$0xf]
        %v641 = vld [vmem:[%s585 + $0x70] sm:$0xf]
        %v642 = vld [vmem:[%s585 + $0x74] sm:$0xf]
        %v643 = vld [vmem:[%s585 + $0x78] sm:$0xf]
        %v644 = vld [vmem:[%s585 + $0x7c] sm:$0xf]
        %v645 = vld [vmem:[%s585 + $0x80] sm:$0xf]
        %v646 = vld [vmem:[%s585 + $0x84] sm:$0xf]
        %v647 = vld [vmem:[%s585 + $0x88] sm:$0xf]
        %v648 = vld [vmem:[%s585 + $0x8c] sm:$0xf]
        %v649 = vld [vmem:[%s585 + $0x90] sm:$0xf]
        %v650 = vld [vmem:[%s585 + $0x94] sm:$0xf]
        %v651 = vld [vmem:[%s585 + $0x98] sm:$0xf]
        %v652 = vld [vmem:[%s585 + $0x9c] sm:$0xf]
        %v653 = vld [vmem:[%s585 + $0xa0] sm:$0xf]
        %v654 = vld [vmem:[%s585 + $0xa4] sm:$0xf]
        %v655 = vld [vmem:[%s585 + $0xa8] sm:$0xf]
        %v656 = vld [vmem:[%s585 + $0xac] sm:$0xf]
        %v657 = vld [vmem:[%s585 + $0xb0] sm:$0xf]
        %v658 = vld [vmem:[%s585 + $0xb4] sm:$0xf]
        %v659 = vld [vmem:[%s585 + $0xb8] sm:$0xf]
        %v660 = vld [vmem:[%s585 + $0xbc] sm:$0xf]
        %v661 = vld [vmem:[%s585 + $0xc0] sm:$0xf]
        %v662 = vld [vmem:[%s585 + $0xc4] sm:$0xf]
        %v663 = vld [vmem:[%s585 + $0xc8] sm:$0xf]
        %v664 = vld [vmem:[%s585 + $0xcc] sm:$0xf]
        %v665 = vld [vmem:[%s585 + $0xd0] sm:$0xf]
        %v666 = vld [vmem:[%s585 + $0xd4] sm:$0xf]
        %v667 = vld [vmem:[%s585 + $0xd8] sm:$0xf]
        %v668 = vld [vmem:[%s585 + $0xdc] sm:$0xf]
        %v669 = vld [vmem:[%s585 + $0xe0] sm:$0xf]
        %v670 = vld [vmem:[%s585 + $0xe4] sm:$0xf]
        %v671 = vld [vmem:[%s585 + $0xe8] sm:$0xf]
        %v672 = vld [vmem:[%s585 + $0xec] sm:$0xf]
        %v673 = vld [vmem:[%s585 + $0xf0] sm:$0xf]
        %v674 = vld [vmem:[%s585 + $0xf4] sm:$0xf]
        %v675 = vld [vmem:[%s585 + $0xf8] sm:$0xf]
        %v676 = vld [vmem:[%s585 + $0xfc] sm:$0xf]
        %v677 = vld [vmem:[%s585 + $0x100] sm:$0xf]
        %v678 = vld [vmem:[%s585 + $0x104] sm:$0xf]
        %v679 = vld [vmem:[%s585 + $0x108] sm:$0xf]
        %v680 = vld [vmem:[%s585 + $0x10c] sm:$0xf]
        %v681 = vld [vmem:[%s585 + $0x110] sm:$0xf]
        %v682 = vld [vmem:[%s585 + $0x114] sm:$0xf]
        %v683 = vld [vmem:[%s585 + $0x118] sm:$0xf]
        %v684 = vld [vmem:[%s585 + $0x11c] sm:$0xf]
        %v685 = vld [vmem:[%s585 + $0x120] sm:$0xf]
        %v686 = vld [vmem:[%s585 + $0x124] sm:$0xf]
        %v687 = vld [vmem:[%s585 + $0x128] sm:$0xf]
        %v688 = vld [vmem:[%s585 + $0x12c] sm:$0xf]
        %v689 = vld [vmem:[%s585 + $0x130] sm:$0xf]
        %v690 = vld [vmem:[%s585 + $0x134] sm:$0xf]
        %v691 = vld [vmem:[%s585 + $0x138] sm:$0xf]
        %v692 = vld [vmem:[%s585 + $0x13c] sm:$0xf]
        %v693 = vld [vmem:[%s585 + $0x140] sm:$0xf]
        %v694 = vld [vmem:[%s585 + $0x144] sm:$0xf]
        %v695 = vld [vmem:[%s585 + $0x148] sm:$0xf]
        %v696 = vld [vmem:[%s585 + $0x14c] sm:$0xf]
        %v697 = vld [vmem:[%s585 + $0x150] sm:$0xf]
        %v698 = vld [vmem:[%s585 + $0x154] sm:$0xf]
        %v699 = vld [vmem:[%s585 + $0x158] sm:$0xf]
        %v700 = vld [vmem:[%s585 + $0x15c] sm:$0xf]
        %v701 = vld [vmem:[%s585 + $0x160] sm:$0xf]
        %v702 = vld [vmem:[%s585 + $0x164] sm:$0xf]
        %v703 = vld [vmem:[%s585 + $0x168] sm:$0xf]
        %v704 = vld [vmem:[%s585 + $0x16c] sm:$0xf]
        %v705 = vld [vmem:[%s585 + $0x170] sm:$0xf]
        %v706 = vld [vmem:[%s585 + $0x174] sm:$0xf]
        %v707 = vld [vmem:[%s585 + $0x178] sm:$0xf]
        %v708 = vld [vmem:[%s585 + $0x17c] sm:$0xf]
        %v709 = vld [vmem:[%s585 + $0x180] sm:$0xf]
        %v710 = vld [vmem:[%s585 + $0x184] sm:$0xf]
        %v711 = vld [vmem:[%s585 + $0x188] sm:$0xf]
        %v712 = vld [vmem:[%s585 + $0x18c] sm:$0xf]
        %v713 = vld [vmem:[%s1] sm:$0xf]
        %v714 = vld [vmem:[%s1 + $0x4] sm:$0xf]
        %v715 = vld [vmem:[%s1 + $0x8] sm:$0xf]
        %v716 = vld [vmem:[%s1 + $0xc] sm:$0xf]
        %v717 = vld [vmem:[%s1 + $0x10] sm:$0xf]
        %v718 = vld [vmem:[%s1 + $0x14] sm:$0xf]
        %v719 = vld [vmem:[%s1 + $0x18] sm:$0xf]
        %v720 = vld [vmem:[%s1 + $0x1c] sm:$0xf]
        %v721 = vld [vmem:[%s1 + $0x20] sm:$0xf]
        %v722 = vld [vmem:[%s1 + $0x24] sm:$0xf]
        %v723 = vld [vmem:[%s1 + $0x28] sm:$0xf]
        %v724 = vld [vmem:[%s1 + $0x2c] sm:$0xf]
        %v725 = vld [vmem:[%s1 + $0x30] sm:$0xf]
        %v726 = vld [vmem:[%s1 + $0x34] sm:$0xf]
        %v727 = vld [vmem:[%s1 + $0x38] sm:$0xf]
        %v728 = vld [vmem:[%s1 + $0x3c] sm:$0xf]
        %v829 = vunpack.c.l.b16 %v613
        %v830 = vunpack.c.l.b16 %v614
        %v831 = vunpack.c.l.b16 %v615
        %v832 = vunpack.c.l.b16 %v616
        %v833 = vunpack.c.l.b16 %v617
        %v834 = vunpack.c.l.b16 %v618
        %v835 = vunpack.c.l.b16 %v619
        %v836 = vunpack.c.l.b16 %v620
        %v837 = vunpack.c.l.b16 %v621
        %v838 = vunpack.c.l.b16 %v622
        %v839 = vunpack.c.l.b16 %v623
        %v840 = vunpack.c.l.b16 %v624
        %v841 = vunpack.c.l.b16 %v625
        %v842 = vunpack.c.l.b16 %v626
        %v843 = vunpack.c.l.b16 %v627
        %v844 = vunpack.c.l.b16 %v628
        %v845 = vunpack.c.l.b16 %v629
        %v846 = vunpack.c.l.b16 %v630
        %v847 = vunpack.c.l.b16 %v631
        %v848 = vunpack.c.l.b16 %v632
        %v849 = vunpack.c.l.b16 %v633
        %v850 = vunpack.c.l.b16 %v634
        %v851 = vunpack.c.l.b16 %v635
        %v852 = vunpack.c.l.b16 %v636
        %v853 = vunpack.c.l.b16 %v637
        %v854 = vunpack.c.l.b16 %v638
        %v855 = vunpack.c.l.b16 %v639
        %v856 = vunpack.c.l.b16 %v640
        %v857 = vunpack.c.l.b16 %v641
        %v858 = vunpack.c.l.b16 %v642
        %v859 = vunpack.c.l.b16 %v643
        %v860 = vunpack.c.l.b16 %v644
        %v861 = vunpack.c.l.b16 %v645
        %v862 = vunpack.c.l.b16 %v646
        %v863 = vunpack.c.l.b16 %v647
        %v864 = vunpack.c.l.b16 %v648
        %v865 = vunpack.c.l.b16 %v649
        %v866 = vunpack.c.l.b16 %v650
        %v867 = vunpack.c.l.b16 %v651
        %v868 = vunpack.c.l.b16 %v652
        %v869 = vunpack.c.l.b16 %v653
        %v870 = vunpack.c.l.b16 %v654
        %v871 = vunpack.c.l.b16 %v655
        %v872 = vunpack.c.l.b16 %v656
        %v873 = vunpack.c.l.b16 %v657
        %v874 = vunpack.c.l.b16 %v658
        %v875 = vunpack.c.l.b16 %v659
        %v876 = vunpack.c.l.b16 %v660
        %v877 = vunpack.c.l.b16 %v661
        %v878 = vunpack.c.l.b16 %v662
        %v879 = vunpack.c.l.b16 %v663
        %v880 = vunpack.c.l.b16 %v664
        %v881 = vunpack.c.l.b16 %v665
        %v882 = vunpack.c.l.b16 %v666
        %v883 = vunpack.c.l.b16 %v667
        %v884 = vunpack.c.l.b16 %v668
        %v885 = vunpack.c.l.b16 %v669
        %v886 = vunpack.c.l.b16 %v670
        %v887 = vunpack.c.l.b16 %v671
        %v888 = vunpack.c.l.b16 %v672
        %v889 = vunpack.c.l.b16 %v673
        %v890 = vunpack.c.l.b16 %v674
        %v891 = vunpack.c.l.b16 %v675
        %v892 = vunpack.c.l.b16 %v676
        %v893 = vunpack.c.l.b16 %v677
        %v894 = vunpack.c.l.b16 %v678
        %v895 = vunpack.c.l.b16 %v679
        %v896 = vunpack.c.l.b16 %v680
        %v897 = vunpack.c.l.b16 %v681
        %v898 = vunpack.c.l.b16 %v682
        %v899 = vunpack.c.l.b16 %v683
        %v900 = vunpack.c.l.b16 %v684
        %v901 = vunpack.c.l.b16 %v685
        %v902 = vunpack.c.l.b16 %v686
        %v903 = vunpack.c.l.b16 %v687
        %v904 = vunpack.c.l.b16 %v688
        %v905 = vunpack.c.l.b16 %v689
        %v906 = vunpack.c.l.b16 %v690
        %v907 = vunpack.c.l.b16 %v691
        %v908 = vunpack.c.l.b16 %v692
        %v909 = vunpack.c.l.b16 %v693
        %v910 = vunpack.c.l.b16 %v694
        %v911 = vunpack.c.l.b16 %v695
        %v912 = vunpack.c.l.b16 %v696
        %v913 = vunpack.c.l.b16 %v697
        %v914 = vunpack.c.l.b16 %v698
        %v915 = vunpack.c.l.b16 %v699
        %v916 = vunpack.c.l.b16 %v700
        %v917 = vunpack.c.l.b16 %v701
        %v918 = vunpack.c.l.b16 %v702
        %v919 = vunpack.c.l.b16 %v703
        %v920 = vunpack.c.l.b16 %v704
        %v921 = vunpack.c.l.b16 %v705
        %v922 = vunpack.c.l.b16 %v706
        %v923 = vunpack.c.l.b16 %v707
        %v924 = vunpack.c.l.b16 %v708
        %v925 = vunpack.c.l.b16 %v709
        %v926 = vunpack.c.l.b16 %v710
        %v927 = vunpack.c.l.b16 %v711
        %v928 = vunpack.c.l.b16 %v712
        %v929 = vpack.c.b16 %v830, %v829
        %v930 = vpack.c.b16 %v832, %v831
        %v931 = vpack.c.b16 %v834, %v833
        %v932 = vpack.c.b16 %v836, %v835
        %v933 = vpack.c.b16 %v838, %v837
        %v934 = vpack.c.b16 %v840, %v839
        %v935 = vpack.c.b16 %v842, %v841
        %v936 = vpack.c.b16 %v844, %v843
        %v937 = vpack.c.b16 %v846, %v845
        %v938 = vpack.c.b16 %v848, %v847
        %v939 = vpack.c.b16 %v850, %v849
        %v940 = vpack.c.b16 %v852, %v851
        %v941 = vpack.c.b16 %v854, %v853
        %v942 = vpack.c.b16 %v856, %v855
        %v943 = vpack.c.b16 %v858, %v857
        %v944 = vpack.c.b16 %v860, %v859
        %v945 = vpack.c.b16 %v862, %v861
        %v946 = vpack.c.b16 %v864, %v863
        %v947 = vpack.c.b16 %v866, %v865
        %v948 = vpack.c.b16 %v868, %v867
        %v949 = vpack.c.b16 %v870, %v869
        %v950 = vpack.c.b16 %v872, %v871
        %v951 = vpack.c.b16 %v874, %v873
        %v952 = vpack.c.b16 %v876, %v875
        %v953 = vpack.c.b16 %v878, %v877
        %v954 = vpack.c.b16 %v880, %v879
        %v955 = vpack.c.b16 %v882, %v881
        %v956 = vpack.c.b16 %v884, %v883
        %v957 = vpack.c.b16 %v886, %v885
        %v958 = vpack.c.b16 %v888, %v887
        %v959 = vpack.c.b16 %v890, %v889
        %v960 = vpack.c.b16 %v892, %v891
        %v961 = vpack.c.b16 %v894, %v893
        %v962 = vpack.c.b16 %v896, %v895
        %v963 = vpack.c.b16 %v898, %v897
        %v964 = vpack.c.b16 %v900, %v899
        %v965 = vpack.c.b16 %v902, %v901
        %v966 = vpack.c.b16 %v904, %v903
        %v967 = vpack.c.b16 %v906, %v905
        %v968 = vpack.c.b16 %v908, %v907
        %v969 = vpack.c.b16 %v910, %v909
        %v970 = vpack.c.b16 %v912, %v911
        %v971 = vpack.c.b16 %v914, %v913
        %v972 = vpack.c.b16 %v916, %v915
        %v973 = vpack.c.b16 %v918, %v917
        %v974 = vpack.c.b16 %v920, %v919
        %v975 = vpack.c.b16 %v922, %v921
        %v976 = vpack.c.b16 %v924, %v923
        %v977 = vpack.c.b16 %v926, %v925
        %v978 = vpack.c.b16 %v928, %v927
        %v1045 = vunpack.c.l.b16 %v713
        %v1046 = vunpack.c.l.b16 %v714
        %v1047 = vunpack.c.l.b16 %v715
        %v1048 = vunpack.c.l.b16 %v716
        %v1049 = vunpack.c.l.b16 %v717
        %v1050 = vunpack.c.l.b16 %v718
        %v1051 = vunpack.c.l.b16 %v719
        %v1052 = vunpack.c.l.b16 %v720
        %v1053 = vunpack.c.l.b16 %v721
        %v1054 = vunpack.c.l.b16 %v722
        %v1055 = vunpack.c.l.b16 %v723
        %v1056 = vunpack.c.l.b16 %v724
        %v1057 = vunpack.c.l.b16 %v725
        %v1058 = vunpack.c.l.b16 %v726
        %v1059 = vunpack.c.l.b16 %v727
        %v1060 = vunpack.c.l.b16 %v728
        %v1061 = vpack.c.b16 %v1046, %v1045
        %v1062 = vpack.c.b16 %v1048, %v1047
        %v1063 = vpack.c.b16 %v1050, %v1049
        %v1064 = vpack.c.b16 %v1052, %v1051
        %v1065 = vpack.c.b16 %v1054, %v1053
        %v1066 = vpack.c.b16 %v1056, %v1055
        %v1067 = vpack.c.b16 %v1058, %v1057
        %v1068 = vpack.c.b16 %v1060, %v1059
        %1077 = vmatpush.bf16.msra.mxu0 %v1068
        %1078 = vmatpush.bf16.msra.mxu0 %v1067
        %1079 = vmatpush.bf16.msra.mxu0 %v1066
        %1080 = vmatpush.bf16.msra.mxu0 %v1065
        %1081 = vmatpush.bf16.msra.mxu0 %v1064
        %1082 = vmatpush.bf16.msra.mxu0 %v1063
        %1083 = vmatpush.bf16.msra.mxu0 %v1062
        %1084 = vmatpush.bf16.msra.mxu0 %v1061
        %1085 = vmatmul.bf16.gmra.mxu0 %v929
        %v1086 = vpop.f32.mrf.mxu0
        %v1087 = vadd.f32 0.0, %v1086
        %v1088 = vpop.f32.mrf.mxu0
        %v1089 = vadd.f32 0.0, %v1088
        %1090 = vmatmul.bf16.gmra.mxu0 %v930
        %v1091 = vpop.f32.mrf.mxu0
        %v1092 = vadd.f32 0.0, %v1091
        %v1093 = vpop.f32.mrf.mxu0
        %v1094 = vadd.f32 0.0, %v1093
        %1095 = vmatmul.bf16.gmra.mxu0 %v931
        %v1096 = vpop.f32.mrf.mxu0
        %v1097 = vadd.f32 0.0, %v1096
        %v1098 = vpop.f32.mrf.mxu0
        %v1099 = vadd.f32 0.0, %v1098
        %1100 = vmatmul.bf16.gmra.mxu0 %v932
        %v1101 = vpop.f32.mrf.mxu0
        %v1102 = vadd.f32 0.0, %v1101
        %v1103 = vpop.f32.mrf.mxu0
        %v1104 = vadd.f32 0.0, %v1103
        %1105 = vmatmul.bf16.gmra.mxu0 %v933
        %v1106 = vpop.f32.mrf.mxu0
        %v1107 = vadd.f32 0.0, %v1106
        %v1108 = vpop.f32.mrf.mxu0
        %v1109 = vadd.f32 0.0, %v1108
        %1110 = vmatmul.bf16.gmra.mxu0 %v934
        %v1111 = vpop.f32.mrf.mxu0
        %v1112 = vadd.f32 0.0, %v1111
        %v1113 = vpop.f32.mrf.mxu0
        %v1114 = vadd.f32 0.0, %v1113
        %1115 = vmatmul.bf16.gmra.mxu0 %v935
        %v1116 = vpop.f32.mrf.mxu0
        %v1117 = vadd.f32 0.0, %v1116
        %v1118 = vpop.f32.mrf.mxu0
        %v1119 = vadd.f32 0.0, %v1118
        %1120 = vmatmul.bf16.gmra.mxu0 %v936
        %v1121 = vpop.f32.mrf.mxu0
        %v1122 = vadd.f32 0.0, %v1121
        %v1123 = vpop.f32.mrf.mxu0
        %v1124 = vadd.f32 0.0, %v1123
        %1125 = vmatmul.bf16.gmra.mxu0 %v937
        %v1126 = vpop.f32.mrf.mxu0
        %v1127 = vadd.f32 0.0, %v1126
        %v1128 = vpop.f32.mrf.mxu0
        %v1129 = vadd.f32 0.0, %v1128
        %1130 = vmatmul.bf16.gmra.mxu0 %v938
        %v1131 = vpop.f32.mrf.mxu0
        %v1132 = vadd.f32 0.0, %v1131
        %v1133 = vpop.f32.mrf.mxu0
        %v1134 = vadd.f32 0.0, %v1133
        %1135 = vmatmul.bf16.gmra.mxu0 %v939
        %v1136 = vpop.f32.mrf.mxu0
        %v1137 = vadd.f32 0.0, %v1136
        %v1138 = vpop.f32.mrf.mxu0
        %v1139 = vadd.f32 0.0, %v1138
        %1140 = vmatmul.bf16.gmra.mxu0 %v940
        %v1141 = vpop.f32.mrf.mxu0
        %v1142 = vadd.f32 0.0, %v1141
        %v1143 = vpop.f32.mrf.mxu0
        %v1144 = vadd.f32 0.0, %v1143
        %1145 = vmatmul.bf16.gmra.mxu0 %v941
        %v1146 = vpop.f32.mrf.mxu0
        %v1147 = vadd.f32 0.0, %v1146
        %v1148 = vpop.f32.mrf.mxu0
        %v1149 = vadd.f32 0.0, %v1148
        %1150 = vmatmul.bf16.gmra.mxu0 %v942
        %v1151 = vpop.f32.mrf.mxu0
        %v1152 = vadd.f32 0.0, %v1151
        %v1153 = vpop.f32.mrf.mxu0
        %v1154 = vadd.f32 0.0, %v1153
        %1155 = vmatmul.bf16.gmra.mxu0 %v943
        %v1156 = vpop.f32.mrf.mxu0
        %v1157 = vadd.f32 0.0, %v1156
        %v1158 = vpop.f32.mrf.mxu0
        %v1159 = vadd.f32 0.0, %v1158
        %1160 = vmatmul.bf16.gmra.mxu0 %v944
        %v1161 = vpop.f32.mrf.mxu0
        %v1162 = vadd.f32 0.0, %v1161
        %v1163 = vpop.f32.mrf.mxu0
        %v1164 = vadd.f32 0.0, %v1163
        %1165 = vmatmul.bf16.gmra.mxu0 %v945
        %v1166 = vpop.f32.mrf.mxu0
        %v1167 = vadd.f32 0.0, %v1166
        %v1168 = vpop.f32.mrf.mxu0
        %v1169 = vadd.f32 0.0, %v1168
        %1170 = vmatmul.bf16.gmra.mxu0 %v946
        %v1171 = vpop.f32.mrf.mxu0
        %v1172 = vadd.f32 0.0, %v1171
        %v1173 = vpop.f32.mrf.mxu0
        %v1174 = vadd.f32 0.0, %v1173
        %1175 = vmatmul.bf16.gmra.mxu0 %v947
        %v1176 = vpop.f32.mrf.mxu0
        %v1177 = vadd.f32 0.0, %v1176
        %v1178 = vpop.f32.mrf.mxu0
        %v1179 = vadd.f32 0.0, %v1178
        %1180 = vmatmul.bf16.gmra.mxu0 %v948
        %v1181 = vpop.f32.mrf.mxu0
        %v1182 = vadd.f32 0.0, %v1181
        %v1183 = vpop.f32.mrf.mxu0
        %v1184 = vadd.f32 0.0, %v1183
        %1185 = vmatmul.bf16.gmra.mxu0 %v949
        %v1186 = vpop.f32.mrf.mxu0
        %v1187 = vadd.f32 0.0, %v1186
        %v1188 = vpop.f32.mrf.mxu0
        %v1189 = vadd.f32 0.0, %v1188
        %1190 = vmatmul.bf16.gmra.mxu0 %v950
        %v1191 = vpop.f32.mrf.mxu0
        %v1192 = vadd.f32 0.0, %v1191
        %v1193 = vpop.f32.mrf.mxu0
        %v1194 = vadd.f32 0.0, %v1193
        %1195 = vmatmul.bf16.gmra.mxu0 %v951
        %v1196 = vpop.f32.mrf.mxu0
        %v1197 = vadd.f32 0.0, %v1196
        %v1198 = vpop.f32.mrf.mxu0
        %v1199 = vadd.f32 0.0, %v1198
        %1200 = vmatmul.bf16.gmra.mxu0 %v952
        %v1201 = vpop.f32.mrf.mxu0
        %v1202 = vadd.f32 0.0, %v1201
        %v1203 = vpop.f32.mrf.mxu0
        %v1204 = vadd.f32 0.0, %v1203
        %1205 = vmatmul.bf16.gmra.mxu0 %v953
        %v1206 = vpop.f32.mrf.mxu0
        %v1207 = vadd.f32 0.0, %v1206
        %v1208 = vpop.f32.mrf.mxu0
        %v1209 = vadd.f32 0.0, %v1208
        %1210 = vmatmul.bf16.gmra.mxu0 %v954
        %v1211 = vpop.f32.mrf.mxu0
        %v1212 = vadd.f32 0.0, %v1211
        %v1213 = vpop.f32.mrf.mxu0
        %v1214 = vadd.f32 0.0, %v1213
        %1215 = vmatmul.bf16.gmra.mxu0 %v955
        %v1216 = vpop.f32.mrf.mxu0
        %v1217 = vadd.f32 0.0, %v1216
        %v1218 = vpop.f32.mrf.mxu0
        %v1219 = vadd.f32 0.0, %v1218
        %1220 = vmatmul.bf16.gmra.mxu0 %v956
        %v1221 = vpop.f32.mrf.mxu0
        %v1222 = vadd.f32 0.0, %v1221
        %v1223 = vpop.f32.mrf.mxu0
        %v1224 = vadd.f32 0.0, %v1223
        %1225 = vmatmul.bf16.gmra.mxu0 %v957
        %v1226 = vpop.f32.mrf.mxu0
        %v1227 = vadd.f32 0.0, %v1226
        %v1228 = vpop.f32.mrf.mxu0
        %v1229 = vadd.f32 0.0, %v1228
        %1230 = vmatmul.bf16.gmra.mxu0 %v958
        %v1231 = vpop.f32.mrf.mxu0
        %v1232 = vadd.f32 0.0, %v1231
        %v1233 = vpop.f32.mrf.mxu0
        %v1234 = vadd.f32 0.0, %v1233
        %1235 = vmatmul.bf16.gmra.mxu0 %v959
        %v1236 = vpop.f32.mrf.mxu0
        %v1237 = vadd.f32 0.0, %v1236
        %v1238 = vpop.f32.mrf.mxu0
        %v1239 = vadd.f32 0.0, %v1238
        %1240 = vmatmul.bf16.gmra.mxu0 %v960
        %v1241 = vpop.f32.mrf.mxu0
        %v1242 = vadd.f32 0.0, %v1241
        %v1243 = vpop.f32.mrf.mxu0
        %v1244 = vadd.f32 0.0, %v1243
        %1245 = vmatmul.bf16.gmra.mxu0 %v961
        %v1246 = vpop.f32.mrf.mxu0
        %v1247 = vadd.f32 0.0, %v1246
        %v1248 = vpop.f32.mrf.mxu0
        %v1249 = vadd.f32 0.0, %v1248
        %1250 = vmatmul.bf16.gmra.mxu0 %v962
        %v1251 = vpop.f32.mrf.mxu0
        %v1252 = vadd.f32 0.0, %v1251
        %v1253 = vpop.f32.mrf.mxu0
        %v1254 = vadd.f32 0.0, %v1253
        %1255 = vmatmul.bf16.gmra.mxu0 %v963
        %v1256 = vpop.f32.mrf.mxu0
        %v1257 = vadd.f32 0.0, %v1256
        %v1258 = vpop.f32.mrf.mxu0
        %v1259 = vadd.f32 0.0, %v1258
        %1260 = vmatmul.bf16.gmra.mxu0 %v964
        %v1261 = vpop.f32.mrf.mxu0
        %v1262 = vadd.f32 0.0, %v1261
        %v1263 = vpop.f32.mrf.mxu0
        %v1264 = vadd.f32 0.0, %v1263
        %1265 = vmatmul.bf16.gmra.mxu0 %v965
        %v1266 = vpop.f32.mrf.mxu0
        %v1267 = vadd.f32 0.0, %v1266
        %v1268 = vpop.f32.mrf.mxu0
        %v1269 = vadd.f32 0.0, %v1268
        %1270 = vmatmul.bf16.gmra.mxu0 %v966
        %v1271 = vpop.f32.mrf.mxu0
        %v1272 = vadd.f32 0.0, %v1271
        %v1273 = vpop.f32.mrf.mxu0
        %v1274 = vadd.f32 0.0, %v1273
        %1275 = vmatmul.bf16.gmra.mxu0 %v967
        %v1276 = vpop.f32.mrf.mxu0
        %v1277 = vadd.f32 0.0, %v1276
        %v1278 = vpop.f32.mrf.mxu0
        %v1279 = vadd.f32 0.0, %v1278
        %1280 = vmatmul.bf16.gmra.mxu0 %v968
        %v1281 = vpop.f32.mrf.mxu0
        %v1282 = vadd.f32 0.0, %v1281
        %v1283 = vpop.f32.mrf.mxu0
        %v1284 = vadd.f32 0.0, %v1283
        %1285 = vmatmul.bf16.gmra.mxu0 %v969
        %v1286 = vpop.f32.mrf.mxu0
        %v1287 = vadd.f32 0.0, %v1286
        %v1288 = vpop.f32.mrf.mxu0
        %v1289 = vadd.f32 0.0, %v1288
        %1290 = vmatmul.bf16.gmra.mxu0 %v970
        %v1291 = vpop.f32.mrf.mxu0
        %v1292 = vadd.f32 0.0, %v1291
        %v1293 = vpop.f32.mrf.mxu0
        %v1294 = vadd.f32 0.0, %v1293
        %1295 = vmatmul.bf16.gmra.mxu0 %v971
        %v1296 = vpop.f32.mrf.mxu0
        %v1297 = vadd.f32 0.0, %v1296
        %v1298 = vpop.f32.mrf.mxu0
        %v1299 = vadd.f32 0.0, %v1298
        %1300 = vmatmul.bf16.gmra.mxu0 %v972
        %v1301 = vpop.f32.mrf.mxu0
        %v1302 = vadd.f32 0.0, %v1301
        %v1303 = vpop.f32.mrf.mxu0
        %v1304 = vadd.f32 0.0, %v1303
        %1305 = vmatmul.bf16.gmra.mxu0 %v973
        %v1306 = vpop.f32.mrf.mxu0
        %v1307 = vadd.f32 0.0, %v1306
        %v1308 = vpop.f32.mrf.mxu0
        %v1309 = vadd.f32 0.0, %v1308
        %1310 = vmatmul.bf16.gmra.mxu0 %v974
        %v1311 = vpop.f32.mrf.mxu0
        %v1312 = vadd.f32 0.0, %v1311
        %v1313 = vpop.f32.mrf.mxu0
        %v1314 = vadd.f32 0.0, %v1313
        %1315 = vmatmul.bf16.gmra.mxu0 %v975
        %v1316 = vpop.f32.mrf.mxu0
        %v1317 = vadd.f32 0.0, %v1316
        %v1318 = vpop.f32.mrf.mxu0
        %v1319 = vadd.f32 0.0, %v1318
        %1320 = vmatmul.bf16.gmra.mxu0 %v976
        %v1321 = vpop.f32.mrf.mxu0
        %v1322 = vadd.f32 0.0, %v1321
        %v1323 = vpop.f32.mrf.mxu0
        %v1324 = vadd.f32 0.0, %v1323
        %1325 = vmatmul.bf16.gmra.mxu0 %v977
        %v1326 = vpop.f32.mrf.mxu0
        %v1327 = vadd.f32 0.0, %v1326
        %v1328 = vpop.f32.mrf.mxu0
        %v1329 = vadd.f32 0.0, %v1328
        %1330 = vmatmul.bf16.gmra.mxu0 %v978
        %v1331 = vpop.f32.mrf.mxu0
        %v1332 = vadd.f32 0.0, %v1331
        %v1333 = vpop.f32.mrf.mxu0
        %v1334 = vadd.f32 0.0, %v1333
        %1335 = vdwg.mxu0
        %v1336 = vmax.f32 %v1087, %v1149
        %v1337 = vmax.f32 %v1336, %v1212
        %v1338 = vmax.f32 %v1337, %v1274
        %v1339 = vmax.f32 %v1089, %v1152
        %v1340 = vmax.f32 %v1339, %v1214
        %v1341 = vmax.f32 %v1340, %v1277
        %v1342 = vmax.f32 %v1092, %v1154
        %v1343 = vmax.f32 %v1342, %v1217
        %v1344 = vmax.f32 %v1343, %v1279
        %v1345 = vmax.f32 %v1094, %v1157
        %v1346 = vmax.f32 %v1345, %v1219
        %v1347 = vmax.f32 %v1346, %v1282
        %v1348 = vmax.f32 %v1097, %v1159
        %v1349 = vmax.f32 %v1348, %v1222
        %v1350 = vmax.f32 %v1349, %v1284
        %v1351 = vmax.f32 %v1099, %v1162
        %v1352 = vmax.f32 %v1351, %v1224
        %v1353 = vmax.f32 %v1352, %v1287
        %v1354 = vmax.f32 %v1102, %v1164
        %v1355 = vmax.f32 %v1354, %v1227
        %v1356 = vmax.f32 %v1355, %v1289
        %v1357 = vmax.f32 %v1104, %v1167
        %v1358 = vmax.f32 %v1357, %v1229
        %v1359 = vmax.f32 %v1358, %v1292
        %v1360 = vmax.f32 %v1107, %v1169
        %v1361 = vmax.f32 %v1360, %v1232
        %v1362 = vmax.f32 %v1361, %v1294
        %v1363 = vmax.f32 %v1109, %v1172
        %v1364 = vmax.f32 %v1363, %v1234
        %v1365 = vmax.f32 %v1364, %v1297
        %v1366 = vmax.f32 %v1112, %v1174
        %v1367 = vmax.f32 %v1366, %v1237
        %v1368 = vmax.f32 %v1367, %v1299
        %v1369 = vmax.f32 %v1114, %v1177
        %v1370 = vmax.f32 %v1369, %v1239
        %v1371 = vmax.f32 %v1370, %v1302
        %v1372 = vmax.f32 %v1117, %v1179
        %v1373 = vmax.f32 %v1372, %v1242
        %v1374 = vmax.f32 %v1373, %v1304
        %v1375 = vmax.f32 %v1119, %v1182
        %v1376 = vmax.f32 %v1375, %v1244
        %v1377 = vmax.f32 %v1376, %v1307
        %v1378 = vmax.f32 %v1122, %v1184
        %v1379 = vmax.f32 %v1378, %v1247
        %v1380 = vmax.f32 %v1379, %v1309
        %v1381 = vmax.f32 %v1124, %v1187
        %v1382 = vmax.f32 %v1381, %v1249
        %v1383 = vmax.f32 %v1382, %v1312
        %v1384 = vmax.f32 %v1127, %v1189
        %v1385 = vmax.f32 %v1384, %v1252
        %v1386 = vmax.f32 %v1385, %v1314
        %v1387 = vmax.f32 %v1129, %v1192
        %v1388 = vmax.f32 %v1387, %v1254
        %v1389 = vmax.f32 %v1388, %v1317
        %v1390 = vmax.f32 %v1132, %v1194
        %v1391 = vmax.f32 %v1390, %v1257
        %v1392 = vmax.f32 %v1391, %v1319
        %v1393 = vmax.f32 %v1134, %v1197
        %v1394 = vmax.f32 %v1393, %v1259
        %v1395 = vmax.f32 %v1394, %v1322
        %v1396 = vmax.f32 %v1137, %v1199
        %v1397 = vmax.f32 %v1396, %v1262
        %v1398 = vmax.f32 %v1397, %v1324
        %v1399 = vmax.f32 %v1139, %v1202
        %v1400 = vmax.f32 %v1399, %v1264
        %v1401 = vmax.f32 %v1400, %v1327
        %v1402 = vmax.f32 %v1142, %v1204
        %v1403 = vmax.f32 %v1402, %v1267
        %v1404 = vmax.f32 %v1403, %v1329
        %v1405 = vmax.f32 %v1144, %v1207
        %v1406 = vmax.f32 %v1405, %v1269
        %v1407 = vmax.f32 %v1406, %v1332
        %v1408 = vmax.f32 %v1147, %v1209
        %v1409 = vmax.f32 %v1408, %v1272
        %v1410 = vmax.f32 %v1409, %v1334
        %v1411 = vld [vmem:[%s2] sm:$0x1]
        %v1413 = vperm.slane %v1411, 0
        %v1415 = vadd.f32 %v1338, %v1413
        %v1416 = vadd.f32 %v1341, %v1413
        %v1417 = vadd.f32 %v1344, %v1413
        %v1418 = vadd.f32 %v1347, %v1413
        %v1419 = vadd.f32 %v1350, %v1413
        %v1420 = vadd.f32 %v1353, %v1413
        %v1421 = vadd.f32 %v1356, %v1413
        %v1422 = vadd.f32 %v1359, %v1413
        %v1423 = vadd.f32 %v1362, %v1413
        %v1424 = vadd.f32 %v1365, %v1413
        %v1425 = vadd.f32 %v1368, %v1413
        %v1426 = vadd.f32 %v1371, %v1413
        %v1427 = vadd.f32 %v1374, %v1413
        %v1428 = vadd.f32 %v1377, %v1413
        %v1429 = vadd.f32 %v1380, %v1413
        %v1430 = vadd.f32 %v1383, %v1413
        %v1431 = vadd.f32 %v1386, %v1413
        %v1432 = vadd.f32 %v1389, %v1413
        %v1433 = vadd.f32 %v1392, %v1413
        %v1434 = vadd.f32 %v1395, %v1413
        %v1435 = vadd.f32 %v1398, %v1413
        %v1436 = vadd.f32 %v1401, %v1413
        %v1437 = vadd.f32 %v1404, %v1413
        %v1438 = vadd.f32 %v1407, %v1413
        %v1439 = vadd.f32 %v1410, %v1413
        %v1440 = vmax.f32 %v1415, 0.0
        %v1441 = vmax.f32 %v1416, 0.0
        %v1442 = vmax.f32 %v1417, 0.0
        %v1443 = vmax.f32 %v1418, 0.0
        %v1444 = vmax.f32 %v1419, 0.0
        %v1445 = vmax.f32 %v1420, 0.0
        %v1446 = vmax.f32 %v1421, 0.0
        %v1447 = vmax.f32 %v1422, 0.0
        %v1448 = vmax.f32 %v1423, 0.0
        %v1449 = vmax.f32 %v1424, 0.0
        %v1450 = vmax.f32 %v1425, 0.0
        %v1451 = vmax.f32 %v1426, 0.0
        %v1452 = vmax.f32 %v1427, 0.0
        %v1453 = vmax.f32 %v1428, 0.0
        %v1454 = vmax.f32 %v1429, 0.0
        %v1455 = vmax.f32 %v1430, 0.0
        %v1456 = vmax.f32 %v1431, 0.0
        %v1457 = vmax.f32 %v1432, 0.0
        %v1458 = vmax.f32 %v1433, 0.0
        %v1459 = vmax.f32 %v1434, 0.0
        %v1460 = vmax.f32 %v1435, 0.0
        %v1461 = vmax.f32 %v1436, 0.0
        %v1462 = vmax.f32 %v1437, 0.0
        %v1463 = vmax.f32 %v1438, 0.0
        %v1464 = vmax.f32 %v1439, 0.0
        %v1465 = vpack.c.bf16 %v1440, %v1440
        %v1466 = vpack.c.bf16 %v1441, %v1441
        %v1467 = vpack.c.bf16 %v1442, %v1442
        %v1468 = vpack.c.bf16 %v1443, %v1443
        %v1469 = vpack.c.bf16 %v1444, %v1444
        %v1470 = vpack.c.bf16 %v1445, %v1445
        %v1471 = vpack.c.bf16 %v1446, %v1446
        %v1472 = vpack.c.bf16 %v1447, %v1447
        %v1473 = vpack.c.bf16 %v1448, %v1448
        %v1474 = vpack.c.bf16 %v1449, %v1449
        %v1475 = vpack.c.bf16 %v1450, %v1450
        %v1476 = vpack.c.bf16 %v1451, %v1451
        %v1477 = vpack.c.bf16 %v1452, %v1452
        %v1478 = vpack.c.bf16 %v1453, %v1453
        %v1479 = vpack.c.bf16 %v1454, %v1454
        %v1480 = vpack.c.bf16 %v1455, %v1455
        %v1481 = vpack.c.bf16 %v1456, %v1456
        %v1482 = vpack.c.bf16 %v1457, %v1457
        %v1483 = vpack.c.bf16 %v1458, %v1458
        %v1484 = vpack.c.bf16 %v1459, %v1459
        %v1485 = vpack.c.bf16 %v1460, %v1460
        %v1486 = vpack.c.bf16 %v1461, %v1461
        %v1487 = vpack.c.bf16 %v1462, %v1462
        %v1488 = vpack.c.bf16 %v1463, %v1463
        %v1489 = vpack.c.bf16 %v1464, %v1464
        %1490 = vst [vmem:[%s611] sm:$0xf] %v1465
        %1491 = vst [vmem:[%s611 + $0x4] sm:$0xf] %v1466
        %1492 = vst [vmem:[%s611 + $0x8] sm:$0xf] %v1467
        %1493 = vst [vmem:[%s611 + $0xc] sm:$0xf] %v1468
        %1494 = vst [vmem:[%s611 + $0x10] sm:$0xf] %v1469
        %1495 = vst [vmem:[%s611 + $0x14] sm:$0xf] %v1470
        %1496 = vst [vmem:[%s611 + $0x18] sm:$0xf] %v1471
        %1497 = vst [vmem:[%s611 + $0x1c] sm:$0xf] %v1472
        %1498 = vst [vmem:[%s611 + $0x20] sm:$0xf] %v1473
        %1499 = vst [vmem:[%s611 + $0x24] sm:$0xf] %v1474
        %1500 = vst [vmem:[%s611 + $0x28] sm:$0xf] %v1475
        %1501 = vst [vmem:[%s611 + $0x2c] sm:$0xf] %v1476
        %1502 = vst [vmem:[%s611 + $0x30] sm:$0xf] %v1477
        %1503 = vst [vmem:[%s611 + $0x34] sm:$0xf] %v1478
        %1504 = vst [vmem:[%s611 + $0x38] sm:$0xf] %v1479
        %1505 = vst [vmem:[%s611 + $0x3c] sm:$0xf] %v1480
        %1506 = vst [vmem:[%s611 + $0x40] sm:$0xf] %v1481
        %1507 = vst [vmem:[%s611 + $0x44] sm:$0xf] %v1482
        %1508 = vst [vmem:[%s611 + $0x48] sm:$0xf] %v1483
        %1509 = vst [vmem:[%s611 + $0x4c] sm:$0xf] %v1484
        %1510 = vst [vmem:[%s611 + $0x50] sm:$0xf] %v1485
        %1511 = vst [vmem:[%s611 + $0x54] sm:$0xf] %v1486
        %1512 = vst [vmem:[%s611 + $0x58] sm:$0xf] %v1487
        %1513 = vst [vmem:[%s611 + $0x5c] sm:$0xf] %v1488
        %1514 = vst [vmem:[%s611 + $0x60] sm:$0xf] %v1489
        %s1515 = smul.u32 25, %s14
        %p1516 = scmp.lt.s32.totalorder %s1515, 49
        %s1517 = scalar_select %p1516, %s1515, 49
        %s1518 = smul.addr %s1517, 4
        %s1519 = scalar_lea.vmem %s3, %s1518
        // Predicated region
        $region74: #{lenet_forward.2} parent=68 // pred_check
          %p1520 = pneg %p100
        $region75: #{lenet_forward.2} parent=68 // pred_check_branch
          %1522 = sbr.rel (%p1520) target = $region77
        $region76: #{lenet_forward.2} parent=68 // pred_region
          %s1523 = smul.u32 25, %s14
        $region77: #{lenet_forward.2} parent=68 // pred_fallthru
          _
      $region69: #{lenet_forward.2} parent=5 // pred_fallthru
        _
      %p1524 = scmp.le.s32.totalorder 2, %s9
      // Predicated region
      $region78: #{lenet_forward.2} parent=5 // pred_check
        %p1525 = pneg %p1524
      $region79: #{lenet_forward.2} parent=5 // pred_check_branch
        %1527 = sbr.rel (%p1525) target = $region81
      $region80: #{lenet_forward.2} parent=5 // pred_region
        %s1528 = ssub.s32 %s9, 2
        // Predicated region
        $region82: #{lenet_forward.2} parent=80 // pred_check
          %p1529 = pneg %p106
        $region83: #{lenet_forward.2} parent=80 // pred_check_branch
          %1531 = sbr.rel (%p1529) target = $region85
        $region84: #{lenet_forward.2} parent=80 // pred_region
          %s1532 = smul.u32 25, %s15
          %p1533 = scmp.lt.s32.totalorder %s1532, 49
          %s1534 = scalar_select %p1533, %s1532, 49
          %s1535 = smul.addr %s1534, 4
          %s1536 = scalar_lea.vmem %s3, %s1535
        $region85: #{lenet_forward.2} parent=80 // pred_fallthru
          _
      $region81: #{lenet_forward.2} parent=5 // pred_fallthru
        _
    $region6: #{lenet_forward.2} parent=1 // loop_footer
      %s13 = sadd.s32 1, %s9
    $region7: #{lenet_forward.2} parent=1 // loop_footer_branch
      %8 = sbr.rel target = $region3
    $region8: #{lenet_forward.2} parent=1 // loop_exit
      _

// kernel: lenet_forward.3
$region0: #{lenet_forward.3}
  #allocation0 [shape = 'u32[]', space=smem, size = 0x4, offset = 0x4, fixed_abs, tag = 'smem constant byte address 0x4 - core index']
  #allocation1 [shape = 'u32[72,128]{1,0:T(1,128)}', space=vmem, size = 0x9000, scoped, tag = 'internal scratch']
  %s0 = inlined_call_operand.vmem [shape: bf16[4,25,8,256], index: 0, kind: input, shape index: {}]
  %s1 = inlined_call_operand.vmem [shape: bf16[256,128], index: 1, kind: input, shape index: {}]
  %s2 = inlined_call_operand.vmem [shape: f32[1,128], index: 2, kind: input, shape index: {}]
  %s3 = inlined_call_operand.vmem [shape: bf16[25,128,128], index: 3, kind: input, shape index: {}]
  %s4 = inlined_call_operand.vmem [shape: f32[1,128], index: 4, kind: input, shape index: {}]
  %s5 = inlined_call_operand.vmem [shape: bf16[128,128], index: 5, kind: input, shape index: {}]
  %s6 = inlined_call_operand.vmem [shape: f32[1,128], index: 6, kind: input, shape index: {}]
  %s7 = inlined_call_operand.vmem [shape: bf16[128,128], index: 7, kind: input, shape index: {}]
  %s8 = inlined_call_operand.vmem [shape: f32[1,128], index: 8, kind: input, shape index: {}]
  %s9 = inlined_call_operand.vmem [shape: f32[8,128], index: 9, kind: output, shape index: {}]
  %s10 = sld [smem:[#allocation0]]
  $region46: #{lenet_forward.3} parent=0
    _
  %s12 = ssub.s32 1, %s10
  %s13 = scalar_select 0, %s12, %s10
  // Predicated region
  $region2: #{lenet_forward.3} parent=0 // pred_check
    _
  $region3: #{lenet_forward.3} parent=0 // pred_check_branch
    %15 = sbr.rel (0) target = $region5
  $region4: #{lenet_forward.3} parent=0 // pred_region
    _
  $region5: #{lenet_forward.3} parent=0 // pred_fallthru
    _
  // Predicated region
  $region6: #{lenet_forward.3} parent=0 // pred_check
    _
  $region7: #{lenet_forward.3} parent=0 // pred_check_branch
    %17 = sbr.rel (0) target = $region9
  $region8: #{lenet_forward.3} parent=0 // pred_region
    _
  $region9: #{lenet_forward.3} parent=0 // pred_fallthru
    _
  // Predicated region
  $region10: #{lenet_forward.3} parent=0 // pred_check
    _
  $region11: #{lenet_forward.3} parent=0 // pred_check_branch
    %19 = sbr.rel (0) target = $region13
  $region12: #{lenet_forward.3} parent=0 // pred_region
    _
  $region13: #{lenet_forward.3} parent=0 // pred_fallthru
    _
  // Predicated region
  $region14: #{lenet_forward.3} parent=0 // pred_check
    _
  $region15: #{lenet_forward.3} parent=0 // pred_check_branch
    %21 = sbr.rel (0) target = $region17
  $region16: #{lenet_forward.3} parent=0 // pred_region
    _
  $region17: #{lenet_forward.3} parent=0 // pred_fallthru
    _
  // Predicated region
  $region18: #{lenet_forward.3} parent=0 // pred_check
    _
  $region19: #{lenet_forward.3} parent=0 // pred_check_branch
    %23 = sbr.rel (0) target = $region21
  $region20: #{lenet_forward.3} parent=0 // pred_region
    _
  $region21: #{lenet_forward.3} parent=0 // pred_fallthru
    _
  // Predicated region
  $region22: #{lenet_forward.3} parent=0 // pred_check
    _
  $region23: #{lenet_forward.3} parent=0 // pred_check_branch
    %25 = sbr.rel (0) target = $region25
  $region24: #{lenet_forward.3} parent=0 // pred_region
    _
  $region25: #{lenet_forward.3} parent=0 // pred_fallthru
    _
  // Predicated region
  $region26: #{lenet_forward.3} parent=0 // pred_check
    _
  $region27: #{lenet_forward.3} parent=0 // pred_check_branch
    %27 = sbr.rel (0) target = $region29
  $region28: #{lenet_forward.3} parent=0 // pred_region
    _
  $region29: #{lenet_forward.3} parent=0 // pred_fallthru
    _
  // Predicated region
  $region30: #{lenet_forward.3} parent=0 // pred_check
    _
  $region31: #{lenet_forward.3} parent=0 // pred_check_branch
    %29 = sbr.rel (0) target = $region33
  $region32: #{lenet_forward.3} parent=0 // pred_region
    _
  $region33: #{lenet_forward.3} parent=0 // pred_fallthru
    _
  // Predicated region
  $region34: #{lenet_forward.3} parent=0 // pred_check
    _
  $region35: #{lenet_forward.3} parent=0 // pred_check_branch
    %31 = sbr.rel (0) target = $region37
  $region36: #{lenet_forward.3} parent=0 // pred_region
    _
  $region37: #{lenet_forward.3} parent=0 // pred_fallthru
    _
  %v32 = vld [vmem:[%s0] sm:$0xff]
  %v33 = vld [vmem:[%s0 + $0x8] sm:$0xff]
  %v34 = vld [vmem:[%s0 + $0x10] sm:$0xff]
  %v35 = vld [vmem:[%s0 + $0x18] sm:$0xff]
  %v36 = vld [vmem:[%s0 + $0x20] sm:$0xff]
  %v37 = vld [vmem:[%s0 + $0x28] sm:$0xff]
  %v38 = vld [vmem:[%s0 + $0x30] sm:$0xff]
  %v39 = vld [vmem:[%s0 + $0x38] sm:$0xff]
  %v40 = vld [vmem:[%s0 + $0x40] sm:$0xff]
  %v41 = vld [vmem:[%s0 + $0x48] sm:$0xff]
  %v42 = vld [vmem:[%s0 + $0x50] sm:$0xff]
  %v43 = vld [vmem:[%s0 + $0x58] sm:$0xff]
  %v44 = vld [vmem:[%s0 + $0x60] sm:$0xff]
  %v45 = vld [vmem:[%s0 + $0x68] sm:$0xff]
  %v46 = vld [vmem:[%s0 + $0x70] sm:$0xff]
  %v47 = vld [vmem:[%s0 + $0x78] sm:$0xff]
  %v48 = vld [vmem:[%s0 + $0x80] sm:$0xff]
  %v49 = vld [vmem:[%s0 + $0x88] sm:$0xff]
  %v50 = vld [vmem:[%s0 + $0x90] sm:$0xff]
  %v51 = vld [vmem:[%s0 + $0x98] sm:$0xff]
  %v52 = vld [vmem:[%s0 + $0xa0] sm:$0xff]
  %v53 = vld [vmem:[%s0 + $0xa8] sm:$0xff]
  %v54 = vld [vmem:[%s0 + $0xb0] sm:$0xff]
  %v55 = vld [vmem:[%s0 + $0xb8] sm:$0xff]
  %v56 = vld [vmem:[%s0 + $0xc0] sm:$0xff]
  %v57 = vld [vmem:[%s0 + $0xc8] sm:$0xff]
  %v58 = vld [vmem:[%s0 + $0xd0] sm:$0xff]
  %v59 = vld [vmem:[%s0 + $0xd8] sm:$0xff]
  %v60 = vld [vmem:[%s0 + $0xe0] sm:$0xff]
  %v61 = vld [vmem:[%s0 + $0xe8] sm:$0xff]
  %v62 = vld [vmem:[%s0 + $0xf0] sm:$0xff]
  %v63 = vld [vmem:[%s0 + $0xf8] sm:$0xff]
  %v64 = vld [vmem:[%s0 + $0x100] sm:$0xff]
  %v65 = vld [vmem:[%s0 + $0x108] sm:$0xff]
  %v66 = vld [vmem:[%s0 + $0x110] sm:$0xff]
  %v67 = vld [vmem:[%s0 + $0x118] sm:$0xff]
  %v68 = vld [vmem:[%s0 + $0x120] sm:$0xff]
  %v69 = vld [vmem:[%s0 + $0x128] sm:$0xff]
  %v70 = vld [vmem:[%s0 + $0x130] sm:$0xff]
  %v71 = vld [vmem:[%s0 + $0x138] sm:$0xff]
  %v72 = vld [vmem:[%s0 + $0x140] sm:$0xff]
  %v73 = vld [vmem:[%s0 + $0x148] sm:$0xff]
  %v74 = vld [vmem:[%s0 + $0x150] sm:$0xff]
  %v75 = vld [vmem:[%s0 + $0x158] sm:$0xff]
  %v76 = vld [vmem:[%s0 + $0x160] sm:$0xff]
  %v77 = vld [vmem:[%s0 + $0x168] sm:$0xff]
  %v78 = vld [vmem:[%s0 + $0x170] sm:$0xff]
  %v79 = vld [vmem:[%s0 + $0x178] sm:$0xff]
  %v80 = vld [vmem:[%s0 + $0x180] sm:$0xff]
  %v81 = vld [vmem:[%s0 + $0x188] sm:$0xff]
  %v82 = vld [vmem:[%s0 + $0x190] sm:$0xff]
  %v83 = vld [vmem:[%s0 + $0x198] sm:$0xff]
  %v84 = vld [vmem:[%s0 + $0x1a0] sm:$0xff]
  %v85 = vld [vmem:[%s0 + $0x1a8] sm:$0xff]
  %v86 = vld [vmem:[%s0 + $0x1b0] sm:$0xff]
  %v87 = vld [vmem:[%s0 + $0x1b8] sm:$0xff]
  %v88 = vld [vmem:[%s0 + $0x1c0] sm:$0xff]
  %v89 = vld [vmem:[%s0 + $0x1c8] sm:$0xff]
  %v90 = vld [vmem:[%s0 + $0x1d0] sm:$0xff]
  %v91 = vld [vmem:[%s0 + $0x1d8] sm:$0xff]
  %v92 = vld [vmem:[%s0 + $0x1e0] sm:$0xff]
  %v93 = vld [vmem:[%s0 + $0x1e8] sm:$0xff]
  %v94 = vld [vmem:[%s0 + $0x1f0] sm:$0xff]
  %v95 = vld [vmem:[%s0 + $0x1f8] sm:$0xff]
  %v96 = vld [vmem:[%s0 + $0x200] sm:$0xff]
  %v97 = vld [vmem:[%s0 + $0x208] sm:$0xff]
  %v98 = vld [vmem:[%s0 + $0x210] sm:$0xff]
  %v99 = vld [vmem:[%s0 + $0x218] sm:$0xff]
  %v100 = vld [vmem:[%s0 + $0x220] sm:$0xff]
  %v101 = vld [vmem:[%s0 + $0x228] sm:$0xff]
  %v102 = vld [vmem:[%s0 + $0x230] sm:$0xff]
  %v103 = vld [vmem:[%s0 + $0x238] sm:$0xff]
  %v104 = vld [vmem:[%s0 + $0x240] sm:$0xff]
  %v105 = vld [vmem:[%s0 + $0x248] sm:$0xff]
  %v106 = vld [vmem:[%s0 + $0x250] sm:$0xff]
  %v107 = vld [vmem:[%s0 + $0x258] sm:$0xff]
  %v108 = vld [vmem:[%s0 + $0x260] sm:$0xff]
  %v109 = vld [vmem:[%s0 + $0x268] sm:$0xff]
  %v110 = vld [vmem:[%s0 + $0x270] sm:$0xff]
  %v111 = vld [vmem:[%s0 + $0x278] sm:$0xff]
  %v112 = vld [vmem:[%s0 + $0x280] sm:$0xff]
  %v113 = vld [vmem:[%s0 + $0x288] sm:$0xff]
  %v114 = vld [vmem:[%s0 + $0x290] sm:$0xff]
  %v115 = vld [vmem:[%s0 + $0x298] sm:$0xff]
  %v116 = vld [vmem:[%s0 + $0x2a0] sm:$0xff]
  %v117 = vld [vmem:[%s0 + $0x2a8] sm:$0xff]
  %v118 = vld [vmem:[%s0 + $0x2b0] sm:$0xff]
  %v119 = vld [vmem:[%s0 + $0x2b8] sm:$0xff]
  %v120 = vld [vmem:[%s0 + $0x2c0] sm:$0xff]
  %v121 = vld [vmem:[%s0 + $0x2c8] sm:$0xff]
  %v122 = vld [vmem:[%s0 + $0x2d0] sm:$0xff]
  %v123 = vld [vmem:[%s0 + $0x2d8] sm:$0xff]
  %v124 = vld [vmem:[%s0 + $0x2e0] sm:$0xff]
  %v125 = vld [vmem:[%s0 + $0x2e8] sm:$0xff]
  %v126 = vld [vmem:[%s0 + $0x2f0] sm:$0xff]
  %v127 = vld [vmem:[%s0 + $0x2f8] sm:$0xff]
  %v128 = vld [vmem:[%s0 + $0x300] sm:$0xff]
  %v129 = vld [vmem:[%s0 + $0x308] sm:$0xff]
  %v130 = vld [vmem:[%s0 + $0x310] sm:$0xff]
  %v131 = vld [vmem:[%s0 + $0x318] sm:$0xff]
  %v132 = vld [vmem:[%s1] sm:$0xf]
  %v133 = vld [vmem:[%s1 + $0x4] sm:$0xf]
  %v134 = vld [vmem:[%s1 + $0x8] sm:$0xf]
  %v135 = vld [vmem:[%s1 + $0xc] sm:$0xf]
  %v136 = vld [vmem:[%s1 + $0x10] sm:$0xf]
  %v137 = vld [vmem:[%s1 + $0x14] sm:$0xf]
  %v138 = vld [vmem:[%s1 + $0x18] sm:$0xf]
  %v139 = vld [vmem:[%s1 + $0x1c] sm:$0xf]
  %v140 = vld [vmem:[%s1 + $0x20] sm:$0xf]
  %v141 = vld [vmem:[%s1 + $0x24] sm:$0xf]
  %v142 = vld [vmem:[%s1 + $0x28] sm:$0xf]
  %v143 = vld [vmem:[%s1 + $0x2c] sm:$0xf]
  %v144 = vld [vmem:[%s1 + $0x30] sm:$0xf]
  %v145 = vld [vmem:[%s1 + $0x34] sm:$0xf]
  %v146 = vld [vmem:[%s1 + $0x38] sm:$0xf]
  %v147 = vld [vmem:[%s1 + $0x3c] sm:$0xf]
  %v148 = vld [vmem:[%s1 + $0x40] sm:$0xf]
  %v149 = vld [vmem:[%s1 + $0x44] sm:$0xf]
  %v150 = vld [vmem:[%s1 + $0x48] sm:$0xf]
  %v151 = vld [vmem:[%s1 + $0x4c] sm:$0xf]
  %v152 = vld [vmem:[%s1 + $0x50] sm:$0xf]
  %v153 = vld [vmem:[%s1 + $0x54] sm:$0xf]
  %v154 = vld [vmem:[%s1 + $0x58] sm:$0xf]
  %v155 = vld [vmem:[%s1 + $0x5c] sm:$0xf]
  %v156 = vld [vmem:[%s1 + $0x60] sm:$0xf]
  %v157 = vld [vmem:[%s1 + $0x64] sm:$0xf]
  %v158 = vld [vmem:[%s1 + $0x68] sm:$0xf]
  %v159 = vld [vmem:[%s1 + $0x6c] sm:$0xf]
  %v160 = vld [vmem:[%s1 + $0x70] sm:$0xf]
  %v161 = vld [vmem:[%s1 + $0x74] sm:$0xf]
  %v162 = vld [vmem:[%s1 + $0x78] sm:$0xf]
  %v163 = vld [vmem:[%s1 + $0x7c] sm:$0xf]
  %v264 = vunpack.c.l.b16 %v32
  %v265 = vunpack.c.h.b16 %v32
  %v266 = vunpack.c.l.b16 %v33
  %v267 = vunpack.c.h.b16 %v33
  %v268 = vunpack.c.l.b16 %v34
  %v269 = vunpack.c.h.b16 %v34
  %v270 = vunpack.c.l.b16 %v35
  %v271 = vunpack.c.h.b16 %v35
  %v272 = vunpack.c.l.b16 %v36
  %v273 = vunpack.c.h.b16 %v36
  %v274 = vunpack.c.l.b16 %v37
  %v275 = vunpack.c.h.b16 %v37
  %v276 = vunpack.c.l.b16 %v38
  %v277 = vunpack.c.h.b16 %v38
  %v278 = vunpack.c.l.b16 %v39
  %v279 = vunpack.c.h.b16 %v39
  %v280 = vunpack.c.l.b16 %v40
  %v281 = vunpack.c.h.b16 %v40
  %v282 = vunpack.c.l.b16 %v41
  %v283 = vunpack.c.h.b16 %v41
  %v284 = vunpack.c.l.b16 %v42
  %v285 = vunpack.c.h.b16 %v42
  %v286 = vunpack.c.l.b16 %v43
  %v287 = vunpack.c.h.b16 %v43
  %v288 = vunpack.c.l.b16 %v44
  %v289 = vunpack.c.h.b16 %v44
  %v290 = vunpack.c.l.b16 %v45
  %v291 = vunpack.c.h.b16 %v45
  %v292 = vunpack.c.l.b16 %v46
  %v293 = vunpack.c.h.b16 %v46
  %v294 = vunpack.c.l.b16 %v47
  %v295 = vunpack.c.h.b16 %v47
  %v296 = vunpack.c.l.b16 %v48
  %v297 = vunpack.c.h.b16 %v48
  %v298 = vunpack.c.l.b16 %v49
  %v299 = vunpack.c.h.b16 %v49
  %v300 = vunpack.c.l.b16 %v50
  %v301 = vunpack.c.h.b16 %v50
  %v302 = vunpack.c.l.b16 %v51
  %v303 = vunpack.c.h.b16 %v51
  %v304 = vunpack.c.l.b16 %v52
  %v305 = vunpack.c.h.b16 %v52
  %v306 = vunpack.c.l.b16 %v53
  %v307 = vunpack.c.h.b16 %v53
  %v308 = vunpack.c.l.b16 %v54
  %v309 = vunpack.c.h.b16 %v54
  %v310 = vunpack.c.l.b16 %v55
  %v311 = vunpack.c.h.b16 %v55
  %v312 = vunpack.c.l.b16 %v56
  %v313 = vunpack.c.h.b16 %v56
  %v314 = vunpack.c.l.b16 %v57
  %v315 = vunpack.c.h.b16 %v57
  %v316 = vunpack.c.l.b16 %v58
  %v317 = vunpack.c.h.b16 %v58
  %v318 = vunpack.c.l.b16 %v59
  %v319 = vunpack.c.h.b16 %v59
  %v320 = vunpack.c.l.b16 %v60
  %v321 = vunpack.c.h.b16 %v60
  %v322 = vunpack.c.l.b16 %v61
  %v323 = vunpack.c.h.b16 %v61
  %v324 = vunpack.c.l.b16 %v62
  %v325 = vunpack.c.h.b16 %v62
  %v326 = vunpack.c.l.b16 %v63
  %v327 = vunpack.c.h.b16 %v63
  %v328 = vunpack.c.l.b16 %v64
  %v329 = vunpack.c.h.b16 %v64
  %v330 = vunpack.c.l.b16 %v65
  %v331 = vunpack.c.h.b16 %v65
  %v332 = vunpack.c.l.b16 %v66
  %v333 = vunpack.c.h.b16 %v66
  %v334 = vunpack.c.l.b16 %v67
  %v335 = vunpack.c.h.b16 %v67
  %v336 = vunpack.c.l.b16 %v68
  %v337 = vunpack.c.h.b16 %v68
  %v338 = vunpack.c.l.b16 %v69
  %v339 = vunpack.c.h.b16 %v69
  %v340 = vunpack.c.l.b16 %v70
  %v341 = vunpack.c.h.b16 %v70
  %v342 = vunpack.c.l.b16 %v71
  %v343 = vunpack.c.h.b16 %v71
  %v344 = vunpack.c.l.b16 %v72
  %v345 = vunpack.c.h.b16 %v72
  %v346 = vunpack.c.l.b16 %v73
  %v347 = vunpack.c.h.b16 %v73
  %v348 = vunpack.c.l.b16 %v74
  %v349 = vunpack.c.h.b16 %v74
  %v350 = vunpack.c.l.b16 %v75
  %v351 = vunpack.c.h.b16 %v75
  %v352 = vunpack.c.l.b16 %v76
  %v353 = vunpack.c.h.b16 %v76
  %v354 = vunpack.c.l.b16 %v77
  %v355 = vunpack.c.h.b16 %v77
  %v356 = vunpack.c.l.b16 %v78
  %v357 = vunpack.c.h.b16 %v78
  %v358 = vunpack.c.l.b16 %v79
  %v359 = vunpack.c.h.b16 %v79
  %v360 = vunpack.c.l.b16 %v80
  %v361 = vunpack.c.h.b16 %v80
  %v362 = vunpack.c.l.b16 %v81
  %v363 = vunpack.c.h.b16 %v81
  %v364 = vunpack.c.l.b16 %v82
  %v365 = vunpack.c.h.b16 %v82
  %v366 = vunpack.c.l.b16 %v83
  %v367 = vunpack.c.h.b16 %v83
  %v368 = vunpack.c.l.b16 %v84
  %v369 = vunpack.c.h.b16 %v84
  %v370 = vunpack.c.l.b16 %v85
  %v371 = vunpack.c.h.b16 %v85
  %v372 = vunpack.c.l.b16 %v86
  %v373 = vunpack.c.h.b16 %v86
  %v374 = vunpack.c.l.b16 %v87
  %v375 = vunpack.c.h.b16 %v87
  %v376 = vunpack.c.l.b16 %v88
  %v377 = vunpack.c.h.b16 %v88
  %v378 = vunpack.c.l.b16 %v89
  %v379 = vunpack.c.h.b16 %v89
  %v380 = vunpack.c.l.b16 %v90
  %v381 = vunpack.c.h.b16 %v90
  %v382 = vunpack.c.l.b16 %v91
  %v383 = vunpack.c.h.b16 %v91
  %v384 = vunpack.c.l.b16 %v92
  %v385 = vunpack.c.h.b16 %v92
  %v386 = vunpack.c.l.b16 %v93
  %v387 = vunpack.c.h.b16 %v93
  %v388 = vunpack.c.l.b16 %v94
  %v389 = vunpack.c.h.b16 %v94
  %v390 = vunpack.c.l.b16 %v95
  %v391 = vunpack.c.h.b16 %v95
  %v392 = vunpack.c.l.b16 %v96
  %v393 = vunpack.c.h.b16 %v96
  %v394 = vunpack.c.l.b16 %v97
  %v395 = vunpack.c.h.b16 %v97
  %v396 = vunpack.c.l.b16 %v98
  %v397 = vunpack.c.h.b16 %v98
  %v398 = vunpack.c.l.b16 %v99
  %v399 = vunpack.c.h.b16 %v99
  %v400 = vunpack.c.l.b16 %v100
  %v401 = vunpack.c.h.b16 %v100
  %v402 = vunpack.c.l.b16 %v101
  %v403 = vunpack.c.h.b16 %v101
  %v404 = vunpack.c.l.b16 %v102
  %v405 = vunpack.c.h.b16 %v102
  %v406 = vunpack.c.l.b16 %v103
  %v407 = vunpack.c.h.b16 %v103
  %v408 = vunpack.c.l.b16 %v104
  %v409 = vunpack.c.h.b16 %v104
  %v410 = vunpack.c.l.b16 %v105
  %v411 = vunpack.c.h.b16 %v105
  %v412 = vunpack.c.l.b16 %v106
  %v413 = vunpack.c.h.b16 %v106
  %v414 = vunpack.c.l.b16 %v107
  %v415 = vunpack.c.h.b16 %v107
  %v416 = vunpack.c.l.b16 %v108
  %v417 = vunpack.c.h.b16 %v108
  %v418 = vunpack.c.l.b16 %v109
  %v419 = vunpack.c.h.b16 %v109
  %v420 = vunpack.c.l.b16 %v110
  %v421 = vunpack.c.h.b16 %v110
  %v422 = vunpack.c.l.b16 %v111
  %v423 = vunpack.c.h.b16 %v111
  %v424 = vunpack.c.l.b16 %v112
  %v425 = vunpack.c.h.b16 %v112
  %v426 = vunpack.c.l.b16 %v113
  %v427 = vunpack.c.h.b16 %v113
  %v428 = vunpack.c.l.b16 %v114
  %v429 = vunpack.c.h.b16 %v114
  %v430 = vunpack.c.l.b16 %v115
  %v431 = vunpack.c.h.b16 %v115
  %v432 = vunpack.c.l.b16 %v116
  %v433 = vunpack.c.h.b16 %v116
  %v434 = vunpack.c.l.b16 %v117
  %v435 = vunpack.c.h.b16 %v117
  %v436 = vunpack.c.l.b16 %v118
  %v437 = vunpack.c.h.b16 %v118
  %v438 = vunpack.c.l.b16 %v119
  %v439 = vunpack.c.h.b16 %v119
  %v440 = vunpack.c.l.b16 %v120
  %v441 = vunpack.c.h.b16 %v120
  %v442 = vunpack.c.l.b16 %v121
  %v443 = vunpack.c.h.b16 %v121
  %v444 = vunpack.c.l.b16 %v122
  %v445 = vunpack.c.h.b16 %v122
  %v446 = vunpack.c.l.b16 %v123
  %v447 = vunpack.c.h.b16 %v123
  %v448 = vunpack.c.l.b16 %v124
  %v449 = vunpack.c.h.b16 %v124
  %v450 = vunpack.c.l.b16 %v125
  %v451 = vunpack.c.h.b16 %v125
  %v452 = vunpack.c.l.b16 %v126
  %v453 = vunpack.c.h.b16 %v126
  %v454 = vunpack.c.l.b16 %v127
  %v455 = vunpack.c.h.b16 %v127
  %v456 = vunpack.c.l.b16 %v128
  %v457 = vunpack.c.h.b16 %v128
  %v458 = vunpack.c.l.b16 %v129
  %v459 = vunpack.c.h.b16 %v129
  %v460 = vunpack.c.l.b16 %v130
  %v461 = vunpack.c.h.b16 %v130
  %v462 = vunpack.c.l.b16 %v131
  %v463 = vunpack.c.h.b16 %v131
  %v464 = vpack.c.b16 %v266, %v264
  %v465 = vpack.c.b16 %v267, %v265
  %v466 = vpack.c.b16 %v270, %v268
  %v467 = vpack.c.b16 %v271, %v269
  %v468 = vpack.c.b16 %v274, %v272
  %v469 = vpack.c.b16 %v275, %v273
  %v470 = vpack.c.b16 %v278, %v276
  %v471 = vpack.c.b16 %v279, %v277
  %v472 = vpack.c.b16 %v282, %v280
  %v473 = vpack.c.b16 %v283, %v281
  %v474 = vpack.c.b16 %v286, %v284
  %v475 = vpack.c.b16 %v287, %v285
  %v476 = vpack.c.b16 %v290, %v288
  %v477 = vpack.c.b16 %v291, %v289
  %v478 = vpack.c.b16 %v294, %v292
  %v479 = vpack.c.b16 %v295, %v293
  %v480 = vpack.c.b16 %v298, %v296
  %v481 = vpack.c.b16 %v299, %v297
  %v482 = vpack.c.b16 %v302, %v300
  %v483 = vpack.c.b16 %v303, %v301
  %v484 = vpack.c.b16 %v306, %v304
  %v485 = vpack.c.b16 %v307, %v305
  %v486 = vpack.c.b16 %v310, %v308
  %v487 = vpack.c.b16 %v311, %v309
  %v488 = vpack.c.b16 %v314, %v312
  %v489 = vpack.c.b16 %v315, %v313
  %v490 = vpack.c.b16 %v318, %v316
  %v491 = vpack.c.b16 %v319, %v317
  %v492 = vpack.c.b16 %v322, %v320
  %v493 = vpack.c.b16 %v323, %v321
  %v494 = vpack.c.b16 %v326, %v324
  %v495 = vpack.c.b16 %v327, %v325
  %v496 = vpack.c.b16 %v330, %v328
  %v497 = vpack.c.b16 %v331, %v329
  %v498 = vpack.c.b16 %v334, %v332
  %v499 = vpack.c.b16 %v335, %v333
  %v500 = vpack.c.b16 %v338, %v336
  %v501 = vpack.c.b16 %v339, %v337
  %v502 = vpack.c.b16 %v342, %v340
  %v503 = vpack.c.b16 %v343, %v341
  %v504 = vpack.c.b16 %v346, %v344
  %v505 = vpack.c.b16 %v347, %v345
  %v506 = vpack.c.b16 %v350, %v348
  %v507 = vpack.c.b16 %v351, %v349
  %v508 = vpack.c.b16 %v354, %v352
  %v509 = vpack.c.b16 %v355, %v353
  %v510 = vpack.c.b16 %v358, %v356
  %v511 = vpack.c.b16 %v359, %v357
  %v512 = vpack.c.b16 %v362, %v360
  %v513 = vpack.c.b16 %v363, %v361
  %v514 = vpack.c.b16 %v366, %v364
  %v515 = vpack.c.b16 %v367, %v365
  %v516 = vpack.c.b16 %v370, %v368
  %v517 = vpack.c.b16 %v371, %v369
  %v518 = vpack.c.b16 %v374, %v372
  %v519 = vpack.c.b16 %v375, %v373
  %v520 = vpack.c.b16 %v378, %v376
  %v521 = vpack.c.b16 %v379, %v377
  %v522 = vpack.c.b16 %v382, %v380
  %v523 = vpack.c.b16 %v383, %v381
  %v524 = vpack.c.b16 %v386, %v384
  %v525 = vpack.c.b16 %v387, %v385
  %v526 = vpack.c.b16 %v390, %v388
  %v527 = vpack.c.b16 %v391, %v389
  %v528 = vpack.c.b16 %v394, %v392
  %v529 = vpack.c.b16 %v395, %v393
  %v530 = vpack.c.b16 %v398, %v396
  %v531 = vpack.c.b16 %v399, %v397
  %v532 = vpack.c.b16 %v402, %v400
  %v533 = vpack.c.b16 %v403, %v401
  %v534 = vpack.c.b16 %v406, %v404
  %v535 = vpack.c.b16 %v407, %v405
  %v536 = vpack.c.b16 %v410, %v408
  %v537 = vpack.c.b16 %v411, %v409
  %v538 = vpack.c.b16 %v414, %v412
  %v539 = vpack.c.b16 %v415, %v413
  %v540 = vpack.c.b16 %v418, %v416
  %v541 = vpack.c.b16 %v419, %v417
  %v542 = vpack.c.b16 %v422, %v420
  %v543 = vpack.c.b16 %v423, %v421
  %v544 = vpack.c.b16 %v426, %v424
  %v545 = vpack.c.b16 %v427, %v425
  %v546 = vpack.c.b16 %v430, %v428
  %v547 = vpack.c.b16 %v431, %v429
  %v548 = vpack.c.b16 %v434, %v432
  %v549 = vpack.c.b16 %v435, %v433
  %v550 = vpack.c.b16 %v438, %v436
  %v551 = vpack.c.b16 %v439, %v437
  %v552 = vpack.c.b16 %v442, %v440
  %v553 = vpack.c.b16 %v443, %v441
  %v554 = vpack.c.b16 %v446, %v444
  %v555 = vpack.c.b16 %v447, %v445
  %v556 = vpack.c.b16 %v450, %v448
  %v557 = vpack.c.b16 %v451, %v449
  %v558 = vpack.c.b16 %v454, %v452
  %v559 = vpack.c.b16 %v455, %v453
  %v560 = vpack.c.b16 %v458, %v456
  %v561 = vpack.c.b16 %v459, %v457
  %v562 = vpack.c.b16 %v462, %v460
  %v563 = vpack.c.b16 %v463, %v461
  %v696 = vunpack.c.l.b16 %v132
  %v697 = vunpack.c.l.b16 %v133
  %v698 = vunpack.c.l.b16 %v134
  %v699 = vunpack.c.l.b16 %v135
  %v700 = vunpack.c.l.b16 %v136
  %v701 = vunpack.c.l.b16 %v137
  %v702 = vunpack.c.l.b16 %v138
  %v703 = vunpack.c.l.b16 %v139
  %v704 = vunpack.c.l.b16 %v140
  %v705 = vunpack.c.l.b16 %v141
  %v706 = vunpack.c.l.b16 %v142
  %v707 = vunpack.c.l.b16 %v143
  %v708 = vunpack.c.l.b16 %v144
  %v709 = vunpack.c.l.b16 %v145
  %v710 = vunpack.c.l.b16 %v146
  %v711 = vunpack.c.l.b16 %v147
  %v712 = vunpack.c.l.b16 %v148
  %v713 = vunpack.c.l.b16 %v149
  %v714 = vunpack.c.l.b16 %v150
  %v715 = vunpack.c.l.b16 %v151
  %v716 = vunpack.c.l.b16 %v152
  %v717 = vunpack.c.l.b16 %v153
  %v718 = vunpack.c.l.b16 %v154
  %v719 = vunpack.c.l.b16 %v155
  %v720 = vunpack.c.l.b16 %v156
  %v721 = vunpack.c.l.b16 %v157
  %v722 = vunpack.c.l.b16 %v158
  %v723 = vunpack.c.l.b16 %v159
  %v724 = vunpack.c.l.b16 %v160
  %v725 = vunpack.c.l.b16 %v161
  %v726 = vunpack.c.l.b16 %v162
  %v727 = vunpack.c.l.b16 %v163
  %v728 = vpack.c.b16 %v697, %v696
  %v729 = vpack.c.b16 %v699, %v698
  %v730 = vpack.c.b16 %v701, %v700
  %v731 = vpack.c.b16 %v703, %v702
  %v732 = vpack.c.b16 %v705, %v704
  %v733 = vpack.c.b16 %v707, %v706
  %v734 = vpack.c.b16 %v709, %v708
  %v735 = vpack.c.b16 %v711, %v710
  %v736 = vpack.c.b16 %v713, %v712
  %v737 = vpack.c.b16 %v715, %v714
  %v738 = vpack.c.b16 %v717, %v716
  %v739 = vpack.c.b16 %v719, %v718
  %v740 = vpack.c.b16 %v721, %v720
  %v741 = vpack.c.b16 %v723, %v722
  %v742 = vpack.c.b16 %v725, %v724
  %v743 = vpack.c.b16 %v727, %v726
  %760 = vmatpush.bf16.msra.mxu0 %v735
  %761 = vmatpush.bf16.msra.mxu0 %v734
  %762 = vmatpush.bf16.msra.mxu0 %v733
  %763 = vmatpush.bf16.msra.mxu0 %v732
  %764 = vmatpush.bf16.msra.mxu0 %v731
  %765 = vmatpush.bf16.msra.mxu0 %v730
  %766 = vmatpush.bf16.msra.mxu0 %v729
  %767 = vmatpush.bf16.msra.mxu0 %v728
  %768 = vmatmul.bf16.gmra.mxu0 %v464
  %v769 = vpop.f32.mrf.mxu0
  %v770 = vadd.f32 0.0, %v769
  %v771 = vpop.f32.mrf.mxu0
  %v772 = vadd.f32 0.0, %v771
  %773 = vmatmul.bf16.gmra.mxu0 %v466
  %v774 = vpop.f32.mrf.mxu0
  %v775 = vadd.f32 0.0, %v774
  %v776 = vpop.f32.mrf.mxu0
  %v777 = vadd.f32 0.0, %v776
  %778 = vmatmul.bf16.gmra.mxu0 %v468
  %v779 = vpop.f32.mrf.mxu0
  %v780 = vadd.f32 0.0, %v779
  %v781 = vpop.f32.mrf.mxu0
  %v782 = vadd.f32 0.0, %v781
  %783 = vmatmul.bf16.gmra.mxu0 %v470
  %v784 = vpop.f32.mrf.mxu0
  %v785 = vadd.f32 0.0, %v784
  %v786 = vpop.f32.mrf.mxu0
  %v787 = vadd.f32 0.0, %v786
  %788 = vmatmul.bf16.gmra.mxu0 %v472
  %v789 = vpop.f32.mrf.mxu0
  %v790 = vadd.f32 0.0, %v789
  %v791 = vpop.f32.mrf.mxu0
  %v792 = vadd.f32 0.0, %v791
  %793 = vmatmul.bf16.gmra.mxu0 %v474
  %v794 = vpop.f32.mrf.mxu0
  %v795 = vadd.f32 0.0, %v794
  %v796 = vpop.f32.mrf.mxu0
  %v797 = vadd.f32 0.0, %v796
  %798 = vmatmul.bf16.gmra.mxu0 %v476
  %v799 = vpop.f32.mrf.mxu0
  %v800 = vadd.f32 0.0, %v799
  %v801 = vpop.f32.mrf.mxu0
  %v802 = vadd.f32 0.0, %v801
  %803 = vmatmul.bf16.gmra.mxu0 %v478
  %v804 = vpop.f32.mrf.mxu0
  %v805 = vadd.f32 0.0, %v804
  %v806 = vpop.f32.mrf.mxu0
  %v807 = vadd.f32 0.0, %v806
  %808 = vmatmul.bf16.gmra.mxu0 %v480
  %v809 = vpop.f32.mrf.mxu0
  %v810 = vadd.f32 0.0, %v809
  %v811 = vpop.f32.mrf.mxu0
  %v812 = vadd.f32 0.0, %v811
  %813 = vmatmul.bf16.gmra.mxu0 %v482
  %v814 = vpop.f32.mrf.mxu0
  %v815 = vadd.f32 0.0, %v814
  %v816 = vpop.f32.mrf.mxu0
  %v817 = vadd.f32 0.0, %v816
  %818 = vmatmul.bf16.gmra.mxu0 %v484
  %v819 = vpop.f32.mrf.mxu0
  %v820 = vadd.f32 0.0, %v819
  %v821 = vpop.f32.mrf.mxu0
  %v822 = vadd.f32 0.0, %v821
  %823 = vmatmul.bf16.gmra.mxu0 %v486
  %v824 = vpop.f32.mrf.mxu0
  %v825 = vadd.f32 0.0, %v824
  %v826 = vpop.f32.mrf.mxu0
  %v827 = vadd.f32 0.0, %v826
  %828 = vmatmul.bf16.gmra.mxu0 %v488
  %v829 = vpop.f32.mrf.mxu0
  %v830 = vadd.f32 0.0, %v829
  %v831 = vpop.f32.mrf.mxu0
  %v832 = vadd.f32 0.0, %v831
  %833 = vmatmul.bf16.gmra.mxu0 %v490
  %v834 = vpop.f32.mrf.mxu0
  %v835 = vadd.f32 0.0, %v834
  %v836 = vpop.f32.mrf.mxu0
  %v837 = vadd.f32 0.0, %v836
  %838 = vmatmul.bf16.gmra.mxu0 %v492
  %v839 = vpop.f32.mrf.mxu0
  %v840 = vadd.f32 0.0, %v839
  %v841 = vpop.f32.mrf.mxu0
  %v842 = vadd.f32 0.0, %v841
  %843 = vmatmul.bf16.gmra.mxu0 %v494
  %v844 = vpop.f32.mrf.mxu0
  %v845 = vadd.f32 0.0, %v844
  %v846 = vpop.f32.mrf.mxu0
  %v847 = vadd.f32 0.0, %v846
  %848 = vmatmul.bf16.gmra.mxu0 %v496
  %v849 = vpop.f32.mrf.mxu0
  %v850 = vadd.f32 0.0, %v849
  %v851 = vpop.f32.mrf.mxu0
  %v852 = vadd.f32 0.0, %v851
  %853 = vmatmul.bf16.gmra.mxu0 %v498
  %v854 = vpop.f32.mrf.mxu0
  %v855 = vadd.f32 0.0, %v854
  %v856 = vpop.f32.mrf.mxu0
  %v857 = vadd.f32 0.0, %v856
  %858 = vmatmul.bf16.gmra.mxu0 %v500
  %v859 = vpop.f32.mrf.mxu0
  %v860 = vadd.f32 0.0, %v859
  %v861 = vpop.f32.mrf.mxu0
  %v862 = vadd.f32 0.0, %v861
  %863 = vmatmul.bf16.gmra.mxu0 %v502
  %v864 = vpop.f32.mrf.mxu0
  %v865 = vadd.f32 0.0, %v864
  %v866 = vpop.f32.mrf.mxu0
  %v867 = vadd.f32 0.0, %v866
  %868 = vmatmul.bf16.gmra.mxu0 %v504
  %v869 = vpop.f32.mrf.mxu0
  %v870 = vadd.f32 0.0, %v869
  %v871 = vpop.f32.mrf.mxu0
  %v872 = vadd.f32 0.0, %v871
  %873 = vmatmul.bf16.gmra.mxu0 %v506
  %v874 = vpop.f32.mrf.mxu0
  %v875 = vadd.f32 0.0, %v874
  %v876 = vpop.f32.mrf.mxu0
  %v877 = vadd.f32 0.0, %v876
  %878 = vmatmul.bf16.gmra.mxu0 %v508
  %v879 = vpop.f32.mrf.mxu0
  %v880 = vadd.f32 0.0, %v879
  %v881 = vpop.f32.mrf.mxu0
  %v882 = vadd.f32 0.0, %v881
  %883 = vmatmul.bf16.gmra.mxu0 %v510
  %v884 = vpop.f32.mrf.mxu0
  %v885 = vadd.f32 0.0, %v884
  %v886 = vpop.f32.mrf.mxu0
  %v887 = vadd.f32 0.0, %v886
  %888 = vmatmul.bf16.gmra.mxu0 %v512
  %v889 = vpop.f32.mrf.mxu0
  %v890 = vadd.f32 0.0, %v889
  %v891 = vpop.f32.mrf.mxu0
  %v892 = vadd.f32 0.0, %v891
  %893 = vmatmul.bf16.gmra.mxu0 %v514
  %v894 = vpop.f32.mrf.mxu0
  %v895 = vadd.f32 0.0, %v894
  %v896 = vpop.f32.mrf.mxu0
  %v897 = vadd.f32 0.0, %v896
  %898 = vmatmul.bf16.gmra.mxu0 %v516
  %v899 = vpop.f32.mrf.mxu0
  %v900 = vadd.f32 0.0, %v899
  %v901 = vpop.f32.mrf.mxu0
  %v902 = vadd.f32 0.0, %v901
  %903 = vmatmul.bf16.gmra.mxu0 %v518
  %v904 = vpop.f32.mrf.mxu0
  %v905 = vadd.f32 0.0, %v904
  %v906 = vpop.f32.mrf.mxu0
  %v907 = vadd.f32 0.0, %v906
  %908 = vmatmul.bf16.gmra.mxu0 %v520
  %v909 = vpop.f32.mrf.mxu0
  %v910 = vadd.f32 0.0, %v909
  %v911 = vpop.f32.mrf.mxu0
  %v912 = vadd.f32 0.0, %v911
  %913 = vmatmul.bf16.gmra.mxu0 %v522
  %v914 = vpop.f32.mrf.mxu0
  %v915 = vadd.f32 0.0, %v914
  %v916 = vpop.f32.mrf.mxu0
  %v917 = vadd.f32 0.0, %v916
  %918 = vmatmul.bf16.gmra.mxu0 %v524
  %v919 = vpop.f32.mrf.mxu0
  %v920 = vadd.f32 0.0, %v919
  %v921 = vpop.f32.mrf.mxu0
  %v922 = vadd.f32 0.0, %v921
  %923 = vmatmul.bf16.gmra.mxu0 %v526
  %v924 = vpop.f32.mrf.mxu0
  %v925 = vadd.f32 0.0, %v924
  %v926 = vpop.f32.mrf.mxu0
  %v927 = vadd.f32 0.0, %v926
  %928 = vmatmul.bf16.gmra.mxu0 %v528
  %v929 = vpop.f32.mrf.mxu0
  %v930 = vadd.f32 0.0, %v929
  %v931 = vpop.f32.mrf.mxu0
  %v932 = vadd.f32 0.0, %v931
  %933 = vmatmul.bf16.gmra.mxu0 %v530
  %v934 = vpop.f32.mrf.mxu0
  %v935 = vadd.f32 0.0, %v934
  %v936 = vpop.f32.mrf.mxu0
  %v937 = vadd.f32 0.0, %v936
  %938 = vmatmul.bf16.gmra.mxu0 %v532
  %v939 = vpop.f32.mrf.mxu0
  %v940 = vadd.f32 0.0, %v939
  %v941 = vpop.f32.mrf.mxu0
  %v942 = vadd.f32 0.0, %v941
  %943 = vmatmul.bf16.gmra.mxu0 %v534
  %v944 = vpop.f32.mrf.mxu0
  %v945 = vadd.f32 0.0, %v944
  %v946 = vpop.f32.mrf.mxu0
  %v947 = vadd.f32 0.0, %v946
  %948 = vmatmul.bf16.gmra.mxu0 %v536
  %v949 = vpop.f32.mrf.mxu0
  %v950 = vadd.f32 0.0, %v949
  %v951 = vpop.f32.mrf.mxu0
  %v952 = vadd.f32 0.0, %v951
  %953 = vmatmul.bf16.gmra.mxu0 %v538
  %v954 = vpop.f32.mrf.mxu0
  %v955 = vadd.f32 0.0, %v954
  %v956 = vpop.f32.mrf.mxu0
  %v957 = vadd.f32 0.0, %v956
  %958 = vmatmul.bf16.gmra.mxu0 %v540
  %v959 = vpop.f32.mrf.mxu0
  %v960 = vadd.f32 0.0, %v959
  %v961 = vpop.f32.mrf.mxu0
  %v962 = vadd.f32 0.0, %v961
  %963 = vmatmul.bf16.gmra.mxu0 %v542
  %v964 = vpop.f32.mrf.mxu0
  %v965 = vadd.f32 0.0, %v964
  %v966 = vpop.f32.mrf.mxu0
  %v967 = vadd.f32 0.0, %v966
  %968 = vmatmul.bf16.gmra.mxu0 %v544
  %v969 = vpop.f32.mrf.mxu0
  %v970 = vadd.f32 0.0, %v969
  %v971 = vpop.f32.mrf.mxu0
  %v972 = vadd.f32 0.0, %v971
  %973 = vmatmul.bf16.gmra.mxu0 %v546
  %v974 = vpop.f32.mrf.mxu0
  %v975 = vadd.f32 0.0, %v974
  %v976 = vpop.f32.mrf.mxu0
  %v977 = vadd.f32 0.0, %v976
  %978 = vmatmul.bf16.gmra.mxu0 %v548
  %v979 = vpop.f32.mrf.mxu0
  %v980 = vadd.f32 0.0, %v979
  %v981 = vpop.f32.mrf.mxu0
  %v982 = vadd.f32 0.0, %v981
  %983 = vmatmul.bf16.gmra.mxu0 %v550
  %v984 = vpop.f32.mrf.mxu0
  %v985 = vadd.f32 0.0, %v984
  %v986 = vpop.f32.mrf.mxu0
  %v987 = vadd.f32 0.0, %v986
  %988 = vmatmul.bf16.gmra.mxu0 %v552
  %v989 = vpop.f32.mrf.mxu0
  %v990 = vadd.f32 0.0, %v989
  %v991 = vpop.f32.mrf.mxu0
  %v992 = vadd.f32 0.0, %v991
  %993 = vmatmul.bf16.gmra.mxu0 %v554
  %v994 = vpop.f32.mrf.mxu0
  %v995 = vadd.f32 0.0, %v994
  %v996 = vpop.f32.mrf.mxu0
  %v997 = vadd.f32 0.0, %v996
  %998 = vmatmul.bf16.gmra.mxu0 %v556
  %v999 = vpop.f32.mrf.mxu0
  %v1000 = vadd.f32 0.0, %v999
  %v1001 = vpop.f32.mrf.mxu0
  %v1002 = vadd.f32 0.0, %v1001
  %1003 = vmatmul.bf16.gmra.mxu0 %v558
  %v1004 = vpop.f32.mrf.mxu0
  %v1005 = vadd.f32 0.0, %v1004
  %v1006 = vpop.f32.mrf.mxu0
  %v1007 = vadd.f32 0.0, %v1006
  %1008 = vmatmul.bf16.gmra.mxu0 %v560
  %v1009 = vpop.f32.mrf.mxu0
  %v1010 = vadd.f32 0.0, %v1009
  %v1011 = vpop.f32.mrf.mxu0
  %v1012 = vadd.f32 0.0, %v1011
  %1013 = vmatmul.bf16.gmra.mxu0 %v562
  %v1014 = vpop.f32.mrf.mxu0
  %v1015 = vadd.f32 0.0, %v1014
  %v1016 = vpop.f32.mrf.mxu0
  %v1017 = vadd.f32 0.0, %v1016
  %1018 = vdwg.mxu0
  %1019 = vmatpush.bf16.msra.mxu0 %v743
  %1020 = vmatpush.bf16.msra.mxu0 %v742
  %1021 = vmatpush.bf16.msra.mxu0 %v741
  %1022 = vmatpush.bf16.msra.mxu0 %v740
  %1023 = vmatpush.bf16.msra.mxu0 %v739
  %1024 = vmatpush.bf16.msra.mxu0 %v738
  %1025 = vmatpush.bf16.msra.mxu0 %v737
  %1026 = vmatpush.bf16.msra.mxu0 %v736
  %1027 = vmatmul.bf16.gmra.mxu0 %v465
  %v1028 = vpop.f32.mrf.mxu0
  %v1029 = vadd.f32 %v770, %v1028
  %v1030 = vpop.f32.mrf.mxu0
  %v1031 = vadd.f32 %v772, %v1030
  %1032 = vmatmul.bf16.gmra.mxu0 %v467
  %v1033 = vpop.f32.mrf.mxu0
  %v1034 = vadd.f32 %v775, %v1033
  %v1035 = vpop.f32.mrf.mxu0
  %v1036 = vadd.f32 %v777, %v1035
  %1037 = vmatmul.bf16.gmra.mxu0 %v469
  %v1038 = vpop.f32.mrf.mxu0
  %v1039 = vadd.f32 %v780, %v1038
  %v1040 = vpop.f32.mrf.mxu0
  %v1041 = vadd.f32 %v782, %v1040
  %1042 = vmatmul.bf16.gmra.mxu0 %v471
  %v1043 = vpop.f32.mrf.mxu0
  %v1044 = vadd.f32 %v785, %v1043
  %v1045 = vpop.f32.mrf.mxu0
  %v1046 = vadd.f32 %v787, %v1045
  %1047 = vmatmul.bf16.gmra.mxu0 %v473
  %v1048 = vpop.f32.mrf.mxu0
  %v1049 = vadd.f32 %v790, %v1048
  %v1050 = vpop.f32.mrf.mxu0
  %v1051 = vadd.f32 %v792, %v1050
  %1052 = vmatmul.bf16.gmra.mxu0 %v475
  %v1053 = vpop.f32.mrf.mxu0
  %v1054 = vadd.f32 %v795, %v1053
  %v1055 = vpop.f32.mrf.mxu0
  %v1056 = vadd.f32 %v797, %v1055
  %1057 = vmatmul.bf16.gmra.mxu0 %v477
  %v1058 = vpop.f32.mrf.mxu0
  %v1059 = vadd.f32 %v800, %v1058
  %v1060 = vpop.f32.mrf.mxu0
  %v1061 = vadd.f32 %v802, %v1060
  %1062 = vmatmul.bf16.gmra.mxu0 %v479
  %v1063 = vpop.f32.mrf.mxu0
  %v1064 = vadd.f32 %v805, %v1063
  %v1065 = vpop.f32.mrf.mxu0
  %v1066 = vadd.f32 %v807, %v1065
  %1067 = vmatmul.bf16.gmra.mxu0 %v481
  %v1068 = vpop.f32.mrf.mxu0
  %v1069 = vadd.f32 %v810, %v1068
  %v1070 = vpop.f32.mrf.mxu0
  %v1071 = vadd.f32 %v812, %v1070
  %1072 = vmatmul.bf16.gmra.mxu0 %v483
  %v1073 = vpop.f32.mrf.mxu0
  %v1074 = vadd.f32 %v815, %v1073
  %v1075 = vpop.f32.mrf.mxu0
  %v1076 = vadd.f32 %v817, %v1075
  %1077 = vmatmul.bf16.gmra.mxu0 %v485
  %v1078 = vpop.f32.mrf.mxu0
  %v1079 = vadd.f32 %v820, %v1078
  %v1080 = vpop.f32.mrf.mxu0
  %v1081 = vadd.f32 %v822, %v1080
  %1082 = vmatmul.bf16.gmra.mxu0 %v487
  %v1083 = vpop.f32.mrf.mxu0
  %v1084 = vadd.f32 %v825, %v1083
  %v1085 = vpop.f32.mrf.mxu0
  %v1086 = vadd.f32 %v827, %v1085
  %1087 = vmatmul.bf16.gmra.mxu0 %v489
  %v1088 = vpop.f32.mrf.mxu0
  %v1089 = vadd.f32 %v830, %v1088
  %v1090 = vpop.f32.mrf.mxu0
  %v1091 = vadd.f32 %v832, %v1090
  %1092 = vmatmul.bf16.gmra.mxu0 %v491
  %v1093 = vpop.f32.mrf.mxu0
  %v1094 = vadd.f32 %v835, %v1093
  %v1095 = vpop.f32.mrf.mxu0
  %v1096 = vadd.f32 %v837, %v1095
  %1097 = vmatmul.bf16.gmra.mxu0 %v493
  %v1098 = vpop.f32.mrf.mxu0
  %v1099 = vadd.f32 %v840, %v1098
  %v1100 = vpop.f32.mrf.mxu0
  %v1101 = vadd.f32 %v842, %v1100
  %1102 = vmatmul.bf16.gmra.mxu0 %v495
  %v1103 = vpop.f32.mrf.mxu0
  %v1104 = vadd.f32 %v845, %v1103
  %v1105 = vpop.f32.mrf.mxu0
  %v1106 = vadd.f32 %v847, %v1105
  %1107 = vmatmul.bf16.gmra.mxu0 %v497
  %v1108 = vpop.f32.mrf.mxu0
  %v1109 = vadd.f32 %v850, %v1108
  %v1110 = vpop.f32.mrf.mxu0
  %v1111 = vadd.f32 %v852, %v1110
  %1112 = vmatmul.bf16.gmra.mxu0 %v499
  %v1113 = vpop.f32.mrf.mxu0
  %v1114 = vadd.f32 %v855, %v1113
  %v1115 = vpop.f32.mrf.mxu0
  %v1116 = vadd.f32 %v857, %v1115
  %1117 = vmatmul.bf16.gmra.mxu0 %v501
  %v1118 = vpop.f32.mrf.mxu0
  %v1119 = vadd.f32 %v860, %v1118
  %v1120 = vpop.f32.mrf.mxu0
  %v1121 = vadd.f32 %v862, %v1120
  %1122 = vmatmul.bf16.gmra.mxu0 %v503
  %v1123 = vpop.f32.mrf.mxu0
  %v1124 = vadd.f32 %v865, %v1123
  %v1125 = vpop.f32.mrf.mxu0
  %v1126 = vadd.f32 %v867, %v1125
  %1127 = vmatmul.bf16.gmra.mxu0 %v505
  %v1128 = vpop.f32.mrf.mxu0
  %v1129 = vadd.f32 %v870, %v1128
  %v1130 = vpop.f32.mrf.mxu0
  %v1131 = vadd.f32 %v872, %v1130
  %1132 = vmatmul.bf16.gmra.mxu0 %v507
  %v1133 = vpop.f32.mrf.mxu0
  %v1134 = vadd.f32 %v875, %v1133
  %v1135 = vpop.f32.mrf.mxu0
  %v1136 = vadd.f32 %v877, %v1135
  %1137 = vmatmul.bf16.gmra.mxu0 %v509
  %v1138 = vpop.f32.mrf.mxu0
  %v1139 = vadd.f32 %v880, %v1138
  %v1140 = vpop.f32.mrf.mxu0
  %v1141 = vadd.f32 %v882, %v1140
  %1142 = vmatmul.bf16.gmra.mxu0 %v511
  %v1143 = vpop.f32.mrf.mxu0
  %v1144 = vadd.f32 %v885, %v1143
  %v1145 = vpop.f32.mrf.mxu0
  %v1146 = vadd.f32 %v887, %v1145
  %1147 = vmatmul.bf16.gmra.mxu0 %v513
  %v1148 = vpop.f32.mrf.mxu0
  %v1149 = vadd.f32 %v890, %v1148
  %v1150 = vpop.f32.mrf.mxu0
  %v1151 = vadd.f32 %v892, %v1150
  %1152 = vmatmul.bf16.gmra.mxu0 %v515
  %v1153 = vpop.f32.mrf.mxu0
  %v1154 = vadd.f32 %v895, %v1153
  %v1155 = vpop.f32.mrf.mxu0
  %v1156 = vadd.f32 %v897, %v1155
  %1157 = vmatmul.bf16.gmra.mxu0 %v517
  %v1158 = vpop.f32.mrf.mxu0
  %v1159 = vadd.f32 %v900, %v1158
  %v1160 = vpop.f32.mrf.mxu0
  %v1161 = vadd.f32 %v902, %v1160
  %1162 = vmatmul.bf16.gmra.mxu0 %v519
  %v1163 = vpop.f32.mrf.mxu0
  %v1164 = vadd.f32 %v905, %v1163
  %v1165 = vpop.f32.mrf.mxu0
  %v1166 = vadd.f32 %v907, %v1165
  %1167 = vmatmul.bf16.gmra.mxu0 %v521
  %v1168 = vpop.f32.mrf.mxu0
  %v1169 = vadd.f32 %v910, %v1168
  %v1170 = vpop.f32.mrf.mxu0
  %v1171 = vadd.f32 %v912, %v1170
  %1172 = vmatmul.bf16.gmra.mxu0 %v523
  %v1173 = vpop.f32.mrf.mxu0
  %v1174 = vadd.f32 %v915, %v1173
  %v1175 = vpop.f32.mrf.mxu0
  %v1176 = vadd.f32 %v917, %v1175
  %1177 = vmatmul.bf16.gmra.mxu0 %v525
  %v1178 = vpop.f32.mrf.mxu0
  %v1179 = vadd.f32 %v920, %v1178
  %v1180 = vpop.f32.mrf.mxu0
  %v1181 = vadd.f32 %v922, %v1180
  %1182 = vmatmul.bf16.gmra.mxu0 %v527
  %v1183 = vpop.f32.mrf.mxu0
  %v1184 = vadd.f32 %v925, %v1183
  %v1185 = vpop.f32.mrf.mxu0
  %v1186 = vadd.f32 %v927, %v1185
  %1187 = vmatmul.bf16.gmra.mxu0 %v529
  %v1188 = vpop.f32.mrf.mxu0
  %v1189 = vadd.f32 %v930, %v1188
  %v1190 = vpop.f32.mrf.mxu0
  %v1191 = vadd.f32 %v932, %v1190
  %1192 = vmatmul.bf16.gmra.mxu0 %v531
  %v1193 = vpop.f32.mrf.mxu0
  %v1194 = vadd.f32 %v935, %v1193
  %v1195 = vpop.f32.mrf.mxu0
  %v1196 = vadd.f32 %v937, %v1195
  %1197 = vmatmul.bf16.gmra.mxu0 %v533
  %v1198 = vpop.f32.mrf.mxu0
  %v1199 = vadd.f32 %v940, %v1198
  %v1200 = vpop.f32.mrf.mxu0
  %v1201 = vadd.f32 %v942, %v1200
  %1202 = vmatmul.bf16.gmra.mxu0 %v535
  %v1203 = vpop.f32.mrf.mxu0
  %v1204 = vadd.f32 %v945, %v1203
  %v1205 = vpop.f32.mrf.mxu0
  %v1206 = vadd.f32 %v947, %v1205
  %1207 = vmatmul.bf16.gmra.mxu0 %v537
  %v1208 = vpop.f32.mrf.mxu0
  %v1209 = vadd.f32 %v950, %v1208
  %v1210 = vpop.f32.mrf.mxu0
  %v1211 = vadd.f32 %v952, %v1210
  %1212 = vmatmul.bf16.gmra.mxu0 %v539
  %v1213 = vpop.f32.mrf.mxu0
  %v1214 = vadd.f32 %v955, %v1213
  %v1215 = vpop.f32.mrf.mxu0
  %v1216 = vadd.f32 %v957, %v1215
  %1217 = vmatmul.bf16.gmra.mxu0 %v541
  %v1218 = vpop.f32.mrf.mxu0
  %v1219 = vadd.f32 %v960, %v1218
  %v1220 = vpop.f32.mrf.mxu0
  %v1221 = vadd.f32 %v962, %v1220
  %1222 = vmatmul.bf16.gmra.mxu0 %v543
  %v1223 = vpop.f32.mrf.mxu0
  %v1224 = vadd.f32 %v965, %v1223
  %v1225 = vpop.f32.mrf.mxu0
  %v1226 = vadd.f32 %v967, %v1225
  %1227 = vmatmul.bf16.gmra.mxu0 %v545
  %v1228 = vpop.f32.mrf.mxu0
  %v1229 = vadd.f32 %v970, %v1228
  %v1230 = vpop.f32.mrf.mxu0
  %v1231 = vadd.f32 %v972, %v1230
  %1232 = vmatmul.bf16.gmra.mxu0 %v547
  %v1233 = vpop.f32.mrf.mxu0
  %v1234 = vadd.f32 %v975, %v1233
  %v1235 = vpop.f32.mrf.mxu0
  %v1236 = vadd.f32 %v977, %v1235
  %1237 = vmatmul.bf16.gmra.mxu0 %v549
  %v1238 = vpop.f32.mrf.mxu0
  %v1239 = vadd.f32 %v980, %v1238
  %v1240 = vpop.f32.mrf.mxu0
  %v1241 = vadd.f32 %v982, %v1240
  %1242 = vmatmul.bf16.gmra.mxu0 %v551
  %v1243 = vpop.f32.mrf.mxu0
  %v1244 = vadd.f32 %v985, %v1243
  %v1245 = vpop.f32.mrf.mxu0
  %v1246 = vadd.f32 %v987, %v1245
  %1247 = vmatmul.bf16.gmra.mxu0 %v553
  %v1248 = vpop.f32.mrf.mxu0
  %v1249 = vadd.f32 %v990, %v1248
  %v1250 = vpop.f32.mrf.mxu0
  %v1251 = vadd.f32 %v992, %v1250
  %1252 = vmatmul.bf16.gmra.mxu0 %v555
  %v1253 = vpop.f32.mrf.mxu0
  %v1254 = vadd.f32 %v995, %v1253
  %v1255 = vpop.f32.mrf.mxu0
  %v1256 = vadd.f32 %v997, %v1255
  %1257 = vmatmul.bf16.gmra.mxu0 %v557
  %v1258 = vpop.f32.mrf.mxu0
  %v1259 = vadd.f32 %v1000, %v1258
  %v1260 = vpop.f32.mrf.mxu0
  %v1261 = vadd.f32 %v1002, %v1260
  %1262 = vmatmul.bf16.gmra.mxu0 %v559
  %v1263 = vpop.f32.mrf.mxu0
  %v1264 = vadd.f32 %v1005, %v1263
  %v1265 = vpop.f32.mrf.mxu0
  %v1266 = vadd.f32 %v1007, %v1265
  %1267 = vmatmul.bf16.gmra.mxu0 %v561
  %v1268 = vpop.f32.mrf.mxu0
  %v1269 = vadd.f32 %v1010, %v1268
  %v1270 = vpop.f32.mrf.mxu0
  %v1271 = vadd.f32 %v1012, %v1270
  %1272 = vmatmul.bf16.gmra.mxu0 %v563
  %v1273 = vpop.f32.mrf.mxu0
  %v1274 = vadd.f32 %v1015, %v1273
  %v1275 = vpop.f32.mrf.mxu0
  %v1276 = vadd.f32 %v1017, %v1275
  %1277 = vdwg.mxu0
  %v1278 = vmax.f32 %v1029, %v1091
  %v1279 = vmax.f32 %v1278, %v1154
  %v1280 = vmax.f32 %v1279, %v1216
  %v1281 = vmax.f32 %v1031, %v1094
  %v1282 = vmax.f32 %v1281, %v1156
  %v1283 = vmax.f32 %v1282, %v1219
  %v1284 = vmax.f32 %v1034, %v1096
  %v1285 = vmax.f32 %v1284, %v1159
  %v1286 = vmax.f32 %v1285, %v1221
  %v1287 = vmax.f32 %v1036, %v1099
  %v1288 = vmax.f32 %v1287, %v1161
  %v1289 = vmax.f32 %v1288, %v1224
  %v1290 = vmax.f32 %v1039, %v1101
  %v1291 = vmax.f32 %v1290, %v1164
  %v1292 = vmax.f32 %v1291, %v1226
  %v1293 = vmax.f32 %v1041, %v1104
  %v1294 = vmax.f32 %v1293, %v1166
  %v1295 = vmax.f32 %v1294, %v1229
  %v1296 = vmax.f32 %v1044, %v1106
  %v1297 = vmax.f32 %v1296, %v1169
  %v1298 = vmax.f32 %v1297, %v1231
  %v1299 = vmax.f32 %v1046, %v1109
  %v1300 = vmax.f32 %v1299, %v1171
  %v1301 = vmax.f32 %v1300, %v1234
  %v1302 = vmax.f32 %v1049, %v1111
  %v1303 = vmax.f32 %v1302, %v1174
  %v1304 = vmax.f32 %v1303, %v1236
  %v1305 = vmax.f32 %v1051, %v1114
  %v1306 = vmax.f32 %v1305, %v1176
  %v1307 = vmax.f32 %v1306, %v1239
  %v1308 = vmax.f32 %v1054, %v1116
  %v1309 = vmax.f32 %v1308, %v1179
  %v1310 = vmax.f32 %v1309, %v1241
  %v1311 = vmax.f32 %v1056, %v1119
  %v1312 = vmax.f32 %v1311, %v1181
  %v1313 = vmax.f32 %v1312, %v1244
  %v1314 = vmax.f32 %v1059, %v1121
  %v1315 = vmax.f32 %v1314, %v1184
  %v1316 = vmax.f32 %v1315, %v1246
  %v1317 = vmax.f32 %v1061, %v1124
  %v1318 = vmax.f32 %v1317, %v1186
  %v1319 = vmax.f32 %v1318, %v1249
  %v1320 = vmax.f32 %v1064, %v1126
  %v1321 = vmax.f32 %v1320, %v1189
  %v1322 = vmax.f32 %v1321, %v1251
  %v1323 = vmax.f32 %v1066, %v1129
  %v1324 = vmax.f32 %v1323, %v1191
  %v1325 = vmax.f32 %v1324, %v1254
  %v1326 = vmax.f32 %v1069, %v1131
  %v1327 = vmax.f32 %v1326, %v1194
  %v1328 = vmax.f32 %v1327, %v1256
  %v1329 = vmax.f32 %v1071, %v1134
  %v1330 = vmax.f32 %v1329, %v1196
  %v1331 = vmax.f32 %v1330, %v1259
  %v1332 = vmax.f32 %v1074, %v1136
  %v1333 = vmax.f32 %v1332, %v1199
  %v1334 = vmax.f32 %v1333, %v1261
  %v1335 = vmax.f32 %v1076, %v1139
  %v1336 = vmax.f32 %v1335, %v1201
  %v1337 = vmax.f32 %v1336, %v1264
  %v1338 = vmax.f32 %v1079, %v1141
  %v1339 = vmax.f32 %v1338, %v1204
  %v1340 = vmax.f32 %v1339, %v1266
  %v1341 = vmax.f32 %v1081, %v1144
  %v1342 = vmax.f32 %v1341, %v1206
  %v1343 = vmax.f32 %v1342, %v1269
  %v1344 = vmax.f32 %v1084, %v1146
  %v1345 = vmax.f32 %v1344, %v1209
  %v1346 = vmax.f32 %v1345, %v1271
  %v1347 = vmax.f32 %v1086, %v1149
  %v1348 = vmax.f32 %v1347, %v1211
  %v1349 = vmax.f32 %v1348, %v1274
  %v1350 = vmax.f32 %v1089, %v1151
  %v1351 = vmax.f32 %v1350, %v1214
  %v1352 = vmax.f32 %v1351, %v1276
  %v1353 = vld [vmem:[%s2] sm:$0x1]
  %v1355 = vperm.slane %v1353, 0
  %v1357 = vadd.f32 %v1280, %v1355
  %v1358 = vadd.f32 %v1283, %v1355
  %v1359 = vadd.f32 %v1286, %v1355
  %v1360 = vadd.f32 %v1289, %v1355
  %v1361 = vadd.f32 %v1292, %v1355
  %v1362 = vadd.f32 %v1295, %v1355
  %v1363 = vadd.f32 %v1298, %v1355
  %v1364 = vadd.f32 %v1301, %v1355
  %v1365 = vadd.f32 %v1304, %v1355
  %v1366 = vadd.f32 %v1307, %v1355
  %v1367 = vadd.f32 %v1310, %v1355
  %v1368 = vadd.f32 %v1313, %v1355
  %v1369 = vadd.f32 %v1316, %v1355
  %v1370 = vadd.f32 %v1319, %v1355
  %v1371 = vadd.f32 %v1322, %v1355
  %v1372 = vadd.f32 %v1325, %v1355
  %v1373 = vadd.f32 %v1328, %v1355
  %v1374 = vadd.f32 %v1331, %v1355
  %v1375 = vadd.f32 %v1334, %v1355
  %v1376 = vadd.f32 %v1337, %v1355
  %v1377 = vadd.f32 %v1340, %v1355
  %v1378 = vadd.f32 %v1343, %v1355
  %v1379 = vadd.f32 %v1346, %v1355
  %v1380 = vadd.f32 %v1349, %v1355
  %v1381 = vadd.f32 %v1352, %v1355
  %v1382 = vmax.f32 %v1357, 0.0
  %v1383 = vmax.f32 %v1358, 0.0
  %v1384 = vmax.f32 %v1359, 0.0
  %v1385 = vmax.f32 %v1360, 0.0
  %v1386 = vmax.f32 %v1361, 0.0
  %v1387 = vmax.f32 %v1362, 0.0
  %v1388 = vmax.f32 %v1363, 0.0
  %v1389 = vmax.f32 %v1364, 0.0
  %v1390 = vmax.f32 %v1365, 0.0
  %v1391 = vmax.f32 %v1366, 0.0
  %v1392 = vmax.f32 %v1367, 0.0
  %v1393 = vmax.f32 %v1368, 0.0
  %v1394 = vmax.f32 %v1369, 0.0
  %v1395 = vmax.f32 %v1370, 0.0
  %v1396 = vmax.f32 %v1371, 0.0
  %v1397 = vmax.f32 %v1372, 0.0
  %v1398 = vmax.f32 %v1373, 0.0
  %v1399 = vmax.f32 %v1374, 0.0
  %v1400 = vmax.f32 %v1375, 0.0
  %v1401 = vmax.f32 %v1376, 0.0
  %v1402 = vmax.f32 %v1377, 0.0
  %v1403 = vmax.f32 %v1378, 0.0
  %v1404 = vmax.f32 %v1379, 0.0
  %v1405 = vmax.f32 %v1380, 0.0
  %v1406 = vmax.f32 %v1381, 0.0
  %v1407 = vpack.c.bf16 %v1382, %v1382
  %v1408 = vpack.c.bf16 %v1383, %v1383
  %v1409 = vpack.c.bf16 %v1384, %v1384
  %v1410 = vpack.c.bf16 %v1385, %v1385
  %v1411 = vpack.c.bf16 %v1386, %v1386
  %v1412 = vpack.c.bf16 %v1387, %v1387
  %v1413 = vpack.c.bf16 %v1388, %v1388
  %v1414 = vpack.c.bf16 %v1389, %v1389
  %v1415 = vpack.c.bf16 %v1390, %v1390
  %v1416 = vpack.c.bf16 %v1391, %v1391
  %v1417 = vpack.c.bf16 %v1392, %v1392
  %v1418 = vpack.c.bf16 %v1393, %v1393
  %v1419 = vpack.c.bf16 %v1394, %v1394
  %v1420 = vpack.c.bf16 %v1395, %v1395
  %v1421 = vpack.c.bf16 %v1396, %v1396
  %v1422 = vpack.c.bf16 %v1397, %v1397
  %v1423 = vpack.c.bf16 %v1398, %v1398
  %v1424 = vpack.c.bf16 %v1399, %v1399
  %v1425 = vpack.c.bf16 %v1400, %v1400
  %v1426 = vpack.c.bf16 %v1401, %v1401
  %v1427 = vpack.c.bf16 %v1402, %v1402
  %v1428 = vpack.c.bf16 %v1403, %v1403
  %v1429 = vpack.c.bf16 %v1404, %v1404
  %v1430 = vpack.c.bf16 %v1405, %v1405
  %v1431 = vpack.c.bf16 %v1406, %v1406
  %v1432 = vld [vmem:[%s3] sm:$0xf]
  %v1433 = vld [vmem:[%s3 + $0x4] sm:$0xf]
  %v1434 = vld [vmem:[%s3 + $0x8] sm:$0xf]
  %v1435 = vld [vmem:[%s3 + $0xc] sm:$0xf]
  %v1436 = vld [vmem:[%s3 + $0x10] sm:$0xf]
  %v1437 = vld [vmem:[%s3 + $0x14] sm:$0xf]
  %v1438 = vld [vmem:[%s3 + $0x18] sm:$0xf]
  %v1439 = vld [vmem:[%s3 + $0x1c] sm:$0xf]
  %v1440 = vld [vmem:[%s3 + $0x20] sm:$0xf]
  %v1441 = vld [vmem:[%s3 + $0x24] sm:$0xf]
  %v1442 = vld [vmem:[%s3 + $0x28] sm:$0xf]
  %v1443 = vld [vmem:[%s3 + $0x2c] sm:$0xf]
  %v1444 = vld [vmem:[%s3 + $0x30] sm:$0xf]
  %v1445 = vld [vmem:[%s3 + $0x34] sm:$0xf]
  %v1446 = vld [vmem:[%s3 + $0x38] sm:$0xf]
  %v1447 = vld [vmem:[%s3 + $0x3c] sm:$0xf]
  %s1448 = scalar_lea.vmem %s3, 64
  %v1449 = vld [vmem:[%s1448] sm:$0xf]
  %v1450 = vld [vmem:[%s1448 + $0x4] sm:$0xf]
  %v1451 = vld [vmem:[%s1448 + $0x8] sm:$0xf]
  %v1452 = vld [vmem:[%s1448 + $0xc] sm:$0xf]
  %v1453 = vld [vmem:[%s1448 + $0x10] sm:$0xf]
  %v1454 = vld [vmem:[%s1448 + $0x14] sm:$0xf]
  %v1455 = vld [vmem:[%s1448 + $0x18] sm:$0xf]
  %v1456 = vld [vmem:[%s1448 + $0x1c] sm:$0xf]
  %v1457 = vld [vmem:[%s1448 + $0x20] sm:$0xf]
  %v1458 = vld [vmem:[%s1448 + $0x24] sm:$0xf]
  %v1459 = vld [vmem:[%s1448 + $0x28] sm:$0xf]
  %v1460 = vld [vmem:[%s1448 + $0x2c] sm:$0xf]
  %v1461 = vld [vmem:[%s1448 + $0x30] sm:$0xf]
  %v1462 = vld [vmem:[%s1448 + $0x34] sm:$0xf]
  %v1463 = vld [vmem:[%s1448 + $0x38] sm:$0xf]
  %v1464 = vld [vmem:[%s1448 + $0x3c] sm:$0xf]
  %v1481 = vunpack.c.l.b16 %v1449
  %v1482 = vunpack.c.l.b16 %v1450
  %v1483 = vunpack.c.l.b16 %v1451
  %v1484 = vunpack.c.l.b16 %v1452
  %v1485 = vunpack.c.l.b16 %v1453
  %v1486 = vunpack.c.l.b16 %v1454
  %v1487 = vunpack.c.l.b16 %v1455
  %v1488 = vunpack.c.l.b16 %v1456
  %v1489 = vunpack.c.l.b16 %v1457
  %v1490 = vunpack.c.l.b16 %v1458
  %v1491 = vunpack.c.l.b16 %v1459
  %v1492 = vunpack.c.l.b16 %v1460
  %v1493 = vunpack.c.l.b16 %v1461
  %v1494 = vunpack.c.l.b16 %v1462
  %v1495 = vunpack.c.l.b16 %v1463
  %v1496 = vunpack.c.l.b16 %v1464
  %v1497 = vpack.c.b16 %v1482, %v1481
  %v1498 = vpack.c.b16 %v1484, %v1483
  %v1499 = vpack.c.b16 %v1486, %v1485
  %v1500 = vpack.c.b16 %v1488, %v1487
  %v1501 = vpack.c.b16 %v1490, %v1489
  %v1502 = vpack.c.b16 %v1492, %v1491
  %v1503 = vpack.c.b16 %v1494, %v1493
  %v1504 = vpack.c.b16 %v1496, %v1495
  %1513 = vmatpush.bf16.msra.mxu0 %v1504
  %1514 = vmatpush.bf16.msra.mxu0 %v1503
  %1515 = vmatpush.bf16.msra.mxu0 %v1502
  %1516 = vmatpush.bf16.msra.mxu0 %v1501
  %1517 = vmatpush.bf16.msra.mxu0 %v1500
  %1518 = vmatpush.bf16.msra.mxu0 %v1499
  %1519 = vmatpush.bf16.msra.mxu0 %v1498
  %1520 = vmatpush.bf16.msra.mxu0 %v1497
  %1521 = vmatmul.bf16.gmra.mxu0 %v1408
  %v1522 = vpop.f32.mrf.mxu0
  %v1523 = vadd.f32 0.0, %v1522
  %v1524 = vpop.f32.mrf.mxu0
  %1525 = vdwg.mxu0
  %v1542 = vunpack.c.l.b16 %v1432
  %v1543 = vunpack.c.l.b16 %v1433
  %v1544 = vunpack.c.l.b16 %v1434
  %v1545 = vunpack.c.l.b16 %v1435
  %v1546 = vunpack.c.l.b16 %v1436
  %v1547 = vunpack.c.l.b16 %v1437
  %v1548 = vunpack.c.l.b16 %v1438
  %v1549 = vunpack.c.l.b16 %v1439
  %v1550 = vunpack.c.l.b16 %v1440
  %v1551 = vunpack.c.l.b16 %v1441
  %v1552 = vunpack.c.l.b16 %v1442
  %v1553 = vunpack.c.l.b16 %v1443
  %v1554 = vunpack.c.l.b16 %v1444
  %v1555 = vunpack.c.l.b16 %v1445
  %v1556 = vunpack.c.l.b16 %v1446
  %v1557 = vunpack.c.l.b16 %v1447
  %v1558 = vpack.c.b16 %v1543, %v1542
  %v1559 = vpack.c.b16 %v1545, %v1544
  %v1560 = vpack.c.b16 %v1547, %v1546
  %v1561 = vpack.c.b16 %v1549, %v1548
  %v1562 = vpack.c.b16 %v1551, %v1550
  %v1563 = vpack.c.b16 %v1553, %v1552
  %v1564 = vpack.c.b16 %v1555, %v1554
  %v1565 = vpack.c.b16 %v1557, %v1556
  %1574 = vmatpush.bf16.msra.mxu0 %v1565
  %1575 = vmatpush.bf16.msra.mxu0 %v1564
  %1576 = vmatpush.bf16.msra.mxu0 %v1563
  %1577 = vmatpush.bf16.msra.mxu0 %v1562
  %1578 = vmatpush.bf16.msra.mxu0 %v1561
  %1579 = vmatpush.bf16.msra.mxu0 %v1560
  %1580 = vmatpush.bf16.msra.mxu0 %v1559
  %1581 = vmatpush.bf16.msra.mxu0 %v1558
  %1582 = vmatmul.bf16.gmra.mxu0 %v1407
  %v1583 = vpop.f32.mrf.mxu0
  %v1584 = vadd.f32 %v1523, %v1583
  %v1585 = vpop.f32.mrf.mxu0
  %1586 = vdwg.mxu0
  %s1587 = scalar_lea.vmem %s3, 128
  %v1588 = vld [vmem:[%s1587] sm:$0xf]
  %v1589 = vld [vmem:[%s1587 + $0x4] sm:$0xf]
  %v1590 = vld [vmem:[%s1587 + $0x8] sm:$0xf]
  %v1591 = vld [vmem:[%s1587 + $0xc] sm:$0xf]
  %v1592 = vld [vmem:[%s1587 + $0x10] sm:$0xf]
  %v1593 = vld [vmem:[%s1587 + $0x14] sm:$0xf]
  %v1594 = vld [vmem:[%s1587 + $0x18] sm:$0xf]
  %v1595 = vld [vmem:[%s1587 + $0x1c] sm:$0xf]
  %v1596 = vld [vmem:[%s1587 + $0x20] sm:$0xf]
  %v1597 = vld [vmem:[%s1587 + $0x24] sm:$0xf]
  %v1598 = vld [vmem:[%s1587 + $0x28] sm:$0xf]
  %v1599 = vld [vmem:[%s1587 + $0x2c] sm:$0xf]
  %v1600 = vld [vmem:[%s1587 + $0x30] sm:$0xf]
  %v1601 = vld [vmem:[%s1587 + $0x34] sm:$0xf]
  %v1602 = vld [vmem:[%s1587 + $0x38] sm:$0xf]
  %v1603 = vld [vmem:[%s1587 + $0x3c] sm:$0xf]
  %v1620 = vunpack.c.l.b16 %v1588
  %v1621 = vunpack.c.l.b16 %v1589
  %v1622 = vunpack.c.l.b16 %v1590
  %v1623 = vunpack.c.l.b16 %v1591
  %v1624 = vunpack.c.l.b16 %v1592
  %v1625 = vunpack.c.l.b16 %v1593
  %v1626 = vunpack.c.l.b16 %v1594
  %v1627 = vunpack.c.l.b16 %v1595
  %v1628 = vunpack.c.l.b16 %v1596
  %v1629 = vunpack.c.l.b16 %v1597
  %v1630 = vunpack.c.l.b16 %v1598
  %v1631 = vunpack.c.l.b16 %v1599
  %v1632 = vunpack.c.l.b16 %v1600
  %v1633 = vunpack.c.l.b16 %v1601
  %v1634 = vunpack.c.l.b16 %v1602
  %v1635 = vunpack.c.l.b16 %v1603
  %v1636 = vpack.c.b16 %v1621, %v1620
  %v1637 = vpack.c.b16 %v1623, %v1622
  %v1638 = vpack.c.b16 %v1625, %v1624
  %v1639 = vpack.c.b16 %v1627, %v1626
  %v1640 = vpack.c.b16 %v1629, %v1628
  %v1641 = vpack.c.b16 %v1631, %v1630
  %v1642 = vpack.c.b16 %v1633, %v1632
  %v1643 = vpack.c.b16 %v1635, %v1634
  %1652 = vmatpush.bf16.msra.mxu0 %v1643
  %1653 = vmatpush.bf16.msra.mxu0 %v1642
  %1654 = vmatpush.bf16.msra.mxu0 %v1641
  %1655 = vmatpush.bf16.msra.mxu0 %v1640
  %1656 = vmatpush.bf16.msra.mxu0 %v1639
  %1657 = vmatpush.bf16.msra.mxu0 %v1638
  %1658 = vmatpush.bf16.msra.mxu0 %v1637
  %1659 = vmatpush.bf16.msra.mxu0 %v1636
  %1660 = vmatmul.bf16.gmra.mxu0 %v1409
  %v1661 = vpop.f32.mrf.mxu0
  %v1662 = vadd.f32 0.0, %v1661
  %v1663 = vpop.f32.mrf.mxu0
  %1664 = vdwg.mxu0
  %v1665 = vadd.f32 %v1584, %v1662
  %s1666 = scalar_lea.vmem %s3, 192
  %v1667 = vld [vmem:[%s1666] sm:$0xf]
  %v1668 = vld [vmem:[%s1666 + $0x4] sm:$0xf]
  %v1669 = vld [vmem:[%s1666 + $0x8] sm:$0xf]
  %v1670 = vld [vmem:[%s1666 + $0xc] sm:$0xf]
  %v1671 = vld [vmem:[%s1666 + $0x10] sm:$0xf]
  %v1672 = vld [vmem:[%s1666 + $0x14] sm:$0xf]
  %v1673 = vld [vmem:[%s1666 + $0x18] sm:$0xf]
  %v1674 = vld [vmem:[%s1666 + $0x1c] sm:$0xf]
  %v1675 = vld [vmem:[%s1666 + $0x20] sm:$0xf]
  %v1676 = vld [vmem:[%s1666 + $0x24] sm:$0xf]
  %v1677 = vld [vmem:[%s1666 + $0x28] sm:$0xf]
  %v1678 = vld [vmem:[%s1666 + $0x2c] sm:$0xf]
  %v1679 = vld [vmem:[%s1666 + $0x30] sm:$0xf]
  %v1680 = vld [vmem:[%s1666 + $0x34] sm:$0xf]
  %v1681 = vld [vmem:[%s1666 + $0x38] sm:$0xf]
  %v1682 = vld [vmem:[%s1666 + $0x3c] sm:$0xf]
  %v1699 = vunpack.c.l.b16 %v1667
  %v1700 = vunpack.c.l.b16 %v1668
  %v1701 = vunpack.c.l.b16 %v1669
  %v1702 = vunpack.c.l.b16 %v1670
  %v1703 = vunpack.c.l.b16 %v1671
  %v1704 = vunpack.c.l.b16 %v1672
  %v1705 = vunpack.c.l.b16 %v1673
  %v1706 = vunpack.c.l.b16 %v1674
  %v1707 = vunpack.c.l.b16 %v1675
  %v1708 = vunpack.c.l.b16 %v1676
  %v1709 = vunpack.c.l.b16 %v1677
  %v1710 = vunpack.c.l.b16 %v1678
  %v1711 = vunpack.c.l.b16 %v1679
  %v1712 = vunpack.c.l.b16 %v1680
  %v1713 = vunpack.c.l.b16 %v1681
  %v1714 = vunpack.c.l.b16 %v1682
  %v1715 = vpack.c.b16 %v1700, %v1699
  %v1716 = vpack.c.b16 %v1702, %v1701
  %v1717 = vpack.c.b16 %v1704, %v1703
  %v1718 = vpack.c.b16 %v1706, %v1705
  %v1719 = vpack.c.b16 %v1708, %v1707
  %v1720 = vpack.c.b16 %v1710, %v1709
  %v1721 = vpack.c.b16 %v1712, %v1711
  %v1722 = vpack.c.b16 %v1714, %v1713
  %1731 = vmatpush.bf16.msra.mxu0 %v1722
  %1732 = vmatpush.bf16.msra.mxu0 %v1721
  %1733 = vmatpush.bf16.msra.mxu0 %v1720
  %1734 = vmatpush.bf16.msra.mxu0 %v1719
  %1735 = vmatpush.bf16.msra.mxu0 %v1718
  %1736 = vmatpush.bf16.msra.mxu0 %v1717
  %1737 = vmatpush.bf16.msra.mxu0 %v1716
  %1738 = vmatpush.bf16.msra.mxu0 %v1715
  %1739 = vmatmul.bf16.gmra.mxu0 %v1410
  %v1740 = vpop.f32.mrf.mxu0
  %v1741 = vadd.f32 0.0, %v1740
  %v1742 = vpop.f32.mrf.mxu0
  %1743 = vdwg.mxu0
  %v1744 = vadd.f32 %v1665, %v1741
  %s1745 = scalar_lea.vmem %s3, 256
  %v1746 = vld [vmem:[%s1745] sm:$0xf]
  %v1747 = vld [vmem:[%s1745 + $0x4] sm:$0xf]
  %v1748 = vld [vmem:[%s1745 + $0x8] sm:$0xf]
  %v1749 = vld [vmem:[%s1745 + $0xc] sm:$0xf]
  %v1750 = vld [vmem:[%s1745 + $0x10] sm:$0xf]
  %v1751 = vld [vmem:[%s1745 + $0x14] sm:$0xf]
  %v1752 = vld [vmem:[%s1745 + $0x18] sm:$0xf]
  %v1753 = vld [vmem:[%s1745 + $0x1c] sm:$0xf]
  %v1754 = vld [vmem:[%s1745 + $0x20] sm:$0xf]
  %v1755 = vld [vmem:[%s1745 + $0x24] sm:$0xf]
  %v1756 = vld [vmem:[%s1745 + $0x28] sm:$0xf]
  %v1757 = vld [vmem:[%s1745 + $0x2c] sm:$0xf]
  %v1758 = vld [vmem:[%s1745 + $0x30] sm:$0xf]
  %v1759 = vld [vmem:[%s1745 + $0x34] sm:$0xf]
  %v1760 = vld [vmem:[%s1745 + $0x38] sm:$0xf]
  %v1761 = vld [vmem:[%s1745 + $0x3c] sm:$0xf]
  %v1778 = vunpack.c.l.b16 %v1746
  %v1779 = vunpack.c.l.b16 %v1747
  %v1780 = vunpack.c.l.b16 %v1748
  %v1781 = vunpack.c.l.b16 %v1749
  %v1782 = vunpack.c.l.b16 %v1750
  %v1783 = vunpack.c.l.b16 %v1751
  %v1784 = vunpack.c.l.b16 %v1752
  %v1785 = vunpack.c.l.b16 %v1753
  %v1786 = vunpack.c.l.b16 %v1754
  %v1787 = vunpack.c.l.b16 %v1755
  %v1788 = vunpack.c.l.b16 %v1756
  %v1789 = vunpack.c.l.b16 %v1757
  %v1790 = vunpack.c.l.b16 %v1758
  %v1791 = vunpack.c.l.b16 %v1759
  %v1792 = vunpack.c.l.b16 %v1760
  %v1793 = vunpack.c.l.b16 %v1761
  %v1794 = vpack.c.b16 %v1779, %v1778
  %v1795 = vpack.c.b16 %v1781, %v1780
  %v1796 = vpack.c.b16 %v1783, %v1782
  %v1797 = vpack.c.b16 %v1785, %v1784
  %v1798 = vpack.c.b16 %v1787, %v1786
  %v1799 = vpack.c.b16 %v1789, %v1788
  %v1800 = vpack.c.b16 %v1791, %v1790
  %v1801 = vpack.c.b16 %v1793, %v1792
  %1810 = vmatpush.bf16.msra.mxu0 %v1801
  %1811 = vmatpush.bf16.msra.mxu0 %v1800
  %1812 = vmatpush.bf16.msra.mxu0 %v1799
  %1813 = vmatpush.bf16.msra.mxu0 %v1798
  %1814 = vmatpush.bf16.msra.mxu0 %v1797
  %1815 = vmatpush.bf16.msra.mxu0 %v1796
  %1816 = vmatpush.bf16.msra.mxu0 %v1795
  %1817 = vmatpush.bf16.msra.mxu0 %v1794
  %1818 = vmatmul.bf16.gmra.mxu0 %v1411
  %v1819 = vpop.f32.mrf.mxu0
  %v1820 = vadd.f32 0.0, %v1819
  %v1821 = vpop.f32.mrf.mxu0
  %1822 = vdwg.mxu0
  %v1823 = vadd.f32 %v1744, %v1820
  %s1824 = scalar_lea.vmem %s3, 320
  %v1825 = vld [vmem:[%s1824] sm:$0xf]
  %v1826 = vld [vmem:[%s1824 + $0x4] sm:$0xf]
  %v1827 = vld [vmem:[%s1824 + $0x8] sm:$0xf]
  %v1828 = vld [vmem:[%s1824 + $0xc] sm:$0xf]
  %v1829 = vld [vmem:[%s1824 + $0x10] sm:$0xf]
  %v1830 = vld [vmem:[%s1824 + $0x14] sm:$0xf]
  %v1831 = vld [vmem:[%s1824 + $0x18] sm:$0xf]
  %v1832 = vld [vmem:[%s1824 + $0x1c] sm:$0xf]
  %v1833 = vld [vmem:[%s1824 + $0x20] sm:$0xf]
  %v1834 = vld [vmem:[%s1824 + $0x24] sm:$0xf]
  %v1835 = vld [vmem:[%s1824 + $0x28] sm:$0xf]
  %v1836 = vld [vmem:[%s1824 + $0x2c] sm:$0xf]
  %v1837 = vld [vmem:[%s1824 + $0x30] sm:$0xf]
  %v1838 = vld [vmem:[%s1824 + $0x34] sm:$0xf]
  %v1839 = vld [vmem:[%s1824 + $0x38] sm:$0xf]
  %v1840 = vld [vmem:[%s1824 + $0x3c] sm:$0xf]
  %v1857 = vunpack.c.l.b16 %v1825
  %v1858 = vunpack.c.l.b16 %v1826
  %v1859 = vunpack.c.l.b16 %v1827
  %v1860 = vunpack.c.l.b16 %v1828
  %v1861 = vunpack.c.l.b16 %v1829
  %v1862 = vunpack.c.l.b16 %v1830
  %v1863 = vunpack.c.l.b16 %v1831
  %v1864 = vunpack.c.l.b16 %v1832
  %v1865 = vunpack.c.l.b16 %v1833
  %v1866 = vunpack.c.l.b16 %v1834
  %v1867 = vunpack.c.l.b16 %v1835
  %v1868 = vunpack.c.l.b16 %v1836
  %v1869 = vunpack.c.l.b16 %v1837
  %v1870 = vunpack.c.l.b16 %v1838
  %v1871 = vunpack.c.l.b16 %v1839
  %v1872 = vunpack.c.l.b16 %v1840
  %v1873 = vpack.c.b16 %v1858, %v1857
  %v1874 = vpack.c.b16 %v1860, %v1859
  %v1875 = vpack.c.b16 %v1862, %v1861
  %v1876 = vpack.c.b16 %v1864, %v1863
  %v1877 = vpack.c.b16 %v1866, %v1865
  %v1878 = vpack.c.b16 %v1868, %v1867
  %v1879 = vpack.c.b16 %v1870, %v1869
  %v1880 = vpack.c.b16 %v1872, %v1871
  %1889 = vmatpush.bf16.msra.mxu0 %v1880
  %1890 = vmatpush.bf16.msra.mxu0 %v1879
  %1891 = vmatpush.bf16.msra.mxu0 %v1878
  %1892 = vmatpush.bf16.msra.mxu0 %v1877
  %1893 = vmatpush.bf16.msra.mxu0 %v1876
  %1894 = vmatpush.bf16.msra.mxu0 %v1875
  %1895 = vmatpush.bf16.msra.mxu0 %v1874
  %1896 = vmatpush.bf16.msra.mxu0 %v1873
  %1897 = vmatmul.bf16.gmra.mxu0 %v1412
  %v1898 = vpop.f32.mrf.mxu0
  %v1899 = vadd.f32 0.0, %v1898
  %v1900 = vpop.f32.mrf.mxu0
  %1901 = vdwg.mxu0
  %v1902 = vadd.f32 %v1823, %v1899
  %s1903 = scalar_lea.vmem %s3, 384
  %v1904 = vld [vmem:[%s1903] sm:$0xf]
  %v1905 = vld [vmem:[%s1903 + $0x4] sm:$0xf]
  %v1906 = vld [vmem:[%s1903 + $0x8] sm:$0xf]
  %v1907 = vld [vmem:[%s1903 + $0xc] sm:$0xf]
  %v1908 = vld [vmem:[%s1903 + $0x10] sm:$0xf]
  %v1909 = vld [vmem:[%s1903 + $0x14] sm:$0xf]
  %v1910 = vld [vmem:[%s1903 + $0x18] sm:$0xf]
  %v1911 = vld [vmem:[%s1903 + $0x1c] sm:$0xf]
  %v1912 = vld [vmem:[%s1903 + $0x20] sm:$0xf]
  %v1913 = vld [vmem:[%s1903 + $0x24] sm:$0xf]
  %v1914 = vld [vmem:[%s1903 + $0x28] sm:$0xf]
  %v1915 = vld [vmem:[%s1903 + $0x2c] sm:$0xf]
  %v1916 = vld [vmem:[%s1903 + $0x30] sm:$0xf]
  %v1917 = vld [vmem:[%s1903 + $0x34] sm:$0xf]
  %v1918 = vld [vmem:[%s1903 + $0x38] sm:$0xf]
  %v1919 = vld [vmem:[%s1903 + $0x3c] sm:$0xf]
  %v1936 = vunpack.c.l.b16 %v1904
  %v1937 = vunpack.c.l.b16 %v1905
  %v1938 = vunpack.c.l.b16 %v1906
  %v1939 = vunpack.c.l.b16 %v1907
  %v1940 = vunpack.c.l.b16 %v1908
  %v1941 = vunpack.c.l.b16 %v1909
  %v1942 = vunpack.c.l.b16 %v1910
  %v1943 = vunpack.c.l.b16 %v1911
  %v1944 = vunpack.c.l.b16 %v1912
  %v1945 = vunpack.c.l.b16 %v1913
  %v1946 = vunpack.c.l.b16 %v1914
  %v1947 = vunpack.c.l.b16 %v1915
  %v1948 = vunpack.c.l.b16 %v1916
  %v1949 = vunpack.c.l.b16 %v1917
  %v1950 = vunpack.c.l.b16 %v1918
  %v1951 = vunpack.c.l.b16 %v1919
  %v1952 = vpack.c.b16 %v1937, %v1936
  %v1953 = vpack.c.b16 %v1939, %v1938
  %v1954 = vpack.c.b16 %v1941, %v1940
  %v1955 = vpack.c.b16 %v1943, %v1942
  %v1956 = vpack.c.b16 %v1945, %v1944
  %v1957 = vpack.c.b16 %v1947, %v1946
  %v1958 = vpack.c.b16 %v1949, %v1948
  %v1959 = vpack.c.b16 %v1951, %v1950
  %1968 = vmatpush.bf16.msra.mxu0 %v1959
  %1969 = vmatpush.bf16.msra.mxu0 %v1958
  %1970 = vmatpush.bf16.msra.mxu0 %v1957
  %1971 = vmatpush.bf16.msra.mxu0 %v1956
  %1972 = vmatpush.bf16.msra.mxu0 %v1955
  %1973 = vmatpush.bf16.msra.mxu0 %v1954
  %1974 = vmatpush.bf16.msra.mxu0 %v1953
  %1975 = vmatpush.bf16.msra.mxu0 %v1952
  %1976 = vmatmul.bf16.gmra.mxu0 %v1413
  %v1977 = vpop.f32.mrf.mxu0
  %v1978 = vadd.f32 0.0, %v1977
  %v1979 = vpop.f32.mrf.mxu0
  %1980 = vdwg.mxu0
  %v1981 = vadd.f32 %v1902, %v1978
  %s1982 = scalar_lea.vmem %s3, 448
  %v1983 = vld [vmem:[%s1982] sm:$0xf]
  %v1984 = vld [vmem:[%s1982 + $0x4] sm:$0xf]
  %v1985 = vld [vmem:[%s1982 + $0x8] sm:$0xf]
  %v1986 = vld [vmem:[%s1982 + $0xc] sm:$0xf]
  %v1987 = vld [vmem:[%s1982 + $0x10] sm:$0xf]
  %v1988 = vld [vmem:[%s1982 + $0x14] sm:$0xf]
  %v1989 = vld [vmem:[%s1982 + $0x18] sm:$0xf]
  %v1990 = vld [vmem:[%s1982 + $0x1c] sm:$0xf]
  %v1991 = vld [vmem:[%s1982 + $0x20] sm:$0xf]
  %v1992 = vld [vmem:[%s1982 + $0x24] sm:$0xf]
  %v1993 = vld [vmem:[%s1982 + $0x28] sm:$0xf]
  %v1994 = vld [vmem:[%s1982 + $0x2c] sm:$0xf]
  %v1995 = vld [vmem:[%s1982 + $0x30] sm:$0xf]
  %v1996 = vld [vmem:[%s1982 + $0x34] sm:$0xf]
  %v1997 = vld [vmem:[%s1982 + $0x38] sm:$0xf]
  %v1998 = vld [vmem:[%s1982 + $0x3c] sm:$0xf]
  %v2015 = vunpack.c.l.b16 %v1983
  %v2016 = vunpack.c.l.b16 %v1984
  %v2017 = vunpack.c.l.b16 %v1985
  %v2018 = vunpack.c.l.b16 %v1986
  %v2019 = vunpack.c.l.b16 %v1987
  %v2020 = vunpack.c.l.b16 %v1988
  %v2021 = vunpack.c.l.b16 %v1989
  %v2022 = vunpack.c.l.b16 %v1990
  %v2023 = vunpack.c.l.b16 %v1991
  %v2024 = vunpack.c.l.b16 %v1992
  %v2025 = vunpack.c.l.b16 %v1993
  %v2026 = vunpack.c.l.b16 %v1994
  %v2027 = vunpack.c.l.b16 %v1995
  %v2028 = vunpack.c.l.b16 %v1996
  %v2029 = vunpack.c.l.b16 %v1997
  %v2030 = vunpack.c.l.b16 %v1998
  %v2031 = vpack.c.b16 %v2016, %v2015
  %v2032 = vpack.c.b16 %v2018, %v2017
  %v2033 = vpack.c.b16 %v2020, %v2019
  %v2034 = vpack.c.b16 %v2022, %v2021
  %v2035 = vpack.c.b16 %v2024, %v2023
  %v2036 = vpack.c.b16 %v2026, %v2025
  %v2037 = vpack.c.b16 %v2028, %v2027
  %v2038 = vpack.c.b16 %v2030, %v2029
  %2047 = vmatpush.bf16.msra.mxu0 %v2038
  %2048 = vmatpush.bf16.msra.mxu0 %v2037
  %2049 = vmatpush.bf16.msra.mxu0 %v2036
  %2050 = vmatpush.bf16.msra.mxu0 %v2035
  %2051 = vmatpush.bf16.msra.mxu0 %v2034
  %2052 = vmatpush.bf16.msra.mxu0 %v2033
  %2053 = vmatpush.bf16.msra.mxu0 %v2032
  %2054 = vmatpush.bf16.msra.mxu0 %v2031
  %2055 = vmatmul.bf16.gmra.mxu0 %v1414
  %v2056 = vpop.f32.mrf.mxu0
  %v2057 = vadd.f32 0.0, %v2056
  %v2058 = vpop.f32.mrf.mxu0
  %2059 = vdwg.mxu0
  %v2060 = vadd.f32 %v1981, %v2057
  %s2061 = scalar_lea.vmem %s3, 512
  %v2062 = vld [vmem:[%s2061] sm:$0xf]
  %v2063 = vld [vmem:[%s2061 + $0x4] sm:$0xf]
  %v2064 = vld [vmem:[%s2061 + $0x8] sm:$0xf]
  %v2065 = vld [vmem:[%s2061 + $0xc] sm:$0xf]
  %v2066 = vld [vmem:[%s2061 + $0x10] sm:$0xf]
  %v2067 = vld [vmem:[%s2061 + $0x14] sm:$0xf]
  %v2068 = vld [vmem:[%s2061 + $0x18] sm:$0xf]
  %v2069 = vld [vmem:[%s2061 + $0x1c] sm:$0xf]
  %v2070 = vld [vmem:[%s2061 + $0x20] sm:$0xf]
  %v2071 = vld [vmem:[%s2061 + $0x24] sm:$0xf]
  %v2072 = vld [vmem:[%s2061 + $0x28] sm:$0xf]
  %v2073 = vld [vmem:[%s2061 + $0x2c] sm:$0xf]
  %v2074 = vld [vmem:[%s2061 + $0x30] sm:$0xf]
  %v2075 = vld [vmem:[%s2061 + $0x34] sm:$0xf]
  %v2076 = vld [vmem:[%s2061 + $0x38] sm:$0xf]
  %v2077 = vld [vmem:[%s2061 + $0x3c] sm:$0xf]
  %v2094 = vunpack.c.l.b16 %v2062
  %v2095 = vunpack.c.l.b16 %v2063
  %v2096 = vunpack.c.l.b16 %v2064
  %v2097 = vunpack.c.l.b16 %v2065
  %v2098 = vunpack.c.l.b16 %v2066
  %v2099 = vunpack.c.l.b16 %v2067
  %v2100 = vunpack.c.l.b16 %v2068
  %v2101 = vunpack.c.l.b16 %v2069
  %v2102 = vunpack.c.l.b16 %v2070
  %v2103 = vunpack.c.l.b16 %v2071
  %v2104 = vunpack.c.l.b16 %v2072
  %v2105 = vunpack.c.l.b16 %v2073
  %v2106 = vunpack.c.l.b16 %v2074
  %v2107 = vunpack.c.l.b16 %v2075
  %v2108 = vunpack.c.l.b16 %v2076
  %v2109 = vunpack.c.l.b16 %v2077
  %v2110 = vpack.c.b16 %v2095, %v2094
  %v2111 = vpack.c.b16 %v2097, %v2096
  %v2112 = vpack.c.b16 %v2099, %v2098
  %v2113 = vpack.c.b16 %v2101, %v2100
  %v2114 = vpack.c.b16 %v2103, %v2102
  %v2115 = vpack.c.b16 %v2105, %v2104
  %v2116 = vpack.c.b16 %v2107, %v2106
  %v2117 = vpack.c.b16 %v2109, %v2108
  %2126 = vmatpush.bf16.msra.mxu0 %v2117
  %2127 = vmatpush.bf16.msra.mxu0 %v2116
  %2128 = vmatpush.bf16.msra.mxu0 %v2115
  %2129 = vmatpush.bf16.msra.mxu0 %v2114
  %2130 = vmatpush.bf16.msra.mxu0 %v2113
  %2131 = vmatpush.bf16.msra.mxu0 %v2112
  %2132 = vmatpush.bf16.msra.mxu0 %v2111
  %2133 = vmatpush.bf16.msra.mxu0 %v2110
  %2134 = vmatmul.bf16.gmra.mxu0 %v1415
  %v2135 = vpop.f32.mrf.mxu0
  %v2136 = vadd.f32 0.0, %v2135
  %v2137 = vpop.f32.mrf.mxu0
  %2138 = vdwg.mxu0
  %v2139 = vadd.f32 %v2060, %v2136
  %s2140 = scalar_lea.vmem %s3, 576
  %v2141 = vld [vmem:[%s2140] sm:$0xf]
  %v2142 = vld [vmem:[%s2140 + $0x4] sm:$0xf]
  %v2143 = vld [vmem:[%s2140 + $0x8] sm:$0xf]
  %v2144 = vld [vmem:[%s2140 + $0xc] sm:$0xf]
  %v2145 = vld [vmem:[%s2140 + $0x10] sm:$0xf]
  %v2146 = vld [vmem:[%s2140 + $0x14] sm:$0xf]
  %v2147 = vld [vmem:[%s2140 + $0x18] sm:$0xf]
  %v2148 = vld [vmem:[%s2140 + $0x1c] sm:$0xf]
  %v2149 = vld [vmem:[%s2140 + $0x20] sm:$0xf]
  %v2150 = vld [vmem:[%s2140 + $0x24] sm:$0xf]
  %v2151 = vld [vmem:[%s2140 + $0x28] sm:$0xf]
  %v2152 = vld [vmem:[%s2140 + $0x2c] sm:$0xf]
  %v2153 = vld [vmem:[%s2140 + $0x30] sm:$0xf]
  %v2154 = vld [vmem:[%s2140 + $0x34] sm:$0xf]
  %v2155 = vld [vmem:[%s2140 + $0x38] sm:$0xf]
  %v2156 = vld [vmem:[%s2140 + $0x3c] sm:$0xf]
  %v2173 = vunpack.c.l.b16 %v2141
  %v2174 = vunpack.c.l.b16 %v2142
  %v2175 = vunpack.c.l.b16 %v2143
  %v2176 = vunpack.c.l.b16 %v2144
  %v2177 = vunpack.c.l.b16 %v2145
  %v2178 = vunpack.c.l.b16 %v2146
  %v2179 = vunpack.c.l.b16 %v2147
  %v2180 = vunpack.c.l.b16 %v2148
  %v2181 = vunpack.c.l.b16 %v2149
  %v2182 = vunpack.c.l.b16 %v2150
  %v2183 = vunpack.c.l.b16 %v2151
  %v2184 = vunpack.c.l.b16 %v2152
  %v2185 = vunpack.c.l.b16 %v2153
  %v2186 = vunpack.c.l.b16 %v2154
  %v2187 = vunpack.c.l.b16 %v2155
  %v2188 = vunpack.c.l.b16 %v2156
  %v2189 = vpack.c.b16 %v2174, %v2173
  %v2190 = vpack.c.b16 %v2176, %v2175
  %v2191 = vpack.c.b16 %v2178, %v2177
  %v2192 = vpack.c.b16 %v2180, %v2179
  %v2193 = vpack.c.b16 %v2182, %v2181
  %v2194 = vpack.c.b16 %v2184, %v2183
  %v2195 = vpack.c.b16 %v2186, %v2185
  %v2196 = vpack.c.b16 %v2188, %v2187
  %2205 = vmatpush.bf16.msra.mxu0 %v2196
  %2206 = vmatpush.bf16.msra.mxu0 %v2195
  %2207 = vmatpush.bf16.msra.mxu0 %v2194
  %2208 = vmatpush.bf16.msra.mxu0 %v2193
  %2209 = vmatpush.bf16.msra.mxu0 %v2192
  %2210 = vmatpush.bf16.msra.mxu0 %v2191
  %2211 = vmatpush.bf16.msra.mxu0 %v2190
  %2212 = vmatpush.bf16.msra.mxu0 %v2189
  %2213 = vmatmul.bf16.gmra.mxu0 %v1416
  %v2214 = vpop.f32.mrf.mxu0
  %v2215 = vadd.f32 0.0, %v2214
  %v2216 = vpop.f32.mrf.mxu0
  %2217 = vdwg.mxu0
  %v2218 = vadd.f32 %v2139, %v2215
  %s2219 = scalar_lea.vmem %s3, 640
  %v2220 = vld [vmem:[%s2219] sm:$0xf]
  %v2221 = vld [vmem:[%s2219 + $0x4] sm:$0xf]
  %v2222 = vld [vmem:[%s2219 + $0x8] sm:$0xf]
  %v2223 = vld [vmem:[%s2219 + $0xc] sm:$0xf]
  %v2224 = vld [vmem:[%s2219 + $0x10] sm:$0xf]
  %v2225 = vld [vmem:[%s2219 + $0x14] sm:$0xf]
  %v2226 = vld [vmem:[%s2219 + $0x18] sm:$0xf]
  %v2227 = vld [vmem:[%s2219 + $0x1c] sm:$0xf]
  %v2228 = vld [vmem:[%s2219 + $0x20] sm:$0xf]
  %v2229 = vld [vmem:[%s2219 + $0x24] sm:$0xf]
  %v2230 = vld [vmem:[%s2219 + $0x28] sm:$0xf]
  %v2231 = vld [vmem:[%s2219 + $0x2c] sm:$0xf]
  %v2232 = vld [vmem:[%s2219 + $0x30] sm:$0xf]
  %v2233 = vld [vmem:[%s2219 + $0x34] sm:$0xf]
  %v2234 = vld [vmem:[%s2219 + $0x38] sm:$0xf]
  %v2235 = vld [vmem:[%s2219 + $0x3c] sm:$0xf]
  %v2252 = vunpack.c.l.b16 %v2220
  %v2253 = vunpack.c.l.b16 %v2221
  %v2254 = vunpack.c.l.b16 %v2222
  %v2255 = vunpack.c.l.b16 %v2223
  %v2256 = vunpack.c.l.b16 %v2224
  %v2257 = vunpack.c.l.b16 %v2225
  %v2258 = vunpack.c.l.b16 %v2226
  %v2259 = vunpack.c.l.b16 %v2227
  %v2260 = vunpack.c.l.b16 %v2228
  %v2261 = vunpack.c.l.b16 %v2229
  %v2262 = vunpack.c.l.b16 %v2230
  %v2263 = vunpack.c.l.b16 %v2231
  %v2264 = vunpack.c.l.b16 %v2232
  %v2265 = vunpack.c.l.b16 %v2233
  %v2266 = vunpack.c.l.b16 %v2234
  %v2267 = vunpack.c.l.b16 %v2235
  %v2268 = vpack.c.b16 %v2253, %v2252
  %v2269 = vpack.c.b16 %v2255, %v2254
  %v2270 = vpack.c.b16 %v2257, %v2256
  %v2271 = vpack.c.b16 %v2259, %v2258
  %v2272 = vpack.c.b16 %v2261, %v2260
  %v2273 = vpack.c.b16 %v2263, %v2262
  %v2274 = vpack.c.b16 %v2265, %v2264
  %v2275 = vpack.c.b16 %v2267, %v2266
  %2284 = vmatpush.bf16.msra.mxu0 %v2275
  %2285 = vmatpush.bf16.msra.mxu0 %v2274
  %2286 = vmatpush.bf16.msra.mxu0 %v2273
  %2287 = vmatpush.bf16.msra.mxu0 %v2272
  %2288 = vmatpush.bf16.msra.mxu0 %v2271
  %2289 = vmatpush.bf16.msra.mxu0 %v2270
  %2290 = vmatpush.bf16.msra.mxu0 %v2269
  %2291 = vmatpush.bf16.msra.mxu0 %v2268
  %2292 = vmatmul.bf16.gmra.mxu0 %v1417
  %v2293 = vpop.f32.mrf.mxu0
  %v2294 = vadd.f32 0.0, %v2293
  %v2295 = vpop.f32.mrf.mxu0
  %2296 = vdwg.mxu0
  %v2297 = vadd.f32 %v2218, %v2294
  %s2298 = scalar_lea.vmem %s3, 704
  %v2299 = vld [vmem:[%s2298] sm:$0xf]
  %v2300 = vld [vmem:[%s2298 + $0x4] sm:$0xf]
  %v2301 = vld [vmem:[%s2298 + $0x8] sm:$0xf]
  %v2302 = vld [vmem:[%s2298 + $0xc] sm:$0xf]
  %v2303 = vld [vmem:[%s2298 + $0x10] sm:$0xf]
  %v2304 = vld [vmem:[%s2298 + $0x14] sm:$0xf]
  %v2305 = vld [vmem:[%s2298 + $0x18] sm:$0xf]
  %v2306 = vld [vmem:[%s2298 + $0x1c] sm:$0xf]
  %v2307 = vld [vmem:[%s2298 + $0x20] sm:$0xf]
  %v2308 = vld [vmem:[%s2298 + $0x24] sm:$0xf]
  %v2309 = vld [vmem:[%s2298 + $0x28] sm:$0xf]
  %v2310 = vld [vmem:[%s2298 + $0x2c] sm:$0xf]
  %v2311 = vld [vmem:[%s2298 + $0x30] sm:$0xf]
  %v2312 = vld [vmem:[%s2298 + $0x34] sm:$0xf]
  %v2313 = vld [vmem:[%s2298 + $0x38] sm:$0xf]
  %v2314 = vld [vmem:[%s2298 + $0x3c] sm:$0xf]
  %v2331 = vunpack.c.l.b16 %v2299
  %v2332 = vunpack.c.l.b16 %v2300
  %v2333 = vunpack.c.l.b16 %v2301
  %v2334 = vunpack.c.l.b16 %v2302
  %v2335 = vunpack.c.l.b16 %v2303
  %v2336 = vunpack.c.l.b16 %v2304
  %v2337 = vunpack.c.l.b16 %v2305
  %v2338 = vunpack.c.l.b16 %v2306
  %v2339 = vunpack.c.l.b16 %v2307
  %v2340 = vunpack.c.l.b16 %v2308
  %v2341 = vunpack.c.l.b16 %v2309
  %v2342 = vunpack.c.l.b16 %v2310
  %v2343 = vunpack.c.l.b16 %v2311
  %v2344 = vunpack.c.l.b16 %v2312
  %v2345 = vunpack.c.l.b16 %v2313
  %v2346 = vunpack.c.l.b16 %v2314
  %v2347 = vpack.c.b16 %v2332, %v2331
  %v2348 = vpack.c.b16 %v2334, %v2333
  %v2349 = vpack.c.b16 %v2336, %v2335
  %v2350 = vpack.c.b16 %v2338, %v2337
  %v2351 = vpack.c.b16 %v2340, %v2339
  %v2352 = vpack.c.b16 %v2342, %v2341
  %v2353 = vpack.c.b16 %v2344, %v2343
  %v2354 = vpack.c.b16 %v2346, %v2345
  %2363 = vmatpush.bf16.msra.mxu0 %v2354
  %2364 = vmatpush.bf16.msra.mxu0 %v2353
  %2365 = vmatpush.bf16.msra.mxu0 %v2352
  %2366 = vmatpush.bf16.msra.mxu0 %v2351
  %2367 = vmatpush.bf16.msra.mxu0 %v2350
  %2368 = vmatpush.bf16.msra.mxu0 %v2349
  %2369 = vmatpush.bf16.msra.mxu0 %v2348
  %2370 = vmatpush.bf16.msra.mxu0 %v2347
  %2371 = vmatmul.bf16.gmra.mxu0 %v1418
  %v2372 = vpop.f32.mrf.mxu0
  %v2373 = vadd.f32 0.0, %v2372
  %v2374 = vpop.f32.mrf.mxu0
  %2375 = vdwg.mxu0
  %v2376 = vadd.f32 %v2297, %v2373
  %s2377 = scalar_lea.vmem %s3, 768
  %v2378 = vld [vmem:[%s2377] sm:$0xf]
  %v2379 = vld [vmem:[%s2377 + $0x4] sm:$0xf]
  %v2380 = vld [vmem:[%s2377 + $0x8] sm:$0xf]
  %v2381 = vld [vmem:[%s2377 + $0xc] sm:$0xf]
  %v2382 = vld [vmem:[%s2377 + $0x10] sm:$0xf]
  %v2383 = vld [vmem:[%s2377 + $0x14] sm:$0xf]
  %v2384 = vld [vmem:[%s2377 + $0x18] sm:$0xf]
  %v2385 = vld [vmem:[%s2377 + $0x1c] sm:$0xf]
  %v2386 = vld [vmem:[%s2377 + $0x20] sm:$0xf]
  %v2387 = vld [vmem:[%s2377 + $0x24] sm:$0xf]
  %v2388 = vld [vmem:[%s2377 + $0x28] sm:$0xf]
  %v2389 = vld [vmem:[%s2377 + $0x2c] sm:$0xf]
  %v2390 = vld [vmem:[%s2377 + $0x30] sm:$0xf]
  %v2391 = vld [vmem:[%s2377 + $0x34] sm:$0xf]
  %v2392 = vld [vmem:[%s2377 + $0x38] sm:$0xf]
  %v2393 = vld [vmem:[%s2377 + $0x3c] sm:$0xf]
  %v2410 = vunpack.c.l.b16 %v2378
  %v2411 = vunpack.c.l.b16 %v2379
  %v2412 = vunpack.c.l.b16 %v2380
  %v2413 = vunpack.c.l.b16 %v2381
  %v2414 = vunpack.c.l.b16 %v2382
  %v2415 = vunpack.c.l.b16 %v2383
  %v2416 = vunpack.c.l.b16 %v2384
  %v2417 = vunpack.c.l.b16 %v2385
  %v2418 = vunpack.c.l.b16 %v2386
  %v2419 = vunpack.c.l.b16 %v2387
  %v2420 = vunpack.c.l.b16 %v2388
  %v2421 = vunpack.c.l.b16 %v2389
  %v2422 = vunpack.c.l.b16 %v2390
  %v2423 = vunpack.c.l.b16 %v2391
  %v2424 = vunpack.c.l.b16 %v2392
  %v2425 = vunpack.c.l.b16 %v2393
  %v2426 = vpack.c.b16 %v2411, %v2410
  %v2427 = vpack.c.b16 %v2413, %v2412
  %v2428 = vpack.c.b16 %v2415, %v2414
  %v2429 = vpack.c.b16 %v2417, %v2416
  %v2430 = vpack.c.b16 %v2419, %v2418
  %v2431 = vpack.c.b16 %v2421, %v2420
  %v2432 = vpack.c.b16 %v2423, %v2422
  %v2433 = vpack.c.b16 %v2425, %v2424
  %2442 = vmatpush.bf16.msra.mxu0 %v2433
  %2443 = vmatpush.bf16.msra.mxu0 %v2432
  %2444 = vmatpush.bf16.msra.mxu0 %v2431
  %2445 = vmatpush.bf16.msra.mxu0 %v2430
  %2446 = vmatpush.bf16.msra.mxu0 %v2429
  %2447 = vmatpush.bf16.msra.mxu0 %v2428
  %2448 = vmatpush.bf16.msra.mxu0 %v2427
  %2449 = vmatpush.bf16.msra.mxu0 %v2426
  %2450 = vmatmul.bf16.gmra.mxu0 %v1419
  %v2451 = vpop.f32.mrf.mxu0
  %v2452 = vadd.f32 0.0, %v2451
  %v2453 = vpop.f32.mrf.mxu0
  %2454 = vdwg.mxu0
  %v2455 = vadd.f32 %v2376, %v2452
  %s2456 = scalar_lea.vmem %s3, 832
  %v2457 = vld [vmem:[%s2456] sm:$0xf]
  %v2458 = vld [vmem:[%s2456 + $0x4] sm:$0xf]
  %v2459 = vld [vmem:[%s2456 + $0x8] sm:$0xf]
  %v2460 = vld [vmem:[%s2456 + $0xc] sm:$0xf]
  %v2461 = vld [vmem:[%s2456 + $0x10] sm:$0xf]
  %v2462 = vld [vmem:[%s2456 + $0x14] sm:$0xf]
  %v2463 = vld [vmem:[%s2456 + $0x18] sm:$0xf]
  %v2464 = vld [vmem:[%s2456 + $0x1c] sm:$0xf]
  %v2465 = vld [vmem:[%s2456 + $0x20] sm:$0xf]
  %v2466 = vld [vmem:[%s2456 + $0x24] sm:$0xf]
  %v2467 = vld [vmem:[%s2456 + $0x28] sm:$0xf]
  %v2468 = vld [vmem:[%s2456 + $0x2c] sm:$0xf]
  %v2469 = vld [vmem:[%s2456 + $0x30] sm:$0xf]
  %v2470 = vld [vmem:[%s2456 + $0x34] sm:$0xf]
  %v2471 = vld [vmem:[%s2456 + $0x38] sm:$0xf]
  %v2472 = vld [vmem:[%s2456 + $0x3c] sm:$0xf]
  %v2489 = vunpack.c.l.b16 %v2457
  %v2490 = vunpack.c.l.b16 %v2458
  %v2491 = vunpack.c.l.b16 %v2459
  %v2492 = vunpack.c.l.b16 %v2460
  %v2493 = vunpack.c.l.b16 %v2461
  %v2494 = vunpack.c.l.b16 %v2462
  %v2495 = vunpack.c.l.b16 %v2463
  %v2496 = vunpack.c.l.b16 %v2464
  %v2497 = vunpack.c.l.b16 %v2465
  %v2498 = vunpack.c.l.b16 %v2466
  %v2499 = vunpack.c.l.b16 %v2467
  %v2500 = vunpack.c.l.b16 %v2468
  %v2501 = vunpack.c.l.b16 %v2469
  %v2502 = vunpack.c.l.b16 %v2470
  %v2503 = vunpack.c.l.b16 %v2471
  %v2504 = vunpack.c.l.b16 %v2472
  %v2505 = vpack.c.b16 %v2490, %v2489
  %v2506 = vpack.c.b16 %v2492, %v2491
  %v2507 = vpack.c.b16 %v2494, %v2493
  %v2508 = vpack.c.b16 %v2496, %v2495
  %v2509 = vpack.c.b16 %v2498, %v2497
  %v2510 = vpack.c.b16 %v2500, %v2499
  %v2511 = vpack.c.b16 %v2502, %v2501
  %v2512 = vpack.c.b16 %v2504, %v2503
  %2521 = vmatpush.bf16.msra.mxu0 %v2512
  %2522 = vmatpush.bf16.msra.mxu0 %v2511
  %2523 = vmatpush.bf16.msra.mxu0 %v2510
  %2524 = vmatpush.bf16.msra.mxu0 %v2509
  %2525 = vmatpush.bf16.msra.mxu0 %v2508
  %2526 = vmatpush.bf16.msra.mxu0 %v2507
  %2527 = vmatpush.bf16.msra.mxu0 %v2506
  %2528 = vmatpush.bf16.msra.mxu0 %v2505
  %2529 = vmatmul.bf16.gmra.mxu0 %v1420
  %v2530 = vpop.f32.mrf.mxu0
  %v2531 = vadd.f32 0.0, %v2530
  %v2532 = vpop.f32.mrf.mxu0
  %2533 = vdwg.mxu0
  %v2534 = vadd.f32 %v2455, %v2531
  %s2535 = scalar_lea.vmem %s3, 896
  %v2536 = vld [vmem:[%s2535] sm:$0xf]
  %v2537 = vld [vmem:[%s2535 + $0x4] sm:$0xf]
  %v2538 = vld [vmem:[%s2535 + $0x8] sm:$0xf]
  %v2539 = vld [vmem:[%s2535 + $0xc] sm:$0xf]
  %v2540 = vld [vmem:[%s2535 + $0x10] sm:$0xf]
  %v2541 = vld [vmem:[%s2535 + $0x14] sm:$0xf]
  %v2542 = vld [vmem:[%s2535 + $0x18] sm:$0xf]
  %v2543 = vld [vmem:[%s2535 + $0x1c] sm:$0xf]
  %v2544 = vld [vmem:[%s2535 + $0x20] sm:$0xf]
  %v2545 = vld [vmem:[%s2535 + $0x24] sm:$0xf]
  %v2546 = vld [vmem:[%s2535 + $0x28] sm:$0xf]
  %v2547 = vld [vmem:[%s2535 + $0x2c] sm:$0xf]
  %v2548 = vld [vmem:[%s2535 + $0x30] sm:$0xf]
  %v2549 = vld [vmem:[%s2535 + $0x34] sm:$0xf]
  %v2550 = vld [vmem:[%s2535 + $0x38] sm:$0xf]
  %v2551 = vld [vmem:[%s2535 + $0x3c] sm:$0xf]
  %v2568 = vunpack.c.l.b16 %v2536
  %v2569 = vunpack.c.l.b16 %v2537
  %v2570 = vunpack.c.l.b16 %v2538
  %v2571 = vunpack.c.l.b16 %v2539
  %v2572 = vunpack.c.l.b16 %v2540
  %v2573 = vunpack.c.l.b16 %v2541
  %v2574 = vunpack.c.l.b16 %v2542
  %v2575 = vunpack.c.l.b16 %v2543
  %v2576 = vunpack.c.l.b16 %v2544
  %v2577 = vunpack.c.l.b16 %v2545
  %v2578 = vunpack.c.l.b16 %v2546
  %v2579 = vunpack.c.l.b16 %v2547
  %v2580 = vunpack.c.l.b16 %v2548
  %v2581 = vunpack.c.l.b16 %v2549
  %v2582 = vunpack.c.l.b16 %v2550
  %v2583 = vunpack.c.l.b16 %v2551
  %v2584 = vpack.c.b16 %v2569, %v2568
  %v2585 = vpack.c.b16 %v2571, %v2570
  %v2586 = vpack.c.b16 %v2573, %v2572
  %v2587 = vpack.c.b16 %v2575, %v2574
  %v2588 = vpack.c.b16 %v2577, %v2576
  %v2589 = vpack.c.b16 %v2579, %v2578
  %v2590 = vpack.c.b16 %v2581, %v2580
  %v2591 = vpack.c.b16 %v2583, %v2582
  %2600 = vmatpush.bf16.msra.mxu0 %v2591
  %2601 = vmatpush.bf16.msra.mxu0 %v2590
  %2602 = vmatpush.bf16.msra.mxu0 %v2589
  %2603 = vmatpush.bf16.msra.mxu0 %v2588
  %2604 = vmatpush.bf16.msra.mxu0 %v2587
  %2605 = vmatpush.bf16.msra.mxu0 %v2586
  %2606 = vmatpush.bf16.msra.mxu0 %v2585
  %2607 = vmatpush.bf16.msra.mxu0 %v2584
  %2608 = vmatmul.bf16.gmra.mxu0 %v1421
  %v2609 = vpop.f32.mrf.mxu0
  %v2610 = vadd.f32 0.0, %v2609
  %v2611 = vpop.f32.mrf.mxu0
  %2612 = vdwg.mxu0
  %v2613 = vadd.f32 %v2534, %v2610
  %s2614 = scalar_lea.vmem %s3, 960
  %v2615 = vld [vmem:[%s2614] sm:$0xf]
  %v2616 = vld [vmem:[%s2614 + $0x4] sm:$0xf]
  %v2617 = vld [vmem:[%s2614 + $0x8] sm:$0xf]
  %v2618 = vld [vmem:[%s2614 + $0xc] sm:$0xf]
  %v2619 = vld [vmem:[%s2614 + $0x10] sm:$0xf]
  %v2620 = vld [vmem:[%s2614 + $0x14] sm:$0xf]
  %v2621 = vld [vmem:[%s2614 + $0x18] sm:$0xf]
  %v2622 = vld [vmem:[%s2614 + $0x1c] sm:$0xf]
  %v2623 = vld [vmem:[%s2614 + $0x20] sm:$0xf]
  %v2624 = vld [vmem:[%s2614 + $0x24] sm:$0xf]
  %v2625 = vld [vmem:[%s2614 + $0x28] sm:$0xf]
  %v2626 = vld [vmem:[%s2614 + $0x2c] sm:$0xf]
  %v2627 = vld [vmem:[%s2614 + $0x30] sm:$0xf]
  %v2628 = vld [vmem:[%s2614 + $0x34] sm:$0xf]
  %v2629 = vld [vmem:[%s2614 + $0x38] sm:$0xf]
  %v2630 = vld [vmem:[%s2614 + $0x3c] sm:$0xf]
  %v2647 = vunpack.c.l.b16 %v2615
  %v2648 = vunpack.c.l.b16 %v2616
  %v2649 = vunpack.c.l.b16 %v2617
  %v2650 = vunpack.c.l.b16 %v2618
  %v2651 = vunpack.c.l.b16 %v2619
  %v2652 = vunpack.c.l.b16 %v2620
  %v2653 = vunpack.c.l.b16 %v2621
  %v2654 = vunpack.c.l.b16 %v2622
  %v2655 = vunpack.c.l.b16 %v2623
  %v2656 = vunpack.c.l.b16 %v2624
  %v2657 = vunpack.c.l.b16 %v2625
  %v2658 = vunpack.c.l.b16 %v2626
  %v2659 = vunpack.c.l.b16 %v2627
  %v2660 = vunpack.c.l.b16 %v2628
  %v2661 = vunpack.c.l.b16 %v2629
  %v2662 = vunpack.c.l.b16 %v2630
  %v2663 = vpack.c.b16 %v2648, %v2647
  %v2664 = vpack.c.b16 %v2650, %v2649
  %v2665 = vpack.c.b16 %v2652, %v2651
  %v2666 = vpack.c.b16 %v2654, %v2653
  %v2667 = vpack.c.b16 %v2656, %v2655
  %v2668 = vpack.c.b16 %v2658, %v2657
  %v2669 = vpack.c.b16 %v2660, %v2659
  %v2670 = vpack.c.b16 %v2662, %v2661
  %2679 = vmatpush.bf16.msra.mxu0 %v2670
  %2680 = vmatpush.bf16.msra.mxu0 %v2669
  %2681 = vmatpush.bf16.msra.mxu0 %v2668
  %2682 = vmatpush.bf16.msra.mxu0 %v2667
  %2683 = vmatpush.bf16.msra.mxu0 %v2666
  %2684 = vmatpush.bf16.msra.mxu0 %v2665
  %2685 = vmatpush.bf16.msra.mxu0 %v2664
  %2686 = vmatpush.bf16.msra.mxu0 %v2663
  %2687 = vmatmul.bf16.gmra.mxu0 %v1422
  %v2688 = vpop.f32.mrf.mxu0
  %v2689 = vadd.f32 0.0, %v2688
  %v2690 = vpop.f32.mrf.mxu0
  %2691 = vdwg.mxu0
  %v2692 = vadd.f32 %v2613, %v2689
  %s2693 = scalar_lea.vmem %s3, 1024
  %v2694 = vld [vmem:[%s2693] sm:$0xf]
  %v2695 = vld [vmem:[%s2693 + $0x4] sm:$0xf]
  %v2696 = vld [vmem:[%s2693 + $0x8] sm:$0xf]
  %v2697 = vld [vmem:[%s2693 + $0xc] sm:$0xf]
  %v2698 = vld [vmem:[%s2693 + $0x10] sm:$0xf]
  %v2699 = vld [vmem:[%s2693 + $0x14] sm:$0xf]
  %v2700 = vld [vmem:[%s2693 + $0x18] sm:$0xf]
  %v2701 = vld [vmem:[%s2693 + $0x1c] sm:$0xf]
  %v2702 = vld [vmem:[%s2693 + $0x20] sm:$0xf]
  %v2703 = vld [vmem:[%s2693 + $0x24] sm:$0xf]
  %v2704 = vld [vmem:[%s2693 + $0x28] sm:$0xf]
  %v2705 = vld [vmem:[%s2693 + $0x2c] sm:$0xf]
  %v2706 = vld [vmem:[%s2693 + $0x30] sm:$0xf]
  %v2707 = vld [vmem:[%s2693 + $0x34] sm:$0xf]
  %v2708 = vld [vmem:[%s2693 + $0x38] sm:$0xf]
  %v2709 = vld [vmem:[%s2693 + $0x3c] sm:$0xf]
  %v2726 = vunpack.c.l.b16 %v2694
  %v2727 = vunpack.c.l.b16 %v2695
  %v2728 = vunpack.c.l.b16 %v2696
  %v2729 = vunpack.c.l.b16 %v2697
  %v2730 = vunpack.c.l.b16 %v2698
  %v2731 = vunpack.c.l.b16 %v2699
  %v2732 = vunpack.c.l.b16 %v2700
  %v2733 = vunpack.c.l.b16 %v2701
  %v2734 = vunpack.c.l.b16 %v2702
  %v2735 = vunpack.c.l.b16 %v2703
  %v2736 = vunpack.c.l.b16 %v2704
  %v2737 = vunpack.c.l.b16 %v2705
  %v2738 = vunpack.c.l.b16 %v2706
  %v2739 = vunpack.c.l.b16 %v2707
  %v2740 = vunpack.c.l.b16 %v2708
  %v2741 = vunpack.c.l.b16 %v2709
  %v2742 = vpack.c.b16 %v2727, %v2726
  %v2743 = vpack.c.b16 %v2729, %v2728
  %v2744 = vpack.c.b16 %v2731, %v2730
  %v2745 = vpack.c.b16 %v2733, %v2732
  %v2746 = vpack.c.b16 %v2735, %v2734
  %v2747 = vpack.c.b16 %v2737, %v2736
  %v2748 = vpack.c.b16 %v2739, %v2738
  %v2749 = vpack.c.b16 %v2741, %v2740
  %2758 = vmatpush.bf16.msra.mxu0 %v2749
  %2759 = vmatpush.bf16.msra.mxu0 %v2748
  %2760 = vmatpush.bf16.msra.mxu0 %v2747
  %2761 = vmatpush.bf16.msra.mxu0 %v2746
  %2762 = vmatpush.bf16.msra.mxu0 %v2745
  %2763 = vmatpush.bf16.msra.mxu0 %v2744
  %2764 = vmatpush.bf16.msra.mxu0 %v2743
  %2765 = vmatpush.bf16.msra.mxu0 %v2742
  %2766 = vmatmul.bf16.gmra.mxu0 %v1423
  %v2767 = vpop.f32.mrf.mxu0
  %v2768 = vadd.f32 0.0, %v2767
  %v2769 = vpop.f32.mrf.mxu0
  %2770 = vdwg.mxu0
  %v2771 = vadd.f32 %v2692, %v2768
  %s2772 = scalar_lea.vmem %s3, 1088
  %v2773 = vld [vmem:[%s2772] sm:$0xf]
  %v2774 = vld [vmem:[%s2772 + $0x4] sm:$0xf]
  %v2775 = vld [vmem:[%s2772 + $0x8] sm:$0xf]
  %v2776 = vld [vmem:[%s2772 + $0xc] sm:$0xf]
  %v2777 = vld [vmem:[%s2772 + $0x10] sm:$0xf]
  %v2778 = vld [vmem:[%s2772 + $0x14] sm:$0xf]
  %v2779 = vld [vmem:[%s2772 + $0x18] sm:$0xf]
  %v2780 = vld [vmem:[%s2772 + $0x1c] sm:$0xf]
  %v2781 = vld [vmem:[%s2772 + $0x20] sm:$0xf]
  %v2782 = vld [vmem:[%s2772 + $0x24] sm:$0xf]
  %v2783 = vld [vmem:[%s2772 + $0x28] sm:$0xf]
  %v2784 = vld [vmem:[%s2772 + $0x2c] sm:$0xf]
  %v2785 = vld [vmem:[%s2772 + $0x30] sm:$0xf]
  %v2786 = vld [vmem:[%s2772 + $0x34] sm:$0xf]
  %v2787 = vld [vmem:[%s2772 + $0x38] sm:$0xf]
  %v2788 = vld [vmem:[%s2772 + $0x3c] sm:$0xf]
  %v2805 = vunpack.c.l.b16 %v2773
  %v2806 = vunpack.c.l.b16 %v2774
  %v2807 = vunpack.c.l.b16 %v2775
  %v2808 = vunpack.c.l.b16 %v2776
  %v2809 = vunpack.c.l.b16 %v2777
  %v2810 = vunpack.c.l.b16 %v2778
  %v2811 = vunpack.c.l.b16 %v2779
  %v2812 = vunpack.c.l.b16 %v2780
  %v2813 = vunpack.c.l.b16 %v2781
  %v2814 = vunpack.c.l.b16 %v2782
  %v2815 = vunpack.c.l.b16 %v2783
  %v2816 = vunpack.c.l.b16 %v2784
  %v2817 = vunpack.c.l.b16 %v2785
  %v2818 = vunpack.c.l.b16 %v2786
  %v2819 = vunpack.c.l.b16 %v2787
  %v2820 = vunpack.c.l.b16 %v2788
  %v2821 = vpack.c.b16 %v2806, %v2805
  %v2822 = vpack.c.b16 %v2808, %v2807
  %v2823 = vpack.c.b16 %v2810, %v2809
  %v2824 = vpack.c.b16 %v2812, %v2811
  %v2825 = vpack.c.b16 %v2814, %v2813
  %v2826 = vpack.c.b16 %v2816, %v2815
  %v2827 = vpack.c.b16 %v2818, %v2817
  %v2828 = vpack.c.b16 %v2820, %v2819
  %2837 = vmatpush.bf16.msra.mxu0 %v2828
  %2838 = vmatpush.bf16.msra.mxu0 %v2827
  %2839 = vmatpush.bf16.msra.mxu0 %v2826
  %2840 = vmatpush.bf16.msra.mxu0 %v2825
  %2841 = vmatpush.bf16.msra.mxu0 %v2824
  %2842 = vmatpush.bf16.msra.mxu0 %v2823
  %2843 = vmatpush.bf16.msra.mxu0 %v2822
  %2844 = vmatpush.bf16.msra.mxu0 %v2821
  %2845 = vmatmul.bf16.gmra.mxu0 %v1424
  %v2846 = vpop.f32.mrf.mxu0
  %v2847 = vadd.f32 0.0, %v2846
  %v2848 = vpop.f32.mrf.mxu0
  %2849 = vdwg.mxu0
  %v2850 = vadd.f32 %v2771, %v2847
  %s2851 = scalar_lea.vmem %s3, 1152
  %v2852 = vld [vmem:[%s2851] sm:$0xf]
  %v2853 = vld [vmem:[%s2851 + $0x4] sm:$0xf]
  %v2854 = vld [vmem:[%s2851 + $0x8] sm:$0xf]
  %v2855 = vld [vmem:[%s2851 + $0xc] sm:$0xf]
  %v2856 = vld [vmem:[%s2851 + $0x10] sm:$0xf]
  %v2857 = vld [vmem:[%s2851 + $0x14] sm:$0xf]
  %v2858 = vld [vmem:[%s2851 + $0x18] sm:$0xf]
  %v2859 = vld [vmem:[%s2851 + $0x1c] sm:$0xf]
  %v2860 = vld [vmem:[%s2851 + $0x20] sm:$0xf]
  %v2861 = vld [vmem:[%s2851 + $0x24] sm:$0xf]
  %v2862 = vld [vmem:[%s2851 + $0x28] sm:$0xf]
  %v2863 = vld [vmem:[%s2851 + $0x2c] sm:$0xf]
  %v2864 = vld [vmem:[%s2851 + $0x30] sm:$0xf]
  %v2865 = vld [vmem:[%s2851 + $0x34] sm:$0xf]
  %v2866 = vld [vmem:[%s2851 + $0x38] sm:$0xf]
  %v2867 = vld [vmem:[%s2851 + $0x3c] sm:$0xf]
  %v2884 = vunpack.c.l.b16 %v2852
  %v2885 = vunpack.c.l.b16 %v2853
  %v2886 = vunpack.c.l.b16 %v2854
  %v2887 = vunpack.c.l.b16 %v2855
  %v2888 = vunpack.c.l.b16 %v2856
  %v2889 = vunpack.c.l.b16 %v2857
  %v2890 = vunpack.c.l.b16 %v2858
  %v2891 = vunpack.c.l.b16 %v2859
  %v2892 = vunpack.c.l.b16 %v2860
  %v2893 = vunpack.c.l.b16 %v2861
  %v2894 = vunpack.c.l.b16 %v2862
  %v2895 = vunpack.c.l.b16 %v2863
  %v2896 = vunpack.c.l.b16 %v2864
  %v2897 = vunpack.c.l.b16 %v2865
  %v2898 = vunpack.c.l.b16 %v2866
  %v2899 = vunpack.c.l.b16 %v2867
  %v2900 = vpack.c.b16 %v2885, %v2884
  %v2901 = vpack.c.b16 %v2887, %v2886
  %v2902 = vpack.c.b16 %v2889, %v2888
  %v2903 = vpack.c.b16 %v2891, %v2890
  %v2904 = vpack.c.b16 %v2893, %v2892
  %v2905 = vpack.c.b16 %v2895, %v2894
  %v2906 = vpack.c.b16 %v2897, %v2896
  %v2907 = vpack.c.b16 %v2899, %v2898
  %2916 = vmatpush.bf16.msra.mxu0 %v2907
  %2917 = vmatpush.bf16.msra.mxu0 %v2906
  %2918 = vmatpush.bf16.msra.mxu0 %v2905
  %2919 = vmatpush.bf16.msra.mxu0 %v2904
  %2920 = vmatpush.bf16.msra.mxu0 %v2903
  %2921 = vmatpush.bf16.msra.mxu0 %v2902
  %2922 = vmatpush.bf16.msra.mxu0 %v2901
  %2923 = vmatpush.bf16.msra.mxu0 %v2900
  %2924 = vmatmul.bf16.gmra.mxu0 %v1425
  %v2925 = vpop.f32.mrf.mxu0
  %v2926 = vadd.f32 0.0, %v2925
  %v2927 = vpop.f32.mrf.mxu0
  %2928 = vdwg.mxu0
  %v2929 = vadd.f32 %v2850, %v2926
  %s2930 = scalar_lea.vmem %s3, 1216
  %v2931 = vld [vmem:[%s2930] sm:$0xf]
  %v2932 = vld [vmem:[%s2930 + $0x4] sm:$0xf]
  %v2933 = vld [vmem:[%s2930 + $0x8] sm:$0xf]
  %v2934 = vld [vmem:[%s2930 + $0xc] sm:$0xf]
  %v2935 = vld [vmem:[%s2930 + $0x10] sm:$0xf]
  %v2936 = vld [vmem:[%s2930 + $0x14] sm:$0xf]
  %v2937 = vld [vmem:[%s2930 + $0x18] sm:$0xf]
  %v2938 = vld [vmem:[%s2930 + $0x1c] sm:$0xf]
  %v2939 = vld [vmem:[%s2930 + $0x20] sm:$0xf]
  %v2940 = vld [vmem:[%s2930 + $0x24] sm:$0xf]
  %v2941 = vld [vmem:[%s2930 + $0x28] sm:$0xf]
  %v2942 = vld [vmem:[%s2930 + $0x2c] sm:$0xf]
  %v2943 = vld [vmem:[%s2930 + $0x30] sm:$0xf]
  %v2944 = vld [vmem:[%s2930 + $0x34] sm:$0xf]
  %v2945 = vld [vmem:[%s2930 + $0x38] sm:$0xf]
  %v2946 = vld [vmem:[%s2930 + $0x3c] sm:$0xf]
  %v2963 = vunpack.c.l.b16 %v2931
  %v2964 = vunpack.c.l.b16 %v2932
  %v2965 = vunpack.c.l.b16 %v2933
  %v2966 = vunpack.c.l.b16 %v2934
  %v2967 = vunpack.c.l.b16 %v2935
  %v2968 = vunpack.c.l.b16 %v2936
  %v2969 = vunpack.c.l.b16 %v2937
  %v2970 = vunpack.c.l.b16 %v2938
  %v2971 = vunpack.c.l.b16 %v2939
  %v2972 = vunpack.c.l.b16 %v2940
  %v2973 = vunpack.c.l.b16 %v2941
  %v2974 = vunpack.c.l.b16 %v2942
  %v2975 = vunpack.c.l.b16 %v2943
  %v2976 = vunpack.c.l.b16 %v2944
  %v2977 = vunpack.c.l.b16 %v2945
  %v2978 = vunpack.c.l.b16 %v2946
  %v2979 = vpack.c.b16 %v2964, %v2963
  %v2980 = vpack.c.b16 %v2966, %v2965
  %v2981 = vpack.c.b16 %v2968, %v2967
  %v2982 = vpack.c.b16 %v2970, %v2969
  %v2983 = vpack.c.b16 %v2972, %v2971
  %v2984 = vpack.c.b16 %v2974, %v2973
  %v2985 = vpack.c.b16 %v2976, %v2975
  %v2986 = vpack.c.b16 %v2978, %v2977
  %2995 = vmatpush.bf16.msra.mxu0 %v2986
  %2996 = vmatpush.bf16.msra.mxu0 %v2985
  %2997 = vmatpush.bf16.msra.mxu0 %v2984
  %2998 = vmatpush.bf16.msra.mxu0 %v2983
  %2999 = vmatpush.bf16.msra.mxu0 %v2982
  %3000 = vmatpush.bf16.msra.mxu0 %v2981
  %3001 = vmatpush.bf16.msra.mxu0 %v2980
  %3002 = vmatpush.bf16.msra.mxu0 %v2979
  %3003 = vmatmul.bf16.gmra.mxu0 %v1426
  %v3004 = vpop.f32.mrf.mxu0
  %v3005 = vadd.f32 0.0, %v3004
  %v3006 = vpop.f32.mrf.mxu0
  %3007 = vdwg.mxu0
  %v3008 = vadd.f32 %v2929, %v3005
  %s3009 = scalar_lea.vmem %s3, 1280
  %v3010 = vld [vmem:[%s3009] sm:$0xf]
  %v3011 = vld [vmem:[%s3009 + $0x4] sm:$0xf]
  %v3012 = vld [vmem:[%s3009 + $0x8] sm:$0xf]
  %v3013 = vld [vmem:[%s3009 + $0xc] sm:$0xf]
  %v3014 = vld [vmem:[%s3009 + $0x10] sm:$0xf]
  %v3015 = vld [vmem:[%s3009 + $0x14] sm:$0xf]
  %v3016 = vld [vmem:[%s3009 + $0x18] sm:$0xf]
  %v3017 = vld [vmem:[%s3009 + $0x1c] sm:$0xf]
  %v3018 = vld [vmem:[%s3009 + $0x20] sm:$0xf]
  %v3019 = vld [vmem:[%s3009 + $0x24] sm:$0xf]
  %v3020 = vld [vmem:[%s3009 + $0x28] sm:$0xf]
  %v3021 = vld [vmem:[%s3009 + $0x2c] sm:$0xf]
  %v3022 = vld [vmem:[%s3009 + $0x30] sm:$0xf]
  %v3023 = vld [vmem:[%s3009 + $0x34] sm:$0xf]
  %v3024 = vld [vmem:[%s3009 + $0x38] sm:$0xf]
  %v3025 = vld [vmem:[%s3009 + $0x3c] sm:$0xf]
  %v3042 = vunpack.c.l.b16 %v3010
  %v3043 = vunpack.c.l.b16 %v3011
  %v3044 = vunpack.c.l.b16 %v3012
  %v3045 = vunpack.c.l.b16 %v3013
  %v3046 = vunpack.c.l.b16 %v3014
  %v3047 = vunpack.c.l.b16 %v3015
  %v3048 = vunpack.c.l.b16 %v3016
  %v3049 = vunpack.c.l.b16 %v3017
  %v3050 = vunpack.c.l.b16 %v3018
  %v3051 = vunpack.c.l.b16 %v3019
  %v3052 = vunpack.c.l.b16 %v3020
  %v3053 = vunpack.c.l.b16 %v3021
  %v3054 = vunpack.c.l.b16 %v3022
  %v3055 = vunpack.c.l.b16 %v3023
  %v3056 = vunpack.c.l.b16 %v3024
  %v3057 = vunpack.c.l.b16 %v3025
  %v3058 = vpack.c.b16 %v3043, %v3042
  %v3059 = vpack.c.b16 %v3045, %v3044
  %v3060 = vpack.c.b16 %v3047, %v3046
  %v3061 = vpack.c.b16 %v3049, %v3048
  %v3062 = vpack.c.b16 %v3051, %v3050
  %v3063 = vpack.c.b16 %v3053, %v3052
  %v3064 = vpack.c.b16 %v3055, %v3054
  %v3065 = vpack.c.b16 %v3057, %v3056
  %3074 = vmatpush.bf16.msra.mxu0 %v3065
  %3075 = vmatpush.bf16.msra.mxu0 %v3064
  %3076 = vmatpush.bf16.msra.mxu0 %v3063
  %3077 = vmatpush.bf16.msra.mxu0 %v3062
  %3078 = vmatpush.bf16.msra.mxu0 %v3061
  %3079 = vmatpush.bf16.msra.mxu0 %v3060
  %3080 = vmatpush.bf16.msra.mxu0 %v3059
  %3081 = vmatpush.bf16.msra.mxu0 %v3058
  %3082 = vmatmul.bf16.gmra.mxu0 %v1427
  %v3083 = vpop.f32.mrf.mxu0
  %v3084 = vadd.f32 0.0, %v3083
  %v3085 = vpop.f32.mrf.mxu0
  %3086 = vdwg.mxu0
  %v3087 = vadd.f32 %v3008, %v3084
  %s3088 = scalar_lea.vmem %s3, 1344
  %v3089 = vld [vmem:[%s3088] sm:$0xf]
  %v3090 = vld [vmem:[%s3088 + $0x4] sm:$0xf]
  %v3091 = vld [vmem:[%s3088 + $0x8] sm:$0xf]
  %v3092 = vld [vmem:[%s3088 + $0xc] sm:$0xf]
  %v3093 = vld [vmem:[%s3088 + $0x10] sm:$0xf]
  %v3094 = vld [vmem:[%s3088 + $0x14] sm:$0xf]
  %v3095 = vld [vmem:[%s3088 + $0x18] sm:$0xf]
  %v3096 = vld [vmem:[%s3088 + $0x1c] sm:$0xf]
  %v3097 = vld [vmem:[%s3088 + $0x20] sm:$0xf]
  %v3098 = vld [vmem:[%s3088 + $0x24] sm:$0xf]
  %v3099 = vld [vmem:[%s3088 + $0x28] sm:$0xf]
  %v3100 = vld [vmem:[%s3088 + $0x2c] sm:$0xf]
  %v3101 = vld [vmem:[%s3088 + $0x30] sm:$0xf]
  %v3102 = vld [vmem:[%s3088 + $0x34] sm:$0xf]
  %v3103 = vld [vmem:[%s3088 + $0x38] sm:$0xf]
  %v3104 = vld [vmem:[%s3088 + $0x3c] sm:$0xf]
  %v3121 = vunpack.c.l.b16 %v3089
  %v3122 = vunpack.c.l.b16 %v3090
  %v3123 = vunpack.c.l.b16 %v3091
  %v3124 = vunpack.c.l.b16 %v3092
  %v3125 = vunpack.c.l.b16 %v3093
  %v3126 = vunpack.c.l.b16 %v3094
  %v3127 = vunpack.c.l.b16 %v3095
  %v3128 = vunpack.c.l.b16 %v3096
  %v3129 = vunpack.c.l.b16 %v3097
  %v3130 = vunpack.c.l.b16 %v3098
  %v3131 = vunpack.c.l.b16 %v3099
  %v3132 = vunpack.c.l.b16 %v3100
  %v3133 = vunpack.c.l.b16 %v3101
  %v3134 = vunpack.c.l.b16 %v3102
  %v3135 = vunpack.c.l.b16 %v3103
  %v3136 = vunpack.c.l.b16 %v3104
  %v3137 = vpack.c.b16 %v3122, %v3121
  %v3138 = vpack.c.b16 %v3124, %v3123
  %v3139 = vpack.c.b16 %v3126, %v3125
  %v3140 = vpack.c.b16 %v3128, %v3127
  %v3141 = vpack.c.b16 %v3130, %v3129
  %v3142 = vpack.c.b16 %v3132, %v3131
  %v3143 = vpack.c.b16 %v3134, %v3133
  %v3144 = vpack.c.b16 %v3136, %v3135
  %3153 = vmatpush.bf16.msra.mxu0 %v3144
  %3154 = vmatpush.bf16.msra.mxu0 %v3143
  %3155 = vmatpush.bf16.msra.mxu0 %v3142
  %3156 = vmatpush.bf16.msra.mxu0 %v3141
  %3157 = vmatpush.bf16.msra.mxu0 %v3140
  %3158 = vmatpush.bf16.msra.mxu0 %v3139
  %3159 = vmatpush.bf16.msra.mxu0 %v3138
  %3160 = vmatpush.bf16.msra.mxu0 %v3137
  %3161 = vmatmul.bf16.gmra.mxu0 %v1428
  %v3162 = vpop.f32.mrf.mxu0
  %v3163 = vadd.f32 0.0, %v3162
  %v3164 = vpop.f32.mrf.mxu0
  %3165 = vdwg.mxu0
  %v3166 = vadd.f32 %v3087, %v3163
  %s3167 = scalar_lea.vmem %s3, 1408
  %v3168 = vld [vmem:[%s3167] sm:$0xf]
  %v3169 = vld [vmem:[%s3167 + $0x4] sm:$0xf]
  %v3170 = vld [vmem:[%s3167 + $0x8] sm:$0xf]
  %v3171 = vld [vmem:[%s3167 + $0xc] sm:$0xf]
  %v3172 = vld [vmem:[%s3167 + $0x10] sm:$0xf]
  %v3173 = vld [vmem:[%s3167 + $0x14] sm:$0xf]
  %v3174 = vld [vmem:[%s3167 + $0x18] sm:$0xf]
  %v3175 = vld [vmem:[%s3167 + $0x1c] sm:$0xf]
  %v3176 = vld [vmem:[%s3167 + $0x20] sm:$0xf]
  %v3177 = vld [vmem:[%s3167 + $0x24] sm:$0xf]
  %v3178 = vld [vmem:[%s3167 + $0x28] sm:$0xf]
  %v3179 = vld [vmem:[%s3167 + $0x2c] sm:$0xf]
  %v3180 = vld [vmem:[%s3167 + $0x30] sm:$0xf]
  %v3181 = vld [vmem:[%s3167 + $0x34] sm:$0xf]
  %v3182 = vld [vmem:[%s3167 + $0x38] sm:$0xf]
  %v3183 = vld [vmem:[%s3167 + $0x3c] sm:$0xf]
  %v3200 = vunpack.c.l.b16 %v3168
  %v3201 = vunpack.c.l.b16 %v3169
  %v3202 = vunpack.c.l.b16 %v3170
  %v3203 = vunpack.c.l.b16 %v3171
  %v3204 = vunpack.c.l.b16 %v3172
  %v3205 = vunpack.c.l.b16 %v3173
  %v3206 = vunpack.c.l.b16 %v3174
  %v3207 = vunpack.c.l.b16 %v3175
  %v3208 = vunpack.c.l.b16 %v3176
  %v3209 = vunpack.c.l.b16 %v3177
  %v3210 = vunpack.c.l.b16 %v3178
  %v3211 = vunpack.c.l.b16 %v3179
  %v3212 = vunpack.c.l.b16 %v3180
  %v3213 = vunpack.c.l.b16 %v3181
  %v3214 = vunpack.c.l.b16 %v3182
  %v3215 = vunpack.c.l.b16 %v3183
  %v3216 = vpack.c.b16 %v3201, %v3200
  %v3217 = vpack.c.b16 %v3203, %v3202
  %v3218 = vpack.c.b16 %v3205, %v3204
  %v3219 = vpack.c.b16 %v3207, %v3206
  %v3220 = vpack.c.b16 %v3209, %v3208
  %v3221 = vpack.c.b16 %v3211, %v3210
  %v3222 = vpack.c.b16 %v3213, %v3212
  %v3223 = vpack.c.b16 %v3215, %v3214
  %3232 = vmatpush.bf16.msra.mxu0 %v3223
  %3233 = vmatpush.bf16.msra.mxu0 %v3222
  %3234 = vmatpush.bf16.msra.mxu0 %v3221
  %3235 = vmatpush.bf16.msra.mxu0 %v3220
  %3236 = vmatpush.bf16.msra.mxu0 %v3219
  %3237 = vmatpush.bf16.msra.mxu0 %v3218
  %3238 = vmatpush.bf16.msra.mxu0 %v3217
  %3239 = vmatpush.bf16.msra.mxu0 %v3216
  %3240 = vmatmul.bf16.gmra.mxu0 %v1429
  %v3241 = vpop.f32.mrf.mxu0
  %v3242 = vadd.f32 0.0, %v3241
  %v3243 = vpop.f32.mrf.mxu0
  %3244 = vdwg.mxu0
  %v3245 = vadd.f32 %v3166, %v3242
  %s3246 = scalar_lea.vmem %s3, 1472
  %v3247 = vld [vmem:[%s3246] sm:$0xf]
  %v3248 = vld [vmem:[%s3246 + $0x4] sm:$0xf]
  %v3249 = vld [vmem:[%s3246 + $0x8] sm:$0xf]
  %v3250 = vld [vmem:[%s3246 + $0xc] sm:$0xf]
  %v3251 = vld [vmem:[%s3246 + $0x10] sm:$0xf]
  %v3252 = vld [vmem:[%s3246 + $0x14] sm:$0xf]
  %v3253 = vld [vmem:[%s3246 + $0x18] sm:$0xf]
  %v3254 = vld [vmem:[%s3246 + $0x1c] sm:$0xf]
  %v3255 = vld [vmem:[%s3246 + $0x20] sm:$0xf]
  %v3256 = vld [vmem:[%s3246 + $0x24] sm:$0xf]
  %v3257 = vld [vmem:[%s3246 + $0x28] sm:$0xf]
  %v3258 = vld [vmem:[%s3246 + $0x2c] sm:$0xf]
  %v3259 = vld [vmem:[%s3246 + $0x30] sm:$0xf]
  %v3260 = vld [vmem:[%s3246 + $0x34] sm:$0xf]
  %v3261 = vld [vmem:[%s3246 + $0x38] sm:$0xf]
  %v3262 = vld [vmem:[%s3246 + $0x3c] sm:$0xf]
  %v3279 = vunpack.c.l.b16 %v3247
  %v3280 = vunpack.c.l.b16 %v3248
  %v3281 = vunpack.c.l.b16 %v3249
  %v3282 = vunpack.c.l.b16 %v3250
  %v3283 = vunpack.c.l.b16 %v3251
  %v3284 = vunpack.c.l.b16 %v3252
  %v3285 = vunpack.c.l.b16 %v3253
  %v3286 = vunpack.c.l.b16 %v3254
  %v3287 = vunpack.c.l.b16 %v3255
  %v3288 = vunpack.c.l.b16 %v3256
  %v3289 = vunpack.c.l.b16 %v3257
  %v3290 = vunpack.c.l.b16 %v3258
  %v3291 = vunpack.c.l.b16 %v3259
  %v3292 = vunpack.c.l.b16 %v3260
  %v3293 = vunpack.c.l.b16 %v3261
  %v3294 = vunpack.c.l.b16 %v3262
  %v3295 = vpack.c.b16 %v3280, %v3279
  %v3296 = vpack.c.b16 %v3282, %v3281
  %v3297 = vpack.c.b16 %v3284, %v3283
  %v3298 = vpack.c.b16 %v3286, %v3285
  %v3299 = vpack.c.b16 %v3288, %v3287
  %v3300 = vpack.c.b16 %v3290, %v3289
  %v3301 = vpack.c.b16 %v3292, %v3291
  %v3302 = vpack.c.b16 %v3294, %v3293
  %3311 = vmatpush.bf16.msra.mxu0 %v3302
  %3312 = vmatpush.bf16.msra.mxu0 %v3301
  %3313 = vmatpush.bf16.msra.mxu0 %v3300
  %3314 = vmatpush.bf16.msra.mxu0 %v3299
  %3315 = vmatpush.bf16.msra.mxu0 %v3298
  %3316 = vmatpush.bf16.msra.mxu0 %v3297
  %3317 = vmatpush.bf16.msra.mxu0 %v3296
  %3318 = vmatpush.bf16.msra.mxu0 %v3295
  %3319 = vmatmul.bf16.gmra.mxu0 %v1430
  %v3320 = vpop.f32.mrf.mxu0
  %v3321 = vadd.f32 0.0, %v3320
  %v3322 = vpop.f32.mrf.mxu0
  %3323 = vdwg.mxu0
  %v3324 = vadd.f32 %v3245, %v3321
  %s3325 = scalar_lea.vmem %s3, 1536
  %v3326 = vld [vmem:[%s3325] sm:$0xf]
  %v3327 = vld [vmem:[%s3325 + $0x4] sm:$0xf]
  %v3328 = vld [vmem:[%s3325 + $0x8] sm:$0xf]
  %v3329 = vld [vmem:[%s3325 + $0xc] sm:$0xf]
  %v3330 = vld [vmem:[%s3325 + $0x10] sm:$0xf]
  %v3331 = vld [vmem:[%s3325 + $0x14] sm:$0xf]
  %v3332 = vld [vmem:[%s3325 + $0x18] sm:$0xf]
  %v3333 = vld [vmem:[%s3325 + $0x1c] sm:$0xf]
  %v3334 = vld [vmem:[%s3325 + $0x20] sm:$0xf]
  %v3335 = vld [vmem:[%s3325 + $0x24] sm:$0xf]
  %v3336 = vld [vmem:[%s3325 + $0x28] sm:$0xf]
  %v3337 = vld [vmem:[%s3325 + $0x2c] sm:$0xf]
  %v3338 = vld [vmem:[%s3325 + $0x30] sm:$0xf]
  %v3339 = vld [vmem:[%s3325 + $0x34] sm:$0xf]
  %v3340 = vld [vmem:[%s3325 + $0x38] sm:$0xf]
  %v3341 = vld [vmem:[%s3325 + $0x3c] sm:$0xf]
  %v3358 = vunpack.c.l.b16 %v3326
  %v3359 = vunpack.c.l.b16 %v3327
  %v3360 = vunpack.c.l.b16 %v3328
  %v3361 = vunpack.c.l.b16 %v3329
  %v3362 = vunpack.c.l.b16 %v3330
  %v3363 = vunpack.c.l.b16 %v3331
  %v3364 = vunpack.c.l.b16 %v3332
  %v3365 = vunpack.c.l.b16 %v3333
  %v3366 = vunpack.c.l.b16 %v3334
  %v3367 = vunpack.c.l.b16 %v3335
  %v3368 = vunpack.c.l.b16 %v3336
  %v3369 = vunpack.c.l.b16 %v3337
  %v3370 = vunpack.c.l.b16 %v3338
  %v3371 = vunpack.c.l.b16 %v3339
  %v3372 = vunpack.c.l.b16 %v3340
  %v3373 = vunpack.c.l.b16 %v3341
  %v3374 = vpack.c.b16 %v3359, %v3358
  %v3375 = vpack.c.b16 %v3361, %v3360
  %v3376 = vpack.c.b16 %v3363, %v3362
  %v3377 = vpack.c.b16 %v3365, %v3364
  %v3378 = vpack.c.b16 %v3367, %v3366
  %v3379 = vpack.c.b16 %v3369, %v3368
  %v3380 = vpack.c.b16 %v3371, %v3370
  %v3381 = vpack.c.b16 %v3373, %v3372
  %3390 = vmatpush.bf16.msra.mxu0 %v3381
  %3391 = vmatpush.bf16.msra.mxu0 %v3380
  %3392 = vmatpush.bf16.msra.mxu0 %v3379
  %3393 = vmatpush.bf16.msra.mxu0 %v3378
  %3394 = vmatpush.bf16.msra.mxu0 %v3377
  %3395 = vmatpush.bf16.msra.mxu0 %v3376
  %3396 = vmatpush.bf16.msra.mxu0 %v3375
  %3397 = vmatpush.bf16.msra.mxu0 %v3374
  %3398 = vmatmul.bf16.gmra.mxu0 %v1431
  %v3399 = vpop.f32.mrf.mxu0
  %v3400 = vadd.f32 0.0, %v3399
  %v3401 = vpop.f32.mrf.mxu0
  %3402 = vdwg.mxu0
  %v3403 = vadd.f32 %v3324, %v3400
  %v3404 = vld [vmem:[%s4] sm:$0x1]
  %v3406 = vperm.slane %v3404, 0
  %v3408 = vadd.f32 %v3403, %v3406
  %v3409 = vmax.f32 %v3408, 0.0
  %v3410 = vpack.c.bf16 %v3409, %v3409
  %v3411 = vld [vmem:[%s5] sm:$0xf]
  %v3412 = vld [vmem:[%s5 + $0x4] sm:$0xf]
  %v3413 = vld [vmem:[%s5 + $0x8] sm:$0xf]
  %v3414 = vld [vmem:[%s5 + $0xc] sm:$0xf]
  %v3415 = vld [vmem:[%s5 + $0x10] sm:$0xf]
  %v3416 = vld [vmem:[%s5 + $0x14] sm:$0xf]
  %v3417 = vld [vmem:[%s5 + $0x18] sm:$0xf]
  %v3418 = vld [vmem:[%s5 + $0x1c] sm:$0xf]
  %v3419 = vld [vmem:[%s5 + $0x20] sm:$0xf]
  %v3420 = vld [vmem:[%s5 + $0x24] sm:$0xf]
  %v3421 = vld [vmem:[%s5 + $0x28] sm:$0xf]
  %v3422 = vld [vmem:[%s5 + $0x2c] sm:$0xf]
  %v3423 = vld [vmem:[%s5 + $0x30] sm:$0xf]
  %v3424 = vld [vmem:[%s5 + $0x34] sm:$0xf]
  %v3425 = vld [vmem:[%s5 + $0x38] sm:$0xf]
  %v3426 = vld [vmem:[%s5 + $0x3c] sm:$0xf]
  %v3427 = vld [vmem:[%s6] sm:$0x1]
  %v3429 = vperm.slane %v3427, 0
  %v3447 = vunpack.c.l.b16 %v3411
  %v3448 = vunpack.c.l.b16 %v3412
  %v3449 = vunpack.c.l.b16 %v3413
  %v3450 = vunpack.c.l.b16 %v3414
  %v3451 = vunpack.c.l.b16 %v3415
  %v3452 = vunpack.c.l.b16 %v3416
  %v3453 = vunpack.c.l.b16 %v3417
  %v3454 = vunpack.c.l.b16 %v3418
  %v3455 = vunpack.c.l.b16 %v3419
  %v3456 = vunpack.c.l.b16 %v3420
  %v3457 = vunpack.c.l.b16 %v3421
  %v3458 = vunpack.c.l.b16 %v3422
  %v3459 = vunpack.c.l.b16 %v3423
  %v3460 = vunpack.c.l.b16 %v3424
  %v3461 = vunpack.c.l.b16 %v3425
  %v3462 = vunpack.c.l.b16 %v3426
  %v3463 = vpack.c.b16 %v3448, %v3447
  %v3464 = vpack.c.b16 %v3450, %v3449
  %v3465 = vpack.c.b16 %v3452, %v3451
  %v3466 = vpack.c.b16 %v3454, %v3453
  %v3467 = vpack.c.b16 %v3456, %v3455
  %v3468 = vpack.c.b16 %v3458, %v3457
  %v3469 = vpack.c.b16 %v3460, %v3459
  %v3470 = vpack.c.b16 %v3462, %v3461
  %3479 = vmatpush.bf16.msra.mxu0 %v3470
  %3480 = vmatpush.bf16.msra.mxu0 %v3469
  %3481 = vmatpush.bf16.msra.mxu0 %v3468
  %3482 = vmatpush.bf16.msra.mxu0 %v3467
  %3483 = vmatpush.bf16.msra.mxu0 %v3466
  %3484 = vmatpush.bf16.msra.mxu0 %v3465
  %3485 = vmatpush.bf16.msra.mxu0 %v3464
  %3486 = vmatpush.bf16.msra.mxu0 %v3463
  %3487 = vmatmul.bf16.gmra.mxu0 %v3410
  %v3488 = vpop.f32.mrf.mxu0
  %v3489 = vadd.f32 %v3429, %v3488
  %v3490 = vpop.f32.mrf.mxu0
  %3491 = vdwg.mxu0
  %v3492 = vmax.f32 %v3489, 0.0
  %v3493 = vpack.c.bf16 %v3492, %v3492
  %v3494 = vld [vmem:[%s7] sm:$0xf]
  %v3495 = vld [vmem:[%s7 + $0x4] sm:$0xf]
  %v3496 = vld [vmem:[%s7 + $0x8] sm:$0xf]
  %v3497 = vld [vmem:[%s7 + $0xc] sm:$0xf]
  %v3498 = vld [vmem:[%s7 + $0x10] sm:$0xf]
  %v3499 = vld [vmem:[%s7 + $0x14] sm:$0xf]
  %v3500 = vld [vmem:[%s7 + $0x18] sm:$0xf]
  %v3501 = vld [vmem:[%s7 + $0x1c] sm:$0xf]
  %v3502 = vld [vmem:[%s7 + $0x20] sm:$0xf]
  %v3503 = vld [vmem:[%s7 + $0x24] sm:$0xf]
  %v3504 = vld [vmem:[%s7 + $0x28] sm:$0xf]
  %v3505 = vld [vmem:[%s7 + $0x2c] sm:$0xf]
  %v3506 = vld [vmem:[%s7 + $0x30] sm:$0xf]
  %v3507 = vld [vmem:[%s7 + $0x34] sm:$0xf]
  %v3508 = vld [vmem:[%s7 + $0x38] sm:$0xf]
  %v3509 = vld [vmem:[%s7 + $0x3c] sm:$0xf]
  %v3510 = vld [vmem:[%s8] sm:$0x1]
  %v3512 = vperm.slane %v3510, 0
  %v3530 = vunpack.c.l.b16 %v3494
  %v3531 = vunpack.c.l.b16 %v3495
  %v3532 = vunpack.c.l.b16 %v3496
  %v3533 = vunpack.c.l.b16 %v3497
  %v3534 = vunpack.c.l.b16 %v3498
  %v3535 = vunpack.c.l.b16 %v3499
  %v3536 = vunpack.c.l.b16 %v3500
  %v3537 = vunpack.c.l.b16 %v3501
  %v3538 = vunpack.c.l.b16 %v3502
  %v3539 = vunpack.c.l.b16 %v3503
  %v3540 = vunpack.c.l.b16 %v3504
  %v3541 = vunpack.c.l.b16 %v3505
  %v3542 = vunpack.c.l.b16 %v3506
  %v3543 = vunpack.c.l.b16 %v3507
  %v3544 = vunpack.c.l.b16 %v3508
  %v3545 = vunpack.c.l.b16 %v3509
  %v3546 = vpack.c.b16 %v3531, %v3530
  %v3547 = vpack.c.b16 %v3533, %v3532
  %v3548 = vpack.c.b16 %v3535, %v3534
  %v3549 = vpack.c.b16 %v3537, %v3536
  %v3550 = vpack.c.b16 %v3539, %v3538
  %v3551 = vpack.c.b16 %v3541, %v3540
  %v3552 = vpack.c.b16 %v3543, %v3542
  %v3553 = vpack.c.b16 %v3545, %v3544
  %3562 = vmatpush.bf16.msra.mxu0 %v3553
  %3563 = vmatpush.bf16.msra.mxu0 %v3552
  %3564 = vmatpush.bf16.msra.mxu0 %v3551
  %3565 = vmatpush.bf16.msra.mxu0 %v3550
  %3566 = vmatpush.bf16.msra.mxu0 %v3549
  %3567 = vmatpush.bf16.msra.mxu0 %v3548
  %3568 = vmatpush.bf16.msra.mxu0 %v3547
  %3569 = vmatpush.bf16.msra.mxu0 %v3546
  %3570 = vmatmul.bf16.gmra.mxu0 %v3493
  %v3571 = vpop.f32.mrf.mxu0
  %v3572 = vadd.f32 %v3512, %v3571
  %v3573 = vpop.f32.mrf.mxu0
  %3574 = vdwg.mxu0
  %v3575 = vmax.f32 %v3572, 0.0
  %v3576 = vlaneseq
  %v3577 = vand.u32 %v3576, 127
  %vm3578 = vcmp.lt.s32.totalorder %v3577, 10
  %v3579 = vsel %vm3578, %v3575, -1e+30
  %3580 = vmax.xlane.f32.xlu0 %v3579
  %v3581 = vpop.xlane.xlu0 %3580
  %v3582 = vsub.f32 %v3579, %v3581
  %v3583 = vmul.f32 %v3582, 1.442695
  %v3584 = vpow.pop %v3583
  %3585 = vadd.xlane.f32.xlu0 %v3584
  %v3586 = vpop.xlane.xlu0 %3585
  %v3587 = vlog2.pop %v3586
  %v3588 = vmul.f32 %v3587, 0.6931472
  %v3589 = vsub.f32 %v3582, %v3588
  %3590 = vst [vmem:[%s9] sm:$0xff] %v3589
  // Predicated region
  $region38: #{lenet_forward.3} parent=0 // pred_check
    _
  $region39: #{lenet_forward.3} parent=0 // pred_check_branch
    %3592 = sbr.rel (0) target = $region41
  $region40: #{lenet_forward.3} parent=0 // pred_region
    _
  $region41: #{lenet_forward.3} parent=0 // pred_fallthru
    _
  // Predicated region
  $region42: #{lenet_forward.3} parent=0 // pred_check
    _
  $region43: #{lenet_forward.3} parent=0 // pred_check_branch
    %3594 = sbr.rel (0) target = $region45
  $region44: #{lenet_forward.3} parent=0 // pred_region
    _
  $region45: #{lenet_forward.3} parent=0 // pred_fallthru
    _

</llo_original>
